<compile_context>
chip_gen: v6e
topology: v6e:2x2x1
jax: 0.10.0
libtpu: 0.0.40
codegen_flags: <defaults>
</compile_context>

<pallas_src>
import numpy as np
import jax
import jax.numpy as jnp
from jax.experimental import pallas as pl
from jax.experimental.pallas import tpu as pltpu

# ----------------------------- configuration ------------------------------
NUM_MFCC = 40
NUM_SMILE = 88
GRU_HIDDEN = 64
EMBED_DIM = 64
NUM_CLASSES = 9
K = NUM_CLASSES - 1                       # number of binary heads = 8
INPUT_DIM = 2 * GRU_HIDDEN + EMBED_DIM    # 192
HALF_DIM = INPUT_DIM // 2                 # 96

B = 2    # real batch
T = 8    # sequence length
BP = 8   # batch padded to the sublane width
HP = 128                                  # per-head width, padded 96 -> 128
OUTP = 128                                # lane-dense output width (K real)
XF = 2 * NUM_MFCC + 1                     # [mfcc[t] | mfcc[T-1-t] | 1]


# --------------------------- Pallas kernel body ----------------------------
# Combined gate column layout ("layout A"), width 8H:
#   [ i_f | i_b | f_f | f_b | g_f | g_b | o_f | o_b ]   (each block H wide)
# Combined state layout, width 2H:  h = [ h_fwd | h_bwd ],  c = [ c_fwd | c_bwd ]
def corn_kernel(xcat_ref, mask_ref, smile_ref,
                wih_ref, whh_ref, ws_ref, b1_ref, b2_ref,
                w1g_hbm, w1s_hbm, w2_hbm,
                out_ref,
                w1g_v, w1s_v, w2_v, sem):
    H = GRU_HIDDEN

    # Kick off classifier-weight DMAs; they complete under the recurrence.
    cp_w1g = pltpu.make_async_copy(w1g_hbm, w1g_v, sem.at[0])
    cp_w1s = pltpu.make_async_copy(w1s_hbm, w1s_v, sem.at[1])
    cp_w2 = pltpu.make_async_copy(w2_hbm, w2_v, sem.at[2])
    cp_w1g.start()
    cp_w1s.start()
    cp_w2.start()

    # Input projection for all timesteps, both directions, biases included:
    # (T*BP, 2F+1) @ (2F+1, 8H).  Row t*BP+b already carries both mfcc[b, t]
    # (fwd gate columns) and mfcc[b, T-1-t] (bwd gate columns); the trailing 1
    # picks up the fused bias row.
    xg = jnp.dot(xcat_ref[...], wih_ref[...],
                 preferred_element_type=jnp.float32)       # (T*BP, 8H)

    whh = whh_ref[...]                                     # (2H, 8H) block-diag
    mask = mask_ref[...]                                   # (T*BP, 2H) in {0,1}

    def sig(x):  # sigmoid(x) = 0.5 * tanh(0.5 x) + 0.5  (single EUP push)
        return 0.5 * jnp.tanh(0.5 * x) + 0.5

    h = jnp.zeros((BP, 2 * H), jnp.float32)                # [h_fwd | h_bwd]
    c = jnp.zeros((BP, 2 * H), jnp.float32)
    # TODO(synk): whh is loop-invariant; holding it in the MXU with
    # pltpu.matmul_push_rhs / matmul_acc_lhs / matmul_pop would remove the
    # per-step weight reload from the serial h -> gates -> h chain.
    for s in range(T):                                     # T small & static
        gates = xg[s * BP:(s + 1) * BP, :] + jnp.dot(
            h, whh, preferred_element_type=jnp.float32)    # (BP, 8H)

        i = sig(gates[:, 0 * H:2 * H])                     # [i_f | i_b]
        f = sig(gates[:, 2 * H:4 * H])                     # [f_f | f_b]
        g = jnp.tanh(gates[:, 4 * H:6 * H])                # [g_f | g_b]
        o = sig(gates[:, 6 * H:8 * H])                     # [o_f | o_b]

        c_new = f * c + i * g
        h_new = o * jnp.tanh(c_new)

        m = mask[s * BP:(s + 1) * BP, :] > 0.5             # (BP, 2H) bool
        h = jnp.where(m, h_new, h)                         # freeze when invalid
        c = jnp.where(m, c_new, c)
    # h == concat([h_fwd_final, h_bwd_final], axis=1)       (BP, 2H)

    # --- smile branch (bias folded into ws via the ones column) -------------
    smile_emb = jnp.maximum(
        jnp.dot(smile_ref[...], ws_ref[...],
                preferred_element_type=jnp.float32), 0.0)   # (BP, E)

    # Classifier weights must be in VMEM by now (DMA hid under the LSTM).
    cp_w1g.wait()
    cp_w1s.wait()
    cp_w2.wait()

    # --- K stacked classifier heads (per-head width padded to 128 lanes) ----
    h_all = jnp.maximum(
        jnp.dot(h, w1g_v[...], preferred_element_type=jnp.float32)
        + jnp.dot(smile_emb, w1s_v[...], preferred_element_type=jnp.float32)
        + b1_ref[...], 0.0)                                 # (BP, K*HP)

    # block-diagonal second layer (K*HP, OUTP) -> lane-dense output slab
    out_ref[...] = (jnp.dot(h_all, w2_v[...],
                            preferred_element_type=jnp.float32)
                    + b2_ref[...])                          # (BP, OUTP)


# ------------------------------ wrappers ------------------------------------
_VMEM = pl.BlockSpec(memory_space=pltpu.MemorySpace.VMEM)
_ANY = pl.BlockSpec(memory_space=pl.ANY)


@jax.jit
def corn_forward(mfcc, lengths, smile, kp):
    """Full CornModel.forward in one pallas_call. Returns (B, K) logits."""
    H = GRU_HIDDEN
    lengths = lengths.astype(jnp.int32)

    # pad batch to the 8-sublane width; padded rows get length 0 (state stays 0)
    pad_b = BP - B
    mfcc_p = jnp.pad(mfcc, ((0, pad_b), (0, 0), (0, 0)))
    smile_p = jnp.pad(smile, ((0, pad_b), (0, 0)))
    len_p = jnp.pad(lengths, (0, pad_b))

    # time-major rows [mfcc[t] | mfcc[T-1-t] | 1]  -> (T*BP, 2F+1)
    mf_t = jnp.transpose(mfcc_p, (1, 0, 2))                 # (T, BP, F)
    mf_r = mf_t[::-1]                                       # time-reversed
    ones = jnp.ones((T, BP, 1), jnp.float32)
    xcat = jnp.concatenate([mf_t, mf_r, ones], axis=-1).reshape(T * BP, XF)

    # smile with fused-bias ones column
    smile_cat = jnp.concatenate(
        [smile_p, jnp.ones((BP, 1), jnp.float32)], axis=1)  # (BP, S+1)

    # precomputed validity mask (T*BP, 2H): fwd half valid iff t < len,
    # bwd half valid iff (T-1-t) < len
    t_idx = jnp.arange(T, dtype=jnp.int32)
    fwd = (len_p[None, :] > t_idx[:, None]).astype(jnp.float32)            # (T, BP)
    bwd = (len_p[None, :] > (T - 1 - t_idx)[:, None]).astype(jnp.float32)  # (T, BP)
    mask = jnp.concatenate(
        [jnp.broadcast_to(fwd.reshape(T * BP, 1), (T * BP, H)),
         jnp.broadcast_to(bwd.reshape(T * BP, 1), (T * BP, H))], axis=1)   # (T*BP, 2H)

    out = pl.pallas_call(
        corn_kernel,
        out_shape=jax.ShapeDtypeStruct((BP, OUTP), jnp.float32),
        in_specs=[_VMEM] * 8 + [_ANY] * 3,
        out_specs=_VMEM,
        scratch_shapes=[
            pltpu.VMEM((2 * H, K * HP), jnp.float32),   # w1 (gru part)
            pltpu.VMEM((EMBED_DIM, K * HP), jnp.float32),  # w1 (smile part)
            pltpu.VMEM((K * HP, OUTP), jnp.float32),    # w2 block-diagonal
            pltpu.SemaphoreType.DMA((3,)),
        ],
    )(xcat, mask, smile_cat,
      kp["wih2"], kp["whh_bd"], kp["ws2"], kp["b1p"], kp["b2p"],
      kp["w1g"], kp["w1s"], kp["w2bd"])

    return out[:B, :K]


# ------------------- host-side weight packing (done once) -------------------
def prepare_kernel_params(p):
    """PyTorch-convention params -> fused / pre-transposed / padded arrays."""
    H = GRU_HIDDEN
    F = NUM_MFCC
    E = EMBED_DIM
    pn = {k: np.asarray(v, np.float32) for k, v in p.items()}

    def blocks(w):  # (4H, X) -> [i, f, g, o] blocks of (H, X)
        return [w[g * H:(g + 1) * H] for g in range(4)]

    wihf, wihb = blocks(pn["wih_f"]), blocks(pn["wih_b"])
    whhf, whhb = blocks(pn["whh_f"]), blocks(pn["whh_b"])

    # fused input projection (2F+1, 8H): fwd rows -> even gate blocks,
    # time-reversed rows -> odd gate blocks, last row = fused biases.
    wih2 = np.zeros((XF, 8 * H), np.float32)
    for g in range(4):
        wih2[0:F, (2 * g) * H:(2 * g + 1) * H] = wihf[g].T
        wih2[F:2 * F, (2 * g + 1) * H:(2 * g + 2) * H] = wihb[g].T
        wih2[2 * F, (2 * g) * H:(2 * g + 1) * H] = pn["b_f"][g * H:(g + 1) * H]
        wih2[2 * F, (2 * g + 1) * H:(2 * g + 2) * H] = pn["b_b"][g * H:(g + 1) * H]

    # block-diagonal recurrent weight (2H, 8H); rows = [h_fwd | h_bwd]
    whh_bd = np.zeros((2 * H, 8 * H), np.float32)
    for g in range(4):
        whh_bd[0:H, (2 * g) * H:(2 * g + 1) * H] = whhf[g].T
        whh_bd[H:2 * H, (2 * g + 1) * H:(2 * g + 2) * H] = whhb[g].T

    # smile_fc with fused bias: (NUM_SMILE+1, E)
    ws2 = np.concatenate([pn["ws"].T, pn["bs"].reshape(1, E)], axis=0)

    # heads: per-head width padded 96 -> 128 lanes, stacked along columns;
    # first layer split over the two feature sources (no in-kernel concat).
    w1g = np.zeros((2 * H, K * HP), np.float32)
    w1s = np.zeros((E, K * HP), np.float32)
    b1p = np.zeros((1, K * HP), np.float32)
    w2bd = np.zeros((K * HP, OUTP), np.float32)
    for k in range(K):
        w1kT = pn["w1"][k].T                               # (INPUT_DIM, HALF)
        w1g[:, k * HP:k * HP + HALF_DIM] = w1kT[:2 * H]
        w1s[:, k * HP:k * HP + HALF_DIM] = w1kT[2 * H:]
        b1p[0, k * HP:k * HP + HALF_DIM] = pn["b1"][k]
        w2bd[k * HP:k * HP + HALF_DIM, k] = pn["w2"][k]
    b2p = np.zeros((1, OUTP), np.float32)
    b2p[0, :K] = pn["b2"]

    kp = {
        "wih2": wih2,
        "whh_bd": whh_bd,
        "ws2": ws2,
        "b1p": b1p,
        "b2p": b2p,
        "w1g": w1g,
        "w1s": w1s,
        "w2bd": w2bd,
    }
    return {k: jnp.asarray(v) for k, v in kp.items()}


# --------------------------- numpy reference --------------------------------
def _sigmoid(x):
    return 1.0 / (1.0 + np.exp(-x))


def reference_forward(mfcc, lengths, smile, p):
    mfcc = np.asarray(mfcc, np.float32)
    smile = np.asarray(smile, np.float32)
    lengths = np.asarray(lengths, np.int32)
    pn = {k: np.asarray(v, np.float32) for k, v in p.items()}
    H = GRU_HIDDEN

    def run_dir(w_ih, w_hh, b, reverse):
        h = np.zeros((B, H), np.float32)
        c = np.zeros((B, H), np.float32)
        order = range(T - 1, -1, -1) if reverse else range(T)
        for t in order:
            x_t = mfcc[:, t, :]
            gates = x_t @ w_ih.T + h @ w_hh.T + b
            i = _sigmoid(gates[:, :H])
            f = _sigmoid(gates[:, H:2 * H])
            g = np.tanh(gates[:, 2 * H:3 * H])
            o = _sigmoid(gates[:, 3 * H:])
            c_new = f * c + i * g
            h_new = o * np.tanh(c_new)
            m = (lengths > t)[:, None]
            h = np.where(m, h_new, h)
            c = np.where(m, c_new, c)
        return h

    h_fwd = run_dir(pn["wih_f"], pn["whh_f"], pn["b_f"], False)
    h_bwd = run_dir(pn["wih_b"], pn["whh_b"], pn["b_b"], True)
    gru_out = np.concatenate([h_fwd, h_bwd], axis=1)
    smile_emb = np.maximum(smile @ pn["ws"].T + pn["bs"], 0.0)
    x = np.concatenate([gru_out, smile_emb], axis=1)
    logits = []
    for k in range(K):
        hk = np.maximum(x @ pn["w1"][k].T + pn["b1"][k], 0.0)
        logits.append(hk @ pn["w2"][k] + pn["b2"][k])
    return np.stack(logits, axis=1)


# ------------------------------ params init ---------------------------------
def init_params(key):
    def u(k, shape, fan_in):
        s = 1.0 / np.sqrt(fan_in)
        return jax.random.uniform(k, shape, jnp.float32, -s, s)

    ks = jax.random.split(key, 16)
    H = GRU_HIDDEN
    p = {
        # LSTM forward direction (PyTorch: weight_ih_l0, weight_hh_l0, biases)
        "wih_f": u(ks[0], (4 * H, NUM_MFCC), H),
        "whh_f": u(ks[1], (4 * H, H), H),
        "b_f":   u(ks[2], (4 * H,), H) + u(ks[3], (4 * H,), H),  # b_ih + b_hh
        # LSTM backward direction (weight_ih_l0_reverse, ...)
        "wih_b": u(ks[4], (4 * H, NUM_MFCC), H),
        "whh_b": u(ks[5], (4 * H, H), H),
        "b_b":   u(ks[6], (4 * H,), H) + u(ks[7], (4 * H,), H),
        # smile_fc
        "ws": u(ks[8], (EMBED_DIM, NUM_SMILE), NUM_SMILE),
        "bs": u(ks[9], (EMBED_DIM,), NUM_SMILE),
        # K classifier heads, stacked
        "w1": u(ks[10], (K, HALF_DIM, INPUT_DIM), INPUT_DIM),
        "b1": u(ks[11], (K, HALF_DIM), INPUT_DIM),
        "w2": u(ks[12], (K, HALF_DIM), HALF_DIM),
        "b2": u(ks[13], (K,), HALF_DIM),
    }
    return p


# --------------------------------- main --------------------------------------
if __name__ == "__main__":
    key = jax.random.PRNGKey(0)
    k_in, k_sm, k_par = jax.random.split(key, 3)

    mfcc = jax.random.normal(k_in, (B, T, NUM_MFCC), jnp.float32)
    smile = jax.random.normal(k_sm, (B, NUM_SMILE), jnp.float32)
    lengths = jnp.array([T, 5], dtype=jnp.int32)   # ragged lengths (<= T)

    params = init_params(k_par)
    kparams = prepare_kernel_params(params)

    logits = jax.block_until_ready(corn_forward(mfcc, lengths, smile, kparams))

    ref = reference_forward(mfcc, lengths, smile, params)
    err = np.max(np.abs(np.asarray(logits) - ref))
    if not np.allclose(np.asarray(logits), ref, atol=1e-3, rtol=1e-3):
        raise AssertionError(
            f"Pallas kernel mismatch vs reference: max abs diff {err}")

    # CORN prediction (glue, outside kernel): (sigmoid(logits) > 0.5).sum(1) + 1
    preds = (jax.nn.sigmoid(logits) > 0.5).sum(axis=1) + 1
    jax.block_until_ready(preds)

    print("KERNEL_OK")
</pallas_src>

<mosaic_0001>
module attributes {stable_mosaic.version = 11 : i64} {
  func.func @corn_kernel(%arg0: memref<64x81xf32, #tpu.memory_space<vmem>>, %arg1: memref<64x128xf32, #tpu.memory_space<vmem>>, %arg2: memref<8x89xf32, #tpu.memory_space<vmem>>, %arg3: memref<81x512xf32, #tpu.memory_space<vmem>>, %arg4: memref<128x512xf32, #tpu.memory_space<vmem>>, %arg5: memref<89x64xf32, #tpu.memory_space<vmem>>, %arg6: memref<1x1024xf32, #tpu.memory_space<vmem>>, %arg7: memref<1x128xf32, #tpu.memory_space<vmem>>, %arg8: memref<128x1024xf32, #tpu.memory_space<any>>, %arg9: memref<64x1024xf32, #tpu.memory_space<any>>, %arg10: memref<1024x128xf32, #tpu.memory_space<any>>, %arg11: memref<8x128xf32, #tpu.memory_space<vmem>>, %arg12: memref<128x1024xf32, #tpu.memory_space<vmem>>, %arg13: memref<64x1024xf32, #tpu.memory_space<vmem>>, %arg14: memref<1024x128xf32, #tpu.memory_space<vmem>>, %arg15: memref<3x!tpu.dma_semaphore, #tpu.memory_space<semaphore_mem>>) attributes {dimension_semantics = [], scalar_prefetch = 0 : i64, scratch_operands = 4 : i64, tpu.core_type = #tpu.core_type<tc>} {
    %c0_i32 = arith.constant 0 : i32
    %0 = tpu.memref_slice %arg15[%c0_i32] : memref<3x!tpu.dma_semaphore, #tpu.memory_space<semaphore_mem>> -> memref<1x!tpu.dma_semaphore, #tpu.memory_space<semaphore_mem>>
    %1 = tpu.memref_squeeze %0 : memref<1x!tpu.dma_semaphore, #tpu.memory_space<semaphore_mem>> -> memref<!tpu.dma_semaphore, #tpu.memory_space<semaphore_mem>>
    tpu.enqueue_dma source(%arg8 : memref<128x1024xf32, #tpu.memory_space<any>>) target(%arg12 : memref<128x1024xf32, #tpu.memory_space<vmem>>) target_semaphore(%1 : memref<!tpu.dma_semaphore, #tpu.memory_space<semaphore_mem>>)
    %c1_i32 = arith.constant 1 : i32
    %2 = tpu.memref_slice %arg15[%c1_i32] : memref<3x!tpu.dma_semaphore, #tpu.memory_space<semaphore_mem>> -> memref<1x!tpu.dma_semaphore, #tpu.memory_space<semaphore_mem>>
    %3 = tpu.memref_squeeze %2 : memref<1x!tpu.dma_semaphore, #tpu.memory_space<semaphore_mem>> -> memref<!tpu.dma_semaphore, #tpu.memory_space<semaphore_mem>>
    tpu.enqueue_dma source(%arg9 : memref<64x1024xf32, #tpu.memory_space<any>>) target(%arg13 : memref<64x1024xf32, #tpu.memory_space<vmem>>) target_semaphore(%3 : memref<!tpu.dma_semaphore, #tpu.memory_space<semaphore_mem>>)
    %c2_i32 = arith.constant 2 : i32
    %4 = tpu.memref_slice %arg15[%c2_i32] : memref<3x!tpu.dma_semaphore, #tpu.memory_space<semaphore_mem>> -> memref<1x!tpu.dma_semaphore, #tpu.memory_space<semaphore_mem>>
    %5 = tpu.memref_squeeze %4 : memref<1x!tpu.dma_semaphore, #tpu.memory_space<semaphore_mem>> -> memref<!tpu.dma_semaphore, #tpu.memory_space<semaphore_mem>>
    tpu.enqueue_dma source(%arg10 : memref<1024x128xf32, #tpu.memory_space<any>>) target(%arg14 : memref<1024x128xf32, #tpu.memory_space<vmem>>) target_semaphore(%5 : memref<!tpu.dma_semaphore, #tpu.memory_space<semaphore_mem>>)
    %c0 = arith.constant 0 : index
    %c0_0 = arith.constant 0 : index
    %6 = vector.load %arg0[%c0, %c0_0] : memref<64x81xf32, #tpu.memory_space<vmem>>, vector<64x81xf32>
    %c0_1 = arith.constant 0 : index
    %c0_2 = arith.constant 0 : index
    %7 = vector.load %arg3[%c0_1, %c0_2] : memref<81x512xf32, #tpu.memory_space<vmem>>, vector<81x512xf32>
    %cst = arith.constant dense<0.000000e+00> : vector<64x512xf32>
    %8 = tpu.matmul %6, %7, %cst {dimension_numbers = #tpu.dot_dimension_numbers<[1], [0], [0], [1], [0, 0, 1, 1], [], []>} : vector<64x81xf32>, vector<81x512xf32>, vector<64x512xf32> -> vector<64x512xf32>
    %c0_3 = arith.constant 0 : index
    %c0_4 = arith.constant 0 : index
    %9 = vector.load %arg4[%c0_3, %c0_4] : memref<128x512xf32, #tpu.memory_space<vmem>>, vector<128x512xf32>
    %c0_5 = arith.constant 0 : index
    %c0_6 = arith.constant 0 : index
    %10 = vector.load %arg1[%c0_5, %c0_6] : memref<64x128xf32, #tpu.memory_space<vmem>>, vector<64x128xf32>
    %cst_7 = arith.constant 0.000000e+00 : f32
    %11 = vector.broadcast %cst_7 : f32 to vector<8x128xf32>
    %cst_8 = arith.constant 0.000000e+00 : f32
    %12 = vector.broadcast %cst_8 : f32 to vector<8x128xf32>
    %13 = vector.extract_strided_slice %8 {offsets = [0, 0], sizes = [8, 512], strides = [1, 1]} : vector<64x512xf32> to vector<8x512xf32>
    %cst_9 = arith.constant dense<0.000000e+00> : vector<8x512xf32>
    %14 = tpu.matmul %11, %9, %cst_9 {dimension_numbers = #tpu.dot_dimension_numbers<[1], [0], [0], [1], [0, 0, 1, 1], [], []>} : vector<8x128xf32>, vector<128x512xf32>, vector<8x512xf32> -> vector<8x512xf32>
    %15 = arith.addf %13, %14 : vector<8x512xf32>
    %16 = vector.extract_strided_slice %15 {offsets = [0, 0], sizes = [8, 128], strides = [1, 1]} : vector<8x512xf32> to vector<8x128xf32>
    %cst_10 = arith.constant 5.000000e-01 : f32
    %17 = vector.broadcast %cst_10 : f32 to vector<8x128xf32>
    %18 = arith.mulf %17, %16 : vector<8x128xf32>
    %19 = math.tanh %18 : vector<8x128xf32>
    %cst_11 = arith.constant 5.000000e-01 : f32
    %20 = vector.broadcast %cst_11 : f32 to vector<8x128xf32>
    %21 = arith.mulf %20, %19 : vector<8x128xf32>
    %cst_12 = arith.constant 5.000000e-01 : f32
    %22 = vector.broadcast %cst_12 : f32 to vector<8x128xf32>
    %23 = arith.addf %21, %22 : vector<8x128xf32>
    %24 = vector.extract_strided_slice %15 {offsets = [0, 128], sizes = [8, 128], strides = [1, 1]} : vector<8x512xf32> to vector<8x128xf32>
    %cst_13 = arith.constant 5.000000e-01 : f32
    %25 = vector.broadcast %cst_13 : f32 to vector<8x128xf32>
    %26 = arith.mulf %25, %24 : vector<8x128xf32>
    %27 = math.tanh %26 : vector<8x128xf32>
    %cst_14 = arith.constant 5.000000e-01 : f32
    %28 = vector.broadcast %cst_14 : f32 to vector<8x128xf32>
    %29 = arith.mulf %28, %27 : vector<8x128xf32>
    %cst_15 = arith.constant 5.000000e-01 : f32
    %30 = vector.broadcast %cst_15 : f32 to vector<8x128xf32>
    %31 = arith.addf %29, %30 : vector<8x128xf32>
    %32 = vector.extract_strided_slice %15 {offsets = [0, 256], sizes = [8, 128], strides = [1, 1]} : vector<8x512xf32> to vector<8x128xf32>
    %33 = math.tanh %32 : vector<8x128xf32>
    %34 = vector.extract_strided_slice %15 {offsets = [0, 384], sizes = [8, 128], strides = [1, 1]} : vector<8x512xf32> to vector<8x128xf32>
    %cst_16 = arith.constant 5.000000e-01 : f32
    %35 = vector.broadcast %cst_16 : f32 to vector<8x128xf32>
    %36 = arith.mulf %35, %34 : vector<8x128xf32>
    %37 = math.tanh %36 : vector<8x128xf32>
    %cst_17 = arith.constant 5.000000e-01 : f32
    %38 = vector.broadcast %cst_17 : f32 to vector<8x128xf32>
    %39 = arith.mulf %38, %37 : vector<8x128xf32>
    %cst_18 = arith.constant 5.000000e-01 : f32
    %40 = vector.broadcast %cst_18 : f32 to vector<8x128xf32>
    %41 = arith.addf %39, %40 : vector<8x128xf32>
    %42 = arith.mulf %31, %12 : vector<8x128xf32>
    %43 = arith.mulf %23, %33 : vector<8x128xf32>
    %44 = arith.addf %42, %43 : vector<8x128xf32>
    %45 = math.tanh %44 : vector<8x128xf32>
    %46 = arith.mulf %41, %45 : vector<8x128xf32>
    %47 = vector.extract_strided_slice %10 {offsets = [0, 0], sizes = [8, 128], strides = [1, 1]} : vector<64x128xf32> to vector<8x128xf32>
    %cst_19 = arith.constant 5.000000e-01 : f32
    %48 = vector.broadcast %cst_19 : f32 to vector<8x128xf32>
    %49 = arith.cmpf ogt, %47, %48 : vector<8x128xf32>
    %50 = arith.select %49, %46, %11 : vector<8x128xi1>, vector<8x128xf32>
    %51 = arith.select %49, %44, %12 : vector<8x128xi1>, vector<8x128xf32>
    %52 = vector.extract_strided_slice %8 {offsets = [8, 0], sizes = [8, 512], strides = [1, 1]} : vector<64x512xf32> to vector<8x512xf32>
    %cst_20 = arith.constant dense<0.000000e+00> : vector<8x512xf32>
    %53 = tpu.matmul %50, %9, %cst_20 {dimension_numbers = #tpu.dot_dimension_numbers<[1], [0], [0], [1], [0, 0, 1, 1], [], []>} : vector<8x128xf32>, vector<128x512xf32>, vector<8x512xf32> -> vector<8x512xf32>
    %54 = arith.addf %52, %53 : vector<8x512xf32>
    %55 = vector.extract_strided_slice %54 {offsets = [0, 0], sizes = [8, 128], strides = [1, 1]} : vector<8x512xf32> to vector<8x128xf32>
    %cst_21 = arith.constant 5.000000e-01 : f32
    %56 = vector.broadcast %cst_21 : f32 to vector<8x128xf32>
    %57 = arith.mulf %56, %55 : vector<8x128xf32>
    %58 = math.tanh %57 : vector<8x128xf32>
    %cst_22 = arith.constant 5.000000e-01 : f32
    %59 = vector.broadcast %cst_22 : f32 to vector<8x128xf32>
    %60 = arith.mulf %59, %58 : vector<8x128xf32>
    %cst_23 = arith.constant 5.000000e-01 : f32
    %61 = vector.broadcast %cst_23 : f32 to vector<8x128xf32>
    %62 = arith.addf %60, %61 : vector<8x128xf32>
    %63 = vector.extract_strided_slice %54 {offsets = [0, 128], sizes = [8, 128], strides = [1, 1]} : vector<8x512xf32> to vector<8x128xf32>
    %cst_24 = arith.constant 5.000000e-01 : f32
    %64 = vector.broadcast %cst_24 : f32 to vector<8x128xf32>
    %65 = arith.mulf %64, %63 : vector<8x128xf32>
    %66 = math.tanh %65 : vector<8x128xf32>
    %cst_25 = arith.constant 5.000000e-01 : f32
    %67 = vector.broadcast %cst_25 : f32 to vector<8x128xf32>
    %68 = arith.mulf %67, %66 : vector<8x128xf32>
    %cst_26 = arith.constant 5.000000e-01 : f32
    %69 = vector.broadcast %cst_26 : f32 to vector<8x128xf32>
    %70 = arith.addf %68, %69 : vector<8x128xf32>
    %71 = vector.extract_strided_slice %54 {offsets = [0, 256], sizes = [8, 128], strides = [1, 1]} : vector<8x512xf32> to vector<8x128xf32>
    %72 = math.tanh %71 : vector<8x128xf32>
    %73 = vector.extract_strided_slice %54 {offsets = [0, 384], sizes = [8, 128], strides = [1, 1]} : vector<8x512xf32> to vector<8x128xf32>
    %cst_27 = arith.constant 5.000000e-01 : f32
    %74 = vector.broadcast %cst_27 : f32 to vector<8x128xf32>
    %75 = arith.mulf %74, %73 : vector<8x128xf32>
    %76 = math.tanh %75 : vector<8x128xf32>
    %cst_28 = arith.constant 5.000000e-01 : f32
    %77 = vector.broadcast %cst_28 : f32 to vector<8x128xf32>
    %78 = arith.mulf %77, %76 : vector<8x128xf32>
    %cst_29 = arith.constant 5.000000e-01 : f32
    %79 = vector.broadcast %cst_29 : f32 to vector<8x128xf32>
    %80 = arith.addf %78, %79 : vector<8x128xf32>
    %81 = arith.mulf %70, %51 : vector<8x128xf32>
    %82 = arith.mulf %62, %72 : vector<8x128xf32>
    %83 = arith.addf %81, %82 : vector<8x128xf32>
    %84 = math.tanh %83 : vector<8x128xf32>
    %85 = arith.mulf %80, %84 : vector<8x128xf32>
    %86 = vector.extract_strided_slice %10 {offsets = [8, 0], sizes = [8, 128], strides = [1, 1]} : vector<64x128xf32> to vector<8x128xf32>
    %cst_30 = arith.constant 5.000000e-01 : f32
    %87 = vector.broadcast %cst_30 : f32 to vector<8x128xf32>
    %88 = arith.cmpf ogt, %86, %87 : vector<8x128xf32>
    %89 = arith.select %88, %85, %50 : vector<8x128xi1>, vector<8x128xf32>
    %90 = arith.select %88, %83, %51 : vector<8x128xi1>, vector<8x128xf32>
    %91 = vector.extract_strided_slice %8 {offsets = [16, 0], sizes = [8, 512], strides = [1, 1]} : vector<64x512xf32> to vector<8x512xf32>
    %cst_31 = arith.constant dense<0.000000e+00> : vector<8x512xf32>
    %92 = tpu.matmul %89, %9, %cst_31 {dimension_numbers = #tpu.dot_dimension_numbers<[1], [0], [0], [1], [0, 0, 1, 1], [], []>} : vector<8x128xf32>, vector<128x512xf32>, vector<8x512xf32> -> vector<8x512xf32>
    %93 = arith.addf %91, %92 : vector<8x512xf32>
    %94 = vector.extract_strided_slice %93 {offsets = [0, 0], sizes = [8, 128], strides = [1, 1]} : vector<8x512xf32> to vector<8x128xf32>
    %cst_32 = arith.constant 5.000000e-01 : f32
    %95 = vector.broadcast %cst_32 : f32 to vector<8x128xf32>
    %96 = arith.mulf %95, %94 : vector<8x128xf32>
    %97 = math.tanh %96 : vector<8x128xf32>
    %cst_33 = arith.constant 5.000000e-01 : f32
    %98 = vector.broadcast %cst_33 : f32 to vector<8x128xf32>
    %99 = arith.mulf %98, %97 : vector<8x128xf32>
    %cst_34 = arith.constant 5.000000e-01 : f32
    %100 = vector.broadcast %cst_34 : f32 to vector<8x128xf32>
    %101 = arith.addf %99, %100 : vector<8x128xf32>
    %102 = vector.extract_strided_slice %93 {offsets = [0, 128], sizes = [8, 128], strides = [1, 1]} : vector<8x512xf32> to vector<8x128xf32>
    %cst_35 = arith.constant 5.000000e-01 : f32
    %103 = vector.broadcast %cst_35 : f32 to vector<8x128xf32>
    %104 = arith.mulf %103, %102 : vector<8x128xf32>
    %105 = math.tanh %104 : vector<8x128xf32>
    %cst_36 = arith.constant 5.000000e-01 : f32
    %106 = vector.broadcast %cst_36 : f32 to vector<8x128xf32>
    %107 = arith.mulf %106, %105 : vector<8x128xf32>
    %cst_37 = arith.constant 5.000000e-01 : f32
    %108 = vector.broadcast %cst_37 : f32 to vector<8x128xf32>
    %109 = arith.addf %107, %108 : vector<8x128xf32>
    %110 = vector.extract_strided_slice %93 {offsets = [0, 256], sizes = [8, 128], strides = [1, 1]} : vector<8x512xf32> to vector<8x128xf32>
    %111 = math.tanh %110 : vector<8x128xf32>
    %112 = vector.extract_strided_slice %93 {offsets = [0, 384], sizes = [8, 128], strides = [1, 1]} : vector<8x512xf32> to vector<8x128xf32>
    %cst_38 = arith.constant 5.000000e-01 : f32
    %113 = vector.broadcast %cst_38 : f32 to vector<8x128xf32>
    %114 = arith.mulf %113, %112 : vector<8x128xf32>
    %115 = math.tanh %114 : vector<8x128xf32>
    %cst_39 = arith.constant 5.000000e-01 : f32
    %116 = vector.broadcast %cst_39 : f32 to vector<8x128xf32>
    %117 = arith.mulf %116, %115 : vector<8x128xf32>
    %cst_40 = arith.constant 5.000000e-01 : f32
    %118 = vector.broadcast %cst_40 : f32 to vector<8x128xf32>
    %119 = arith.addf %117, %118 : vector<8x128xf32>
    %120 = arith.mulf %109, %90 : vector<8x128xf32>
    %121 = arith.mulf %101, %111 : vector<8x128xf32>
    %122 = arith.addf %120, %121 : vector<8x128xf32>
    %123 = math.tanh %122 : vector<8x128xf32>
    %124 = arith.mulf %119, %123 : vector<8x128xf32>
    %125 = vector.extract_strided_slice %10 {offsets = [16, 0], sizes = [8, 128], strides = [1, 1]} : vector<64x128xf32> to vector<8x128xf32>
    %cst_41 = arith.constant 5.000000e-01 : f32
    %126 = vector.broadcast %cst_41 : f32 to vector<8x128xf32>
    %127 = arith.cmpf ogt, %125, %126 : vector<8x128xf32>
    %128 = arith.select %127, %124, %89 : vector<8x128xi1>, vector<8x128xf32>
    %129 = arith.select %127, %122, %90 : vector<8x128xi1>, vector<8x128xf32>
    %130 = vector.extract_strided_slice %8 {offsets = [24, 0], sizes = [8, 512], strides = [1, 1]} : vector<64x512xf32> to vector<8x512xf32>
    %cst_42 = arith.constant dense<0.000000e+00> : vector<8x512xf32>
    %131 = tpu.matmul %128, %9, %cst_42 {dimension_numbers = #tpu.dot_dimension_numbers<[1], [0], [0], [1], [0, 0, 1, 1], [], []>} : vector<8x128xf32>, vector<128x512xf32>, vector<8x512xf32> -> vector<8x512xf32>
    %132 = arith.addf %130, %131 : vector<8x512xf32>
    %133 = vector.extract_strided_slice %132 {offsets = [0, 0], sizes = [8, 128], strides = [1, 1]} : vector<8x512xf32> to vector<8x128xf32>
    %cst_43 = arith.constant 5.000000e-01 : f32
    %134 = vector.broadcast %cst_43 : f32 to vector<8x128xf32>
    %135 = arith.mulf %134, %133 : vector<8x128xf32>
    %136 = math.tanh %135 : vector<8x128xf32>
    %cst_44 = arith.constant 5.000000e-01 : f32
    %137 = vector.broadcast %cst_44 : f32 to vector<8x128xf32>
    %138 = arith.mulf %137, %136 : vector<8x128xf32>
    %cst_45 = arith.constant 5.000000e-01 : f32
    %139 = vector.broadcast %cst_45 : f32 to vector<8x128xf32>
    %140 = arith.addf %138, %139 : vector<8x128xf32>
    %141 = vector.extract_strided_slice %132 {offsets = [0, 128], sizes = [8, 128], strides = [1, 1]} : vector<8x512xf32> to vector<8x128xf32>
    %cst_46 = arith.constant 5.000000e-01 : f32
    %142 = vector.broadcast %cst_46 : f32 to vector<8x128xf32>
    %143 = arith.mulf %142, %141 : vector<8x128xf32>
    %144 = math.tanh %143 : vector<8x128xf32>
    %cst_47 = arith.constant 5.000000e-01 : f32
    %145 = vector.broadcast %cst_47 : f32 to vector<8x128xf32>
    %146 = arith.mulf %145, %144 : vector<8x128xf32>
    %cst_48 = arith.constant 5.000000e-01 : f32
    %147 = vector.broadcast %cst_48 : f32 to vector<8x128xf32>
    %148 = arith.addf %146, %147 : vector<8x128xf32>
    %149 = vector.extract_strided_slice %132 {offsets = [0, 256], sizes = [8, 128], strides = [1, 1]} : vector<8x512xf32> to vector<8x128xf32>
    %150 = math.tanh %149 : vector<8x128xf32>
    %151 = vector.extract_strided_slice %132 {offsets = [0, 384], sizes = [8, 128], strides = [1, 1]} : vector<8x512xf32> to vector<8x128xf32>
    %cst_49 = arith.constant 5.000000e-01 : f32
    %152 = vector.broadcast %cst_49 : f32 to vector<8x128xf32>
    %153 = arith.mulf %152, %151 : vector<8x128xf32>
    %154 = math.tanh %153 : vector<8x128xf32>
    %cst_50 = arith.constant 5.000000e-01 : f32
    %155 = vector.broadcast %cst_50 : f32 to vector<8x128xf32>
    %156 = arith.mulf %155, %154 : vector<8x128xf32>
    %cst_51 = arith.constant 5.000000e-01 : f32
    %157 = vector.broadcast %cst_51 : f32 to vector<8x128xf32>
    %158 = arith.addf %156, %157 : vector<8x128xf32>
    %159 = arith.mulf %148, %129 : vector<8x128xf32>
    %160 = arith.mulf %140, %150 : vector<8x128xf32>
    %161 = arith.addf %159, %160 : vector<8x128xf32>
    %162 = math.tanh %161 : vector<8x128xf32>
    %163 = arith.mulf %158, %162 : vector<8x128xf32>
    %164 = vector.extract_strided_slice %10 {offsets = [24, 0], sizes = [8, 128], strides = [1, 1]} : vector<64x128xf32> to vector<8x128xf32>
    %cst_52 = arith.constant 5.000000e-01 : f32
    %165 = vector.broadcast %cst_52 : f32 to vector<8x128xf32>
    %166 = arith.cmpf ogt, %164, %165 : vector<8x128xf32>
    %167 = arith.select %166, %163, %128 : vector<8x128xi1>, vector<8x128xf32>
    %168 = arith.select %166, %161, %129 : vector<8x128xi1>, vector<8x128xf32>
    %169 = vector.extract_strided_slice %8 {offsets = [32, 0], sizes = [8, 512], strides = [1, 1]} : vector<64x512xf32> to vector<8x512xf32>
    %cst_53 = arith.constant dense<0.000000e+00> : vector<8x512xf32>
    %170 = tpu.matmul %167, %9, %cst_53 {dimension_numbers = #tpu.dot_dimension_numbers<[1], [0], [0], [1], [0, 0, 1, 1], [], []>} : vector<8x128xf32>, vector<128x512xf32>, vector<8x512xf32> -> vector<8x512xf32>
    %171 = arith.addf %169, %170 : vector<8x512xf32>
    %172 = vector.extract_strided_slice %171 {offsets = [0, 0], sizes = [8, 128], strides = [1, 1]} : vector<8x512xf32> to vector<8x128xf32>
    %cst_54 = arith.constant 5.000000e-01 : f32
    %173 = vector.broadcast %cst_54 : f32 to vector<8x128xf32>
    %174 = arith.mulf %173, %172 : vector<8x128xf32>
    %175 = math.tanh %174 : vector<8x128xf32>
    %cst_55 = arith.constant 5.000000e-01 : f32
    %176 = vector.broadcast %cst_55 : f32 to vector<8x128xf32>
    %177 = arith.mulf %176, %175 : vector<8x128xf32>
    %cst_56 = arith.constant 5.000000e-01 : f32
    %178 = vector.broadcast %cst_56 : f32 to vector<8x128xf32>
    %179 = arith.addf %177, %178 : vector<8x128xf32>
    %180 = vector.extract_strided_slice %171 {offsets = [0, 128], sizes = [8, 128], strides = [1, 1]} : vector<8x512xf32> to vector<8x128xf32>
    %cst_57 = arith.constant 5.000000e-01 : f32
    %181 = vector.broadcast %cst_57 : f32 to vector<8x128xf32>
    %182 = arith.mulf %181, %180 : vector<8x128xf32>
    %183 = math.tanh %182 : vector<8x128xf32>
    %cst_58 = arith.constant 5.000000e-01 : f32
    %184 = vector.broadcast %cst_58 : f32 to vector<8x128xf32>
    %185 = arith.mulf %184, %183 : vector<8x128xf32>
    %cst_59 = arith.constant 5.000000e-01 : f32
    %186 = vector.broadcast %cst_59 : f32 to vector<8x128xf32>
    %187 = arith.addf %185, %186 : vector<8x128xf32>
    %188 = vector.extract_strided_slice %171 {offsets = [0, 256], sizes = [8, 128], strides = [1, 1]} : vector<8x512xf32> to vector<8x128xf32>
    %189 = math.tanh %188 : vector<8x128xf32>
    %190 = vector.extract_strided_slice %171 {offsets = [0, 384], sizes = [8, 128], strides = [1, 1]} : vector<8x512xf32> to vector<8x128xf32>
    %cst_60 = arith.constant 5.000000e-01 : f32
    %191 = vector.broadcast %cst_60 : f32 to vector<8x128xf32>
    %192 = arith.mulf %191, %190 : vector<8x128xf32>
    %193 = math.tanh %192 : vector<8x128xf32>
    %cst_61 = arith.constant 5.000000e-01 : f32
    %194 = vector.broadcast %cst_61 : f32 to vector<8x128xf32>
    %195 = arith.mulf %194, %193 : vector<8x128xf32>
    %cst_62 = arith.constant 5.000000e-01 : f32
    %196 = vector.broadcast %cst_62 : f32 to vector<8x128xf32>
    %197 = arith.addf %195, %196 : vector<8x128xf32>
    %198 = arith.mulf %187, %168 : vector<8x128xf32>
    %199 = arith.mulf %179, %189 : vector<8x128xf32>
    %200 = arith.addf %198, %199 : vector<8x128xf32>
    %201 = math.tanh %200 : vector<8x128xf32>
    %202 = arith.mulf %197, %201 : vector<8x128xf32>
    %203 = vector.extract_strided_slice %10 {offsets = [32, 0], sizes = [8, 128], strides = [1, 1]} : vector<64x128xf32> to vector<8x128xf32>
    %cst_63 = arith.constant 5.000000e-01 : f32
    %204 = vector.broadcast %cst_63 : f32 to vector<8x128xf32>
    %205 = arith.cmpf ogt, %203, %204 : vector<8x128xf32>
    %206 = arith.select %205, %202, %167 : vector<8x128xi1>, vector<8x128xf32>
    %207 = arith.select %205, %200, %168 : vector<8x128xi1>, vector<8x128xf32>
    %208 = vector.extract_strided_slice %8 {offsets = [40, 0], sizes = [8, 512], strides = [1, 1]} : vector<64x512xf32> to vector<8x512xf32>
    %cst_64 = arith.constant dense<0.000000e+00> : vector<8x512xf32>
    %209 = tpu.matmul %206, %9, %cst_64 {dimension_numbers = #tpu.dot_dimension_numbers<[1], [0], [0], [1], [0, 0, 1, 1], [], []>} : vector<8x128xf32>, vector<128x512xf32>, vector<8x512xf32> -> vector<8x512xf32>
    %210 = arith.addf %208, %209 : vector<8x512xf32>
    %211 = vector.extract_strided_slice %210 {offsets = [0, 0], sizes = [8, 128], strides = [1, 1]} : vector<8x512xf32> to vector<8x128xf32>
    %cst_65 = arith.constant 5.000000e-01 : f32
    %212 = vector.broadcast %cst_65 : f32 to vector<8x128xf32>
    %213 = arith.mulf %212, %211 : vector<8x128xf32>
    %214 = math.tanh %213 : vector<8x128xf32>
    %cst_66 = arith.constant 5.000000e-01 : f32
    %215 = vector.broadcast %cst_66 : f32 to vector<8x128xf32>
    %216 = arith.mulf %215, %214 : vector<8x128xf32>
    %cst_67 = arith.constant 5.000000e-01 : f32
    %217 = vector.broadcast %cst_67 : f32 to vector<8x128xf32>
    %218 = arith.addf %216, %217 : vector<8x128xf32>
    %219 = vector.extract_strided_slice %210 {offsets = [0, 128], sizes = [8, 128], strides = [1, 1]} : vector<8x512xf32> to vector<8x128xf32>
    %cst_68 = arith.constant 5.000000e-01 : f32
    %220 = vector.broadcast %cst_68 : f32 to vector<8x128xf32>
    %221 = arith.mulf %220, %219 : vector<8x128xf32>
    %222 = math.tanh %221 : vector<8x128xf32>
    %cst_69 = arith.constant 5.000000e-01 : f32
    %223 = vector.broadcast %cst_69 : f32 to vector<8x128xf32>
    %224 = arith.mulf %223, %222 : vector<8x128xf32>
    %cst_70 = arith.constant 5.000000e-01 : f32
    %225 = vector.broadcast %cst_70 : f32 to vector<8x128xf32>
    %226 = arith.addf %224, %225 : vector<8x128xf32>
    %227 = vector.extract_strided_slice %210 {offsets = [0, 256], sizes = [8, 128], strides = [1, 1]} : vector<8x512xf32> to vector<8x128xf32>
    %228 = math.tanh %227 : vector<8x128xf32>
    %229 = vector.extract_strided_slice %210 {offsets = [0, 384], sizes = [8, 128], strides = [1, 1]} : vector<8x512xf32> to vector<8x128xf32>
    %cst_71 = arith.constant 5.000000e-01 : f32
    %230 = vector.broadcast %cst_71 : f32 to vector<8x128xf32>
    %231 = arith.mulf %230, %229 : vector<8x128xf32>
    %232 = math.tanh %231 : vector<8x128xf32>
    %cst_72 = arith.constant 5.000000e-01 : f32
    %233 = vector.broadcast %cst_72 : f32 to vector<8x128xf32>
    %234 = arith.mulf %233, %232 : vector<8x128xf32>
    %cst_73 = arith.constant 5.000000e-01 : f32
    %235 = vector.broadcast %cst_73 : f32 to vector<8x128xf32>
    %236 = arith.addf %234, %235 : vector<8x128xf32>
    %237 = arith.mulf %226, %207 : vector<8x128xf32>
    %238 = arith.mulf %218, %228 : vector<8x128xf32>
    %239 = arith.addf %237, %238 : vector<8x128xf32>
    %240 = math.tanh %239 : vector<8x128xf32>
    %241 = arith.mulf %236, %240 : vector<8x128xf32>
    %242 = vector.extract_strided_slice %10 {offsets = [40, 0], sizes = [8, 128], strides = [1, 1]} : vector<64x128xf32> to vector<8x128xf32>
    %cst_74 = arith.constant 5.000000e-01 : f32
    %243 = vector.broadcast %cst_74 : f32 to vector<8x128xf32>
    %244 = arith.cmpf ogt, %242, %243 : vector<8x128xf32>
    %245 = arith.select %244, %241, %206 : vector<8x128xi1>, vector<8x128xf32>
    %246 = arith.select %244, %239, %207 : vector<8x128xi1>, vector<8x128xf32>
    %247 = vector.extract_strided_slice %8 {offsets = [48, 0], sizes = [8, 512], strides = [1, 1]} : vector<64x512xf32> to vector<8x512xf32>
    %cst_75 = arith.constant dense<0.000000e+00> : vector<8x512xf32>
    %248 = tpu.matmul %245, %9, %cst_75 {dimension_numbers = #tpu.dot_dimension_numbers<[1], [0], [0], [1], [0, 0, 1, 1], [], []>} : vector<8x128xf32>, vector<128x512xf32>, vector<8x512xf32> -> vector<8x512xf32>
    %249 = arith.addf %247, %248 : vector<8x512xf32>
    %250 = vector.extract_strided_slice %249 {offsets = [0, 0], sizes = [8, 128], strides = [1, 1]} : vector<8x512xf32> to vector<8x128xf32>
    %cst_76 = arith.constant 5.000000e-01 : f32
    %251 = vector.broadcast %cst_76 : f32 to vector<8x128xf32>
    %252 = arith.mulf %251, %250 : vector<8x128xf32>
    %253 = math.tanh %252 : vector<8x128xf32>
    %cst_77 = arith.constant 5.000000e-01 : f32
    %254 = vector.broadcast %cst_77 : f32 to vector<8x128xf32>
    %255 = arith.mulf %254, %253 : vector<8x128xf32>
    %cst_78 = arith.constant 5.000000e-01 : f32
    %256 = vector.broadcast %cst_78 : f32 to vector<8x128xf32>
    %257 = arith.addf %255, %256 : vector<8x128xf32>
    %258 = vector.extract_strided_slice %249 {offsets = [0, 128], sizes = [8, 128], strides = [1, 1]} : vector<8x512xf32> to vector<8x128xf32>
    %cst_79 = arith.constant 5.000000e-01 : f32
    %259 = vector.broadcast %cst_79 : f32 to vector<8x128xf32>
    %260 = arith.mulf %259, %258 : vector<8x128xf32>
    %261 = math.tanh %260 : vector<8x128xf32>
    %cst_80 = arith.constant 5.000000e-01 : f32
    %262 = vector.broadcast %cst_80 : f32 to vector<8x128xf32>
    %263 = arith.mulf %262, %261 : vector<8x128xf32>
    %cst_81 = arith.constant 5.000000e-01 : f32
    %264 = vector.broadcast %cst_81 : f32 to vector<8x128xf32>
    %265 = arith.addf %263, %264 : vector<8x128xf32>
    %266 = vector.extract_strided_slice %249 {offsets = [0, 256], sizes = [8, 128], strides = [1, 1]} : vector<8x512xf32> to vector<8x128xf32>
    %267 = math.tanh %266 : vector<8x128xf32>
    %268 = vector.extract_strided_slice %249 {offsets = [0, 384], sizes = [8, 128], strides = [1, 1]} : vector<8x512xf32> to vector<8x128xf32>
    %cst_82 = arith.constant 5.000000e-01 : f32
    %269 = vector.broadcast %cst_82 : f32 to vector<8x128xf32>
    %270 = arith.mulf %269, %268 : vector<8x128xf32>
    %271 = math.tanh %270 : vector<8x128xf32>
    %cst_83 = arith.constant 5.000000e-01 : f32
    %272 = vector.broadcast %cst_83 : f32 to vector<8x128xf32>
    %273 = arith.mulf %272, %271 : vector<8x128xf32>
    %cst_84 = arith.constant 5.000000e-01 : f32
    %274 = vector.broadcast %cst_84 : f32 to vector<8x128xf32>
    %275 = arith.addf %273, %274 : vector<8x128xf32>
    %276 = arith.mulf %265, %246 : vector<8x128xf32>
    %277 = arith.mulf %257, %267 : vector<8x128xf32>
    %278 = arith.addf %276, %277 : vector<8x128xf32>
    %279 = math.tanh %278 : vector<8x128xf32>
    %280 = arith.mulf %275, %279 : vector<8x128xf32>
    %281 = vector.extract_strided_slice %10 {offsets = [48, 0], sizes = [8, 128], strides = [1, 1]} : vector<64x128xf32> to vector<8x128xf32>
    %cst_85 = arith.constant 5.000000e-01 : f32
    %282 = vector.broadcast %cst_85 : f32 to vector<8x128xf32>
    %283 = arith.cmpf ogt, %281, %282 : vector<8x128xf32>
    %284 = arith.select %283, %280, %245 : vector<8x128xi1>, vector<8x128xf32>
    %285 = arith.select %283, %278, %246 : vector<8x128xi1>, vector<8x128xf32>
    %286 = vector.extract_strided_slice %8 {offsets = [56, 0], sizes = [8, 512], strides = [1, 1]} : vector<64x512xf32> to vector<8x512xf32>
    %cst_86 = arith.constant dense<0.000000e+00> : vector<8x512xf32>
    %287 = tpu.matmul %284, %9, %cst_86 {dimension_numbers = #tpu.dot_dimension_numbers<[1], [0], [0], [1], [0, 0, 1, 1], [], []>} : vector<8x128xf32>, vector<128x512xf32>, vector<8x512xf32> -> vector<8x512xf32>
    %288 = arith.addf %286, %287 : vector<8x512xf32>
    %289 = vector.extract_strided_slice %288 {offsets = [0, 0], sizes = [8, 128], strides = [1, 1]} : vector<8x512xf32> to vector<8x128xf32>
    %cst_87 = arith.constant 5.000000e-01 : f32
    %290 = vector.broadcast %cst_87 : f32 to vector<8x128xf32>
    %291 = arith.mulf %290, %289 : vector<8x128xf32>
    %292 = math.tanh %291 : vector<8x128xf32>
    %cst_88 = arith.constant 5.000000e-01 : f32
    %293 = vector.broadcast %cst_88 : f32 to vector<8x128xf32>
    %294 = arith.mulf %293, %292 : vector<8x128xf32>
    %cst_89 = arith.constant 5.000000e-01 : f32
    %295 = vector.broadcast %cst_89 : f32 to vector<8x128xf32>
    %296 = arith.addf %294, %295 : vector<8x128xf32>
    %297 = vector.extract_strided_slice %288 {offsets = [0, 128], sizes = [8, 128], strides = [1, 1]} : vector<8x512xf32> to vector<8x128xf32>
    %cst_90 = arith.constant 5.000000e-01 : f32
    %298 = vector.broadcast %cst_90 : f32 to vector<8x128xf32>
    %299 = arith.mulf %298, %297 : vector<8x128xf32>
    %300 = math.tanh %299 : vector<8x128xf32>
    %cst_91 = arith.constant 5.000000e-01 : f32
    %301 = vector.broadcast %cst_91 : f32 to vector<8x128xf32>
    %302 = arith.mulf %301, %300 : vector<8x128xf32>
    %cst_92 = arith.constant 5.000000e-01 : f32
    %303 = vector.broadcast %cst_92 : f32 to vector<8x128xf32>
    %304 = arith.addf %302, %303 : vector<8x128xf32>
    %305 = vector.extract_strided_slice %288 {offsets = [0, 256], sizes = [8, 128], strides = [1, 1]} : vector<8x512xf32> to vector<8x128xf32>
    %306 = math.tanh %305 : vector<8x128xf32>
    %307 = vector.extract_strided_slice %288 {offsets = [0, 384], sizes = [8, 128], strides = [1, 1]} : vector<8x512xf32> to vector<8x128xf32>
    %cst_93 = arith.constant 5.000000e-01 : f32
    %308 = vector.broadcast %cst_93 : f32 to vector<8x128xf32>
    %309 = arith.mulf %308, %307 : vector<8x128xf32>
    %310 = math.tanh %309 : vector<8x128xf32>
    %cst_94 = arith.constant 5.000000e-01 : f32
    %311 = vector.broadcast %cst_94 : f32 to vector<8x128xf32>
    %312 = arith.mulf %311, %310 : vector<8x128xf32>
    %cst_95 = arith.constant 5.000000e-01 : f32
    %313 = vector.broadcast %cst_95 : f32 to vector<8x128xf32>
    %314 = arith.addf %312, %313 : vector<8x128xf32>
    %315 = arith.mulf %304, %285 : vector<8x128xf32>
    %316 = arith.mulf %296, %306 : vector<8x128xf32>
    %317 = arith.addf %315, %316 : vector<8x128xf32>
    %318 = math.tanh %317 : vector<8x128xf32>
    %319 = arith.mulf %314, %318 : vector<8x128xf32>
    %320 = vector.extract_strided_slice %10 {offsets = [56, 0], sizes = [8, 128], strides = [1, 1]} : vector<64x128xf32> to vector<8x128xf32>
    %cst_96 = arith.constant 5.000000e-01 : f32
    %321 = vector.broadcast %cst_96 : f32 to vector<8x128xf32>
    %322 = arith.cmpf ogt, %320, %321 : vector<8x128xf32>
    %323 = arith.select %322, %319, %284 : vector<8x128xi1>, vector<8x128xf32>
    %c0_97 = arith.constant 0 : index
    %c0_98 = arith.constant 0 : index
    %324 = vector.load %arg2[%c0_97, %c0_98] : memref<8x89xf32, #tpu.memory_space<vmem>>, vector<8x89xf32>
    %c0_99 = arith.constant 0 : index
    %c0_100 = arith.constant 0 : index
    %325 = vector.load %arg5[%c0_99, %c0_100] : memref<89x64xf32, #tpu.memory_space<vmem>>, vector<89x64xf32>
    %cst_101 = arith.constant dense<0.000000e+00> : vector<8x64xf32>
    %326 = tpu.matmul %324, %325, %cst_101 {dimension_numbers = #tpu.dot_dimension_numbers<[1], [0], [0], [1], [0, 0, 1, 1], [], []>} : vector<8x89xf32>, vector<89x64xf32>, vector<8x64xf32> -> vector<8x64xf32>
    %cst_102 = arith.constant 0.000000e+00 : f32
    %327 = vector.broadcast %cst_102 : f32 to vector<8x64xf32>
    %328 = arith.maximumf %326, %327 : vector<8x64xf32>
    %c0_i32_103 = arith.constant 0 : i32
    %329 = tpu.memref_slice %arg15[%c0_i32_103] : memref<3x!tpu.dma_semaphore, #tpu.memory_space<semaphore_mem>> -> memref<1x!tpu.dma_semaphore, #tpu.memory_space<semaphore_mem>>
    %330 = tpu.memref_squeeze %329 : memref<1x!tpu.dma_semaphore, #tpu.memory_space<semaphore_mem>> -> memref<!tpu.dma_semaphore, #tpu.memory_space<semaphore_mem>>
    tpu.wait_dma2 semaphore(%330 : memref<!tpu.dma_semaphore, #tpu.memory_space<semaphore_mem>>) src(%arg8 : memref<128x1024xf32, #tpu.memory_space<any>>) dst(%arg12 : memref<128x1024xf32, #tpu.memory_space<vmem>>)
    %c1_i32_104 = arith.constant 1 : i32
    %331 = tpu.memref_slice %arg15[%c1_i32_104] : memref<3x!tpu.dma_semaphore, #tpu.memory_space<semaphore_mem>> -> memref<1x!tpu.dma_semaphore, #tpu.memory_space<semaphore_mem>>
    %332 = tpu.memref_squeeze %331 : memref<1x!tpu.dma_semaphore, #tpu.memory_space<semaphore_mem>> -> memref<!tpu.dma_semaphore, #tpu.memory_space<semaphore_mem>>
    tpu.wait_dma2 semaphore(%332 : memref<!tpu.dma_semaphore, #tpu.memory_space<semaphore_mem>>) src(%arg9 : memref<64x1024xf32, #tpu.memory_space<any>>) dst(%arg13 : memref<64x1024xf32, #tpu.memory_space<vmem>>)
    %c2_i32_105 = arith.constant 2 : i32
    %333 = tpu.memref_slice %arg15[%c2_i32_105] : memref<3x!tpu.dma_semaphore, #tpu.memory_space<semaphore_mem>> -> memref<1x!tpu.dma_semaphore, #tpu.memory_space<semaphore_mem>>
    %334 = tpu.memref_squeeze %333 : memref<1x!tpu.dma_semaphore, #tpu.memory_space<semaphore_mem>> -> memref<!tpu.dma_semaphore, #tpu.memory_space<semaphore_mem>>
    tpu.wait_dma2 semaphore(%334 : memref<!tpu.dma_semaphore, #tpu.memory_space<semaphore_mem>>) src(%arg10 : memref<1024x128xf32, #tpu.memory_space<any>>) dst(%arg14 : memref<1024x128xf32, #tpu.memory_space<vmem>>)
    %c0_106 = arith.constant 0 : index
    %c0_107 = arith.constant 0 : index
    %335 = vector.load %arg12[%c0_106, %c0_107] : memref<128x1024xf32, #tpu.memory_space<vmem>>, vector<128x1024xf32>
    %cst_108 = arith.constant dense<0.000000e+00> : vector<8x1024xf32>
    %336 = tpu.matmul %323, %335, %cst_108 {dimension_numbers = #tpu.dot_dimension_numbers<[1], [0], [0], [1], [0, 0, 1, 1], [], []>} : vector<8x128xf32>, vector<128x1024xf32>, vector<8x1024xf32> -> vector<8x1024xf32>
    %c0_109 = arith.constant 0 : index
    %c0_110 = arith.constant 0 : index
    %337 = vector.load %arg13[%c0_109, %c0_110] : memref<64x1024xf32, #tpu.memory_space<vmem>>, vector<64x1024xf32>
    %cst_111 = arith.constant dense<0.000000e+00> : vector<8x1024xf32>
    %338 = tpu.matmul %328, %337, %cst_111 {dimension_numbers = #tpu.dot_dimension_numbers<[1], [0], [0], [1], [0, 0, 1, 1], [], []>} : vector<8x64xf32>, vector<64x1024xf32>, vector<8x1024xf32> -> vector<8x1024xf32>
    %339 = arith.addf %336, %338 : vector<8x1024xf32>
    %c0_112 = arith.constant 0 : index
    %c0_113 = arith.constant 0 : index
    %340 = vector.load %arg6[%c0_112, %c0_113] : memref<1x1024xf32, #tpu.memory_space<vmem>>, vector<1x1024xf32>
    %341 = vector.broadcast %340 : vector<1x1024xf32> to vector<8x1024xf32>
    %342 = arith.addf %339, %341 : vector<8x1024xf32>
    %cst_114 = arith.constant 0.000000e+00 : f32
    %343 = vector.broadcast %cst_114 : f32 to vector<8x1024xf32>
    %344 = arith.maximumf %342, %343 : vector<8x1024xf32>
    %c0_115 = arith.constant 0 : index
    %c0_116 = arith.constant 0 : index
    %345 = vector.load %arg14[%c0_115, %c0_116] : memref<1024x128xf32, #tpu.memory_space<vmem>>, vector<1024x128xf32>
    %cst_117 = arith.constant dense<0.000000e+00> : vector<8x128xf32>
    %346 = tpu.matmul %344, %345, %cst_117 {dimension_numbers = #tpu.dot_dimension_numbers<[1], [0], [0], [1], [0, 0, 1, 1], [], []>} : vector<8x1024xf32>, vector<1024x128xf32>, vector<8x128xf32> -> vector<8x128xf32>
    %c0_118 = arith.constant 0 : index
    %c0_119 = arith.constant 0 : index
    %347 = vector.load %arg7[%c0_118, %c0_119] : memref<1x128xf32, #tpu.memory_space<vmem>>, vector<1x128xf32>
    %348 = vector.broadcast %347 : vector<1x128xf32> to vector<8x128xf32>
    %349 = arith.addf %346, %348 : vector<8x128xf32>
    %c0_120 = arith.constant 0 : index
    %c0_121 = arith.constant 0 : index
    %350 = vector.load %arg11[%c0_120, %c0_121] : memref<8x128xf32, #tpu.memory_space<vmem>>, vector<8x128xf32>
    tpu.vector_store %arg11[%c0_120, %c0_121], %349 {strides = array<i32>} : memref<8x128xf32, #tpu.memory_space<vmem>>, vector<8x128xf32>,
    return
  }
}

</mosaic_0001>

<llo_original>
// kernel: corn_forward.1
$region0: #{corn_forward.1}
  #allocation0 [shape = 'u32[]', space=smem, size = 0x4, offset = 0x4, fixed_abs, tag = 'smem constant byte address 0x4 - core index']
  #allocation1 [shape = 'u32[144,128]{1,0:T(1,128)}', space=vmem, size = 0x12000, scoped, tag = 'internal scratch']
  #allocation2 [shape = 'f32[128,1024]{1,0:T(8,128)}', space=vmem, size = 0x80000, scoped, tag = 'scratch operand']
  #allocation3 [shape = 'f32[64,1024]{1,0:T(8,128)}', space=vmem, size = 0x40000, scoped, tag = 'scratch operand']
  #allocation4 [shape = 'f32[1024,128]{1,0:T(8,128)}', space=vmem, size = 0x80000, scoped, tag = 'scratch operand']
  #allocation5 [shape = 's32[3]{0}', space=sflag, size = 0xc, scoped, tag = 'scratch operand']
  #allocation10 [shape = 's32[]', space=sflag, size = 0x4, offset = 0, fixed_abs, tag = 'sflag constant byte address 0x0 - dummy sync flag']
  #allocation11 [shape = 's32[]', space=sflag, size = 0x4, offset = 0, fixed_abs, tag = 'sflag constant byte address 0x0 - dummy sync flag']
  #allocation12 [shape = 's32[]', space=sflag, size = 0x4, offset = 0, fixed_abs, tag = 'sflag constant byte address 0x0 - dummy sync flag']
  #allocation13 [shape = 'u32[]', space=smem, size = 0x4, offset = 0x44, fixed_abs, tag = 'smem constant byte address 0x44 - assertion arg 0']
  #allocation14 [shape = 'u32[]', space=smem, size = 0x4, offset = 0x48, fixed_abs, tag = 'smem constant byte address 0x48 - assertion arg 1']
  #allocation15 [shape = 's32[]', space=sflag, size = 0x4, offset = 0, fixed_abs, tag = 'sflag constant byte address 0x0 - dummy sync flag']
  #allocation16 [shape = 's32[]', space=sflag, size = 0x4, offset = 0, fixed_abs, tag = 'sflag constant byte address 0x0 - dummy sync flag']
  %s0 = inlined_call_operand.vmem [shape: f32[64,81], index: 0, kind: input, shape index: {}]
  %s1 = inlined_call_operand.vmem [shape: f32[64,128], index: 1, kind: input, shape index: {}]
  %s2 = inlined_call_operand.vmem [shape: f32[8,89], index: 2, kind: input, shape index: {}]
  %s3 = inlined_call_operand.hbm [shape: f32[81,512], index: 3, kind: input, shape index: {}]
  %s4 = inlined_call_operand.hbm [shape: f32[128,512], index: 4, kind: input, shape index: {}]
  %s5 = inlined_call_operand.vmem [shape: f32[89,64], index: 5, kind: input, shape index: {}]
  %s6 = inlined_call_operand.vmem [shape: f32[1,1024], index: 6, kind: input, shape index: {}]
  %s7 = inlined_call_operand.vmem [shape: f32[1,128], index: 7, kind: input, shape index: {}]
  %s8 = inlined_call_operand.vmem [shape: f32[128,1024], index: 8, kind: input, shape index: {}]
  %s9 = inlined_call_operand.hbm [shape: f32[64,1024], index: 9, kind: input, shape index: {}]
  %s10 = inlined_call_operand.hbm [shape: f32[1024,128], index: 10, kind: input, shape index: {}]
  %s11 = inlined_call_operand.vmem [shape: f32[8,128], index: 11, kind: output, shape index: {}]
  %s12 = sld [smem:[#allocation0]]
  $region92: #{corn_forward.1} parent=0
    _
  %s14 = ssub.s32 1, %s12
  %s15 = scalar_select 0, %s14, %s12
  $region1: #{corn_forward.1} parent=0
    #allocation6 [shape = 'u8[180224]{0}', space=vmem, size = 0x2c000, scoped, tag = 'input window, operand 3, single buffered']
    #allocation7 [shape = 's32[1]{0}', space=sflag, size = 0x4, scoped, tag = 'scoped memory for corn_forward.1']
    #allocation8 [shape = 'u8[262144]{0}', space=vmem, size = 0x40000, scoped, tag = 'input window, operand 4, single buffered']
    #allocation9 [shape = 's32[1]{0}', space=sflag, size = 0x4, scoped, tag = 'scoped memory for corn_forward.1']
    %16 = vsyncpa [#allocation7], 0
    %17 = vsyncpa [#allocation9], 0
    // Predicated region
    $region2: #{corn_forward.1} parent=1 // pred_check
      _
    $region3: #{corn_forward.1} parent=1 // pred_check_branch
      %19 = sbr.rel (0) target = $region5
    $region4: #{corn_forward.1} parent=1 // pred_region
      _
    $region5: #{corn_forward.1} parent=1 // pred_fallthru
      _
    // Predicated region
    $region6: #{corn_forward.1} parent=1 // pred_check
      _
    $region7: #{corn_forward.1} parent=1 // pred_check_branch
      %21 = sbr.rel (0) target = $region9
    $region8: #{corn_forward.1} parent=1 // pred_region
      _
    $region9: #{corn_forward.1} parent=1 // pred_fallthru
      _
    // Predicated region
    $region10: #{corn_forward.1} parent=1 // pred_check
      _
    $region11: #{corn_forward.1} parent=1 // pred_check_branch
      %23 = sbr.rel (0) target = $region13
    $region12: #{corn_forward.1} parent=1 // pred_region
      _
    $region13: #{corn_forward.1} parent=1 // pred_fallthru
      _
    // Predicated region
    $region14: #{corn_forward.1} parent=1 // pred_check
      _
    $region15: #{corn_forward.1} parent=1 // pred_check_branch
      %25 = sbr.rel (0) target = $region17
    $region16: #{corn_forward.1} parent=1 // pred_region
      %s27 = ssub.s32 5632, 5632
      %28 = vsyncadd [#allocation7], %s27
      %s29 = sshll.u32 [#allocation6], 4
      %s30 = int_to_ptr.vmem [resolvable:$true] %s29
      %35 = dma.hbm_to_vmem [thread:$0]  %s3, 5632, %s30, [#allocation7], 512, 512, 32
    $region17: #{corn_forward.1} parent=1 // pred_fallthru
      _
    // Predicated region
    $region18: #{corn_forward.1} parent=1 // pred_check
      _
    $region19: #{corn_forward.1} parent=1 // pred_check_branch
      %37 = sbr.rel (0) target = $region21
    $region20: #{corn_forward.1} parent=1 // pred_region
      %s39 = ssub.s32 8192, 8192
      %40 = vsyncadd [#allocation9], %s39
      %s41 = sshll.u32 [#allocation8], 4
      %s42 = int_to_ptr.vmem [resolvable:$true] %s41
      %47 = dma.hbm_to_vmem [thread:$0]  %s4, 8192, %s42, [#allocation9], 512, 512, 32
    $region21: #{corn_forward.1} parent=1 // pred_fallthru
      _
    // Predicated region
    $region22: #{corn_forward.1} parent=1 // pred_check
      _
    $region23: #{corn_forward.1} parent=1 // pred_check_branch
      %49 = sbr.rel (0) target = $region25
    $region24: #{corn_forward.1} parent=1 // pred_region
      _
    $region25: #{corn_forward.1} parent=1 // pred_fallthru
      _
    // Predicated region
    $region26: #{corn_forward.1} parent=1 // pred_check
      _
    $region27: #{corn_forward.1} parent=1 // pred_check_branch
      %51 = sbr.rel (0) target = $region29
    $region28: #{corn_forward.1} parent=1 // pred_region
      _
    $region29: #{corn_forward.1} parent=1 // pred_fallthru
      _
    // Predicated region
    $region30: #{corn_forward.1} parent=1 // pred_check
      _
    $region31: #{corn_forward.1} parent=1 // pred_check_branch
      %53 = sbr.rel (0) target = $region33
    $region32: #{corn_forward.1} parent=1 // pred_region
      _
    $region33: #{corn_forward.1} parent=1 // pred_fallthru
      _
    // Predicated region
    $region34: #{corn_forward.1} parent=1 // pred_check
      _
    $region35: #{corn_forward.1} parent=1 // pred_check_branch
      %55 = sbr.rel (0) target = $region37
    $region36: #{corn_forward.1} parent=1 // pred_region
      %56 = dma.done [#allocation7], 5632
    $region37: #{corn_forward.1} parent=1 // pred_fallthru
      _
    // Predicated region
    $region38: #{corn_forward.1} parent=1 // pred_check
      _
    $region39: #{corn_forward.1} parent=1 // pred_check_branch
      %58 = sbr.rel (0) target = $region41
    $region40: #{corn_forward.1} parent=1 // pred_region
      %59 = dma.done [#allocation9], 8192
    $region41: #{corn_forward.1} parent=1 // pred_fallthru
      _
    %p61 = scmp.lt.u32.totalorder 1024, 8
    %p62 = pneg %p61
    // Predicated region
    $region42: #{corn_forward.1} parent=1 // pred_check
      _
    $region43: #{corn_forward.1} parent=1 // pred_check_branch
      %64 = sbr.rel (%p61) target = $region45
    $region44: #{corn_forward.1} parent=1 // pred_region
      %s80 = sand.u32 1024, 7
      %p81 = scmp.eq.s32.totalorder %s80, 0
      // Predicated region
      $region57: #{corn_forward.1} parent=44 // pred_check
        %p82 = pneg %p81
      $region58: #{corn_forward.1} parent=44 // pred_check_branch
        %84 = sbr.rel (%p82) target = $region60
      $region59: #{corn_forward.1} parent=44 // pred_region
        loop: start=0, step=1, limit=1
        $region61: #{corn_forward.1} parent=59 // loop_pre_header
          _
        $region62: #{corn_forward.1} parent=59 // loop_header
          %s86 = sphi 0, %s90
          %p87 = scmp.ge.s32.totalorder %s86, 1
          %s91 = sphi %s8, %s8
          %s92 = sphi [#allocation2], [#allocation2]
        $region63: #{corn_forward.1} parent=59 // loop_header_branch
          %89 = sbr.rel (%p87) target = $region67
        $region64: #{corn_forward.1} parent=59 // loop_body
          %v93 = vld [vmem:[%s91] sm:$0xff]
          %94 = vst [vmem:[%s92] sm:$0xff] %v93
          %v95 = vld [vmem:[%s91 + $0x8] sm:$0xff]
          %96 = vst [vmem:[%s92 + $0x8] sm:$0xff] %v95
          %v97 = vld [vmem:[%s91 + $0x10] sm:$0xff]
          %98 = vst [vmem:[%s92 + $0x10] sm:$0xff] %v97
          %v99 = vld [vmem:[%s91 + $0x18] sm:$0xff]
          %100 = vst [vmem:[%s92 + $0x18] sm:$0xff] %v99
          %v101 = vld [vmem:[%s91 + $0x20] sm:$0xff]
          %102 = vst [vmem:[%s92 + $0x20] sm:$0xff] %v101
          %v103 = vld [vmem:[%s91 + $0x28] sm:$0xff]
          %104 = vst [vmem:[%s92 + $0x28] sm:$0xff] %v103
          %v105 = vld [vmem:[%s91 + $0x30] sm:$0xff]
          %106 = vst [vmem:[%s92 + $0x30] sm:$0xff] %v105
          %v107 = vld [vmem:[%s91 + $0x38] sm:$0xff]
          %108 = vst [vmem:[%s92 + $0x38] sm:$0xff] %v107
          %v109 = vld [vmem:[%s91 + $0x40] sm:$0xff]
          %110 = vst [vmem:[%s92 + $0x40] sm:$0xff] %v109
          %v111 = vld [vmem:[%s91 + $0x48] sm:$0xff]
          %112 = vst [vmem:[%s92 + $0x48] sm:$0xff] %v111
          %v113 = vld [vmem:[%s91 + $0x50] sm:$0xff]
          %114 = vst [vmem:[%s92 + $0x50] sm:$0xff] %v113
          %v115 = vld [vmem:[%s91 + $0x58] sm:$0xff]
          %116 = vst [vmem:[%s92 + $0x58] sm:$0xff] %v115
          %v117 = vld [vmem:[%s91 + $0x60] sm:$0xff]
          %118 = vst [vmem:[%s92 + $0x60] sm:$0xff] %v117
          %v119 = vld [vmem:[%s91 + $0x68] sm:$0xff]
          %120 = vst [vmem:[%s92 + $0x68] sm:$0xff] %v119
          %v121 = vld [vmem:[%s91 + $0x70] sm:$0xff]
          %122 = vst [vmem:[%s92 + $0x70] sm:$0xff] %v121
          %v123 = vld [vmem:[%s91 + $0x78] sm:$0xff]
          %124 = vst [vmem:[%s92 + $0x78] sm:$0xff] %v123
          %v125 = vld [vmem:[%s91 + $0x80] sm:$0xff]
          %126 = vst [vmem:[%s92 + $0x80] sm:$0xff] %v125
          %v127 = vld [vmem:[%s91 + $0x88] sm:$0xff]
          %128 = vst [vmem:[%s92 + $0x88] sm:$0xff] %v127
          %v129 = vld [vmem:[%s91 + $0x90] sm:$0xff]
          %130 = vst [vmem:[%s92 + $0x90] sm:$0xff] %v129
          %v131 = vld [vmem:[%s91 + $0x98] sm:$0xff]
          %132 = vst [vmem:[%s92 + $0x98] sm:$0xff] %v131
          %v133 = vld [vmem:[%s91 + $0xa0] sm:$0xff]
          %134 = vst [vmem:[%s92 + $0xa0] sm:$0xff] %v133
          %v135 = vld [vmem:[%s91 + $0xa8] sm:$0xff]
          %136 = vst [vmem:[%s92 + $0xa8] sm:$0xff] %v135
          %v137 = vld [vmem:[%s91 + $0xb0] sm:$0xff]
          %138 = vst [vmem:[%s92 + $0xb0] sm:$0xff] %v137
          %v139 = vld [vmem:[%s91 + $0xb8] sm:$0xff]
          %140 = vst [vmem:[%s92 + $0xb8] sm:$0xff] %v139
          %v141 = vld [vmem:[%s91 + $0xc0] sm:$0xff]
          %142 = vst [vmem:[%s92 + $0xc0] sm:$0xff] %v141
          %v143 = vld [vmem:[%s91 + $0xc8] sm:$0xff]
          %144 = vst [vmem:[%s92 + $0xc8] sm:$0xff] %v143
          %v145 = vld [vmem:[%s91 + $0xd0] sm:$0xff]
          %146 = vst [vmem:[%s92 + $0xd0] sm:$0xff] %v145
          %v147 = vld [vmem:[%s91 + $0xd8] sm:$0xff]
          %148 = vst [vmem:[%s92 + $0xd8] sm:$0xff] %v147
          %v149 = vld [vmem:[%s91 + $0xe0] sm:$0xff]
          %150 = vst [vmem:[%s92 + $0xe0] sm:$0xff] %v149
          %v151 = vld [vmem:[%s91 + $0xe8] sm:$0xff]
          %152 = vst [vmem:[%s92 + $0xe8] sm:$0xff] %v151
          %v153 = vld [vmem:[%s91 + $0xf0] sm:$0xff]
          %154 = vst [vmem:[%s92 + $0xf0] sm:$0xff] %v153
          %v155 = vld [vmem:[%s91 + $0xf8] sm:$0xff]
          %156 = vst [vmem:[%s92 + $0xf8] sm:$0xff] %v155
          %v157 = vld [vmem:[%s91 + $0x100] sm:$0xff]
          %158 = vst [vmem:[%s92 + $0x100] sm:$0xff] %v157
          %v159 = vld [vmem:[%s91 + $0x108] sm:$0xff]
          %160 = vst [vmem:[%s92 + $0x108] sm:$0xff] %v159
          %v161 = vld [vmem:[%s91 + $0x110] sm:$0xff]
          %162 = vst [vmem:[%s92 + $0x110] sm:$0xff] %v161
          %v163 = vld [vmem:[%s91 + $0x118] sm:$0xff]
          %164 = vst [vmem:[%s92 + $0x118] sm:$0xff] %v163
          %v165 = vld [vmem:[%s91 + $0x120] sm:$0xff]
          %166 = vst [vmem:[%s92 + $0x120] sm:$0xff] %v165
          %v167 = vld [vmem:[%s91 + $0x128] sm:$0xff]
          %168 = vst [vmem:[%s92 + $0x128] sm:$0xff] %v167
          %v169 = vld [vmem:[%s91 + $0x130] sm:$0xff]
          %170 = vst [vmem:[%s92 + $0x130] sm:$0xff] %v169
          %v171 = vld [vmem:[%s91 + $0x138] sm:$0xff]
          %172 = vst [vmem:[%s92 + $0x138] sm:$0xff] %v171
          %v173 = vld [vmem:[%s91 + $0x140] sm:$0xff]
          %174 = vst [vmem:[%s92 + $0x140] sm:$0xff] %v173
          %v175 = vld [vmem:[%s91 + $0x148] sm:$0xff]
          %176 = vst [vmem:[%s92 + $0x148] sm:$0xff] %v175
          %v177 = vld [vmem:[%s91 + $0x150] sm:$0xff]
          %178 = vst [vmem:[%s92 + $0x150] sm:$0xff] %v177
          %v179 = vld [vmem:[%s91 + $0x158] sm:$0xff]
          %180 = vst [vmem:[%s92 + $0x158] sm:$0xff] %v179
          %v181 = vld [vmem:[%s91 + $0x160] sm:$0xff]
          %182 = vst [vmem:[%s92 + $0x160] sm:$0xff] %v181
          %v183 = vld [vmem:[%s91 + $0x168] sm:$0xff]
          %184 = vst [vmem:[%s92 + $0x168] sm:$0xff] %v183
          %v185 = vld [vmem:[%s91 + $0x170] sm:$0xff]
          %186 = vst [vmem:[%s92 + $0x170] sm:$0xff] %v185
          %v187 = vld [vmem:[%s91 + $0x178] sm:$0xff]
          %188 = vst [vmem:[%s92 + $0x178] sm:$0xff] %v187
          %v189 = vld [vmem:[%s91 + $0x180] sm:$0xff]
          %190 = vst [vmem:[%s92 + $0x180] sm:$0xff] %v189
          %v191 = vld [vmem:[%s91 + $0x188] sm:$0xff]
          %192 = vst [vmem:[%s92 + $0x188] sm:$0xff] %v191
          %v193 = vld [vmem:[%s91 + $0x190] sm:$0xff]
          %194 = vst [vmem:[%s92 + $0x190] sm:$0xff] %v193
          %v195 = vld [vmem:[%s91 + $0x198] sm:$0xff]
          %196 = vst [vmem:[%s92 + $0x198] sm:$0xff] %v195
          %v197 = vld [vmem:[%s91 + $0x1a0] sm:$0xff]
          %198 = vst [vmem:[%s92 + $0x1a0] sm:$0xff] %v197
          %v199 = vld [vmem:[%s91 + $0x1a8] sm:$0xff]
          %200 = vst [vmem:[%s92 + $0x1a8] sm:$0xff] %v199
          %v201 = vld [vmem:[%s91 + $0x1b0] sm:$0xff]
          %202 = vst [vmem:[%s92 + $0x1b0] sm:$0xff] %v201
          %v203 = vld [vmem:[%s91 + $0x1b8] sm:$0xff]
          %204 = vst [vmem:[%s92 + $0x1b8] sm:$0xff] %v203
          %v205 = vld [vmem:[%s91 + $0x1c0] sm:$0xff]
          %206 = vst [vmem:[%s92 + $0x1c0] sm:$0xff] %v205
          %v207 = vld [vmem:[%s91 + $0x1c8] sm:$0xff]
          %208 = vst [vmem:[%s92 + $0x1c8] sm:$0xff] %v207
          %v209 = vld [vmem:[%s91 + $0x1d0] sm:$0xff]
          %210 = vst [vmem:[%s92 + $0x1d0] sm:$0xff] %v209
          %v211 = vld [vmem:[%s91 + $0x1d8] sm:$0xff]
          %212 = vst [vmem:[%s92 + $0x1d8] sm:$0xff] %v211
          %v213 = vld [vmem:[%s91 + $0x1e0] sm:$0xff]
          %214 = vst [vmem:[%s92 + $0x1e0] sm:$0xff] %v213
          %v215 = vld [vmem:[%s91 + $0x1e8] sm:$0xff]
          %216 = vst [vmem:[%s92 + $0x1e8] sm:$0xff] %v215
          %v217 = vld [vmem:[%s91 + $0x1f0] sm:$0xff]
          %218 = vst [vmem:[%s92 + $0x1f0] sm:$0xff] %v217
          %v219 = vld [vmem:[%s91 + $0x1f8] sm:$0xff]
          %220 = vst [vmem:[%s92 + $0x1f8] sm:$0xff] %v219
          %v221 = vld [vmem:[%s91 + $0x200] sm:$0xff]
          %222 = vst [vmem:[%s92 + $0x200] sm:$0xff] %v221
          %v223 = vld [vmem:[%s91 + $0x208] sm:$0xff]
          %224 = vst [vmem:[%s92 + $0x208] sm:$0xff] %v223
          %v225 = vld [vmem:[%s91 + $0x210] sm:$0xff]
          %226 = vst [vmem:[%s92 + $0x210] sm:$0xff] %v225
          %v227 = vld [vmem:[%s91 + $0x218] sm:$0xff]
          %228 = vst [vmem:[%s92 + $0x218] sm:$0xff] %v227
          %v229 = vld [vmem:[%s91 + $0x220] sm:$0xff]
          %230 = vst [vmem:[%s92 + $0x220] sm:$0xff] %v229
          %v231 = vld [vmem:[%s91 + $0x228] sm:$0xff]
          %232 = vst [vmem:[%s92 + $0x228] sm:$0xff] %v231
          %v233 = vld [vmem:[%s91 + $0x230] sm:$0xff]
          %234 = vst [vmem:[%s92 + $0x230] sm:$0xff] %v233
          %v235 = vld [vmem:[%s91 + $0x238] sm:$0xff]
          %236 = vst [vmem:[%s92 + $0x238] sm:$0xff] %v235
          %v237 = vld [vmem:[%s91 + $0x240] sm:$0xff]
          %238 = vst [vmem:[%s92 + $0x240] sm:$0xff] %v237
          %v239 = vld [vmem:[%s91 + $0x248] sm:$0xff]
          %240 = vst [vmem:[%s92 + $0x248] sm:$0xff] %v239
          %v241 = vld [vmem:[%s91 + $0x250] sm:$0xff]
          %242 = vst [vmem:[%s92 + $0x250] sm:$0xff] %v241
          %v243 = vld [vmem:[%s91 + $0x258] sm:$0xff]
          %244 = vst [vmem:[%s92 + $0x258] sm:$0xff] %v243
          %v245 = vld [vmem:[%s91 + $0x260] sm:$0xff]
          %246 = vst [vmem:[%s92 + $0x260] sm:$0xff] %v245
          %v247 = vld [vmem:[%s91 + $0x268] sm:$0xff]
          %248 = vst [vmem:[%s92 + $0x268] sm:$0xff] %v247
          %v249 = vld [vmem:[%s91 + $0x270] sm:$0xff]
          %250 = vst [vmem:[%s92 + $0x270] sm:$0xff] %v249
          %v251 = vld [vmem:[%s91 + $0x278] sm:$0xff]
          %252 = vst [vmem:[%s92 + $0x278] sm:$0xff] %v251
          %v253 = vld [vmem:[%s91 + $0x280] sm:$0xff]
          %254 = vst [vmem:[%s92 + $0x280] sm:$0xff] %v253
          %v255 = vld [vmem:[%s91 + $0x288] sm:$0xff]
          %256 = vst [vmem:[%s92 + $0x288] sm:$0xff] %v255
          %v257 = vld [vmem:[%s91 + $0x290] sm:$0xff]
          %258 = vst [vmem:[%s92 + $0x290] sm:$0xff] %v257
          %v259 = vld [vmem:[%s91 + $0x298] sm:$0xff]
          %260 = vst [vmem:[%s92 + $0x298] sm:$0xff] %v259
          %v261 = vld [vmem:[%s91 + $0x2a0] sm:$0xff]
          %262 = vst [vmem:[%s92 + $0x2a0] sm:$0xff] %v261
          %v263 = vld [vmem:[%s91 + $0x2a8] sm:$0xff]
          %264 = vst [vmem:[%s92 + $0x2a8] sm:$0xff] %v263
          %v265 = vld [vmem:[%s91 + $0x2b0] sm:$0xff]
          %266 = vst [vmem:[%s92 + $0x2b0] sm:$0xff] %v265
          %v267 = vld [vmem:[%s91 + $0x2b8] sm:$0xff]
          %268 = vst [vmem:[%s92 + $0x2b8] sm:$0xff] %v267
          %v269 = vld [vmem:[%s91 + $0x2c0] sm:$0xff]
          %270 = vst [vmem:[%s92 + $0x2c0] sm:$0xff] %v269
          %v271 = vld [vmem:[%s91 + $0x2c8] sm:$0xff]
          %272 = vst [vmem:[%s92 + $0x2c8] sm:$0xff] %v271
          %v273 = vld [vmem:[%s91 + $0x2d0] sm:$0xff]
          %274 = vst [vmem:[%s92 + $0x2d0] sm:$0xff] %v273
          %v275 = vld [vmem:[%s91 + $0x2d8] sm:$0xff]
          %276 = vst [vmem:[%s92 + $0x2d8] sm:$0xff] %v275
          %v277 = vld [vmem:[%s91 + $0x2e0] sm:$0xff]
          %278 = vst [vmem:[%s92 + $0x2e0] sm:$0xff] %v277
          %v279 = vld [vmem:[%s91 + $0x2e8] sm:$0xff]
          %280 = vst [vmem:[%s92 + $0x2e8] sm:$0xff] %v279
          %v281 = vld [vmem:[%s91 + $0x2f0] sm:$0xff]
          %282 = vst [vmem:[%s92 + $0x2f0] sm:$0xff] %v281
          %v283 = vld [vmem:[%s91 + $0x2f8] sm:$0xff]
          %284 = vst [vmem:[%s92 + $0x2f8] sm:$0xff] %v283
          %v285 = vld [vmem:[%s91 + $0x300] sm:$0xff]
          %286 = vst [vmem:[%s92 + $0x300] sm:$0xff] %v285
          %v287 = vld [vmem:[%s91 + $0x308] sm:$0xff]
          %288 = vst [vmem:[%s92 + $0x308] sm:$0xff] %v287
          %v289 = vld [vmem:[%s91 + $0x310] sm:$0xff]
          %290 = vst [vmem:[%s92 + $0x310] sm:$0xff] %v289
          %v291 = vld [vmem:[%s91 + $0x318] sm:$0xff]
          %292 = vst [vmem:[%s92 + $0x318] sm:$0xff] %v291
          %v293 = vld [vmem:[%s91 + $0x320] sm:$0xff]
          %294 = vst [vmem:[%s92 + $0x320] sm:$0xff] %v293
          %v295 = vld [vmem:[%s91 + $0x328] sm:$0xff]
          %296 = vst [vmem:[%s92 + $0x328] sm:$0xff] %v295
          %v297 = vld [vmem:[%s91 + $0x330] sm:$0xff]
          %298 = vst [vmem:[%s92 + $0x330] sm:$0xff] %v297
          %v299 = vld [vmem:[%s91 + $0x338] sm:$0xff]
          %300 = vst [vmem:[%s92 + $0x338] sm:$0xff] %v299
          %v301 = vld [vmem:[%s91 + $0x340] sm:$0xff]
          %302 = vst [vmem:[%s92 + $0x340] sm:$0xff] %v301
          %v303 = vld [vmem:[%s91 + $0x348] sm:$0xff]
          %304 = vst [vmem:[%s92 + $0x348] sm:$0xff] %v303
          %v305 = vld [vmem:[%s91 + $0x350] sm:$0xff]
          %306 = vst [vmem:[%s92 + $0x350] sm:$0xff] %v305
          %v307 = vld [vmem:[%s91 + $0x358] sm:$0xff]
          %308 = vst [vmem:[%s92 + $0x358] sm:$0xff] %v307
          %v309 = vld [vmem:[%s91 + $0x360] sm:$0xff]
          %310 = vst [vmem:[%s92 + $0x360] sm:$0xff] %v309
          %v311 = vld [vmem:[%s91 + $0x368] sm:$0xff]
          %312 = vst [vmem:[%s92 + $0x368] sm:$0xff] %v311
          %v313 = vld [vmem:[%s91 + $0x370] sm:$0xff]
          %314 = vst [vmem:[%s92 + $0x370] sm:$0xff] %v313
          %v315 = vld [vmem:[%s91 + $0x378] sm:$0xff]
          %316 = vst [vmem:[%s92 + $0x378] sm:$0xff] %v315
          %v317 = vld [vmem:[%s91 + $0x380] sm:$0xff]
          %318 = vst [vmem:[%s92 + $0x380] sm:$0xff] %v317
          %v319 = vld [vmem:[%s91 + $0x388] sm:$0xff]
          %320 = vst [vmem:[%s92 + $0x388] sm:$0xff] %v319
          %v321 = vld [vmem:[%s91 + $0x390] sm:$0xff]
          %322 = vst [vmem:[%s92 + $0x390] sm:$0xff] %v321
          %v323 = vld [vmem:[%s91 + $0x398] sm:$0xff]
          %324 = vst [vmem:[%s92 + $0x398] sm:$0xff] %v323
          %v325 = vld [vmem:[%s91 + $0x3a0] sm:$0xff]
          %326 = vst [vmem:[%s92 + $0x3a0] sm:$0xff] %v325
          %v327 = vld [vmem:[%s91 + $0x3a8] sm:$0xff]
          %328 = vst [vmem:[%s92 + $0x3a8] sm:$0xff] %v327
          %v329 = vld [vmem:[%s91 + $0x3b0] sm:$0xff]
          %330 = vst [vmem:[%s92 + $0x3b0] sm:$0xff] %v329
          %v331 = vld [vmem:[%s91 + $0x3b8] sm:$0xff]
          %332 = vst [vmem:[%s92 + $0x3b8] sm:$0xff] %v331
          %v333 = vld [vmem:[%s91 + $0x3c0] sm:$0xff]
          %334 = vst [vmem:[%s92 + $0x3c0] sm:$0xff] %v333
          %v335 = vld [vmem:[%s91 + $0x3c8] sm:$0xff]
          %336 = vst [vmem:[%s92 + $0x3c8] sm:$0xff] %v335
          %v337 = vld [vmem:[%s91 + $0x3d0] sm:$0xff]
          %338 = vst [vmem:[%s92 + $0x3d0] sm:$0xff] %v337
          %v339 = vld [vmem:[%s91 + $0x3d8] sm:$0xff]
          %340 = vst [vmem:[%s92 + $0x3d8] sm:$0xff] %v339
          %v341 = vld [vmem:[%s91 + $0x3e0] sm:$0xff]
          %342 = vst [vmem:[%s92 + $0x3e0] sm:$0xff] %v341
          %v343 = vld [vmem:[%s91 + $0x3e8] sm:$0xff]
          %344 = vst [vmem:[%s92 + $0x3e8] sm:$0xff] %v343
          %v345 = vld [vmem:[%s91 + $0x3f0] sm:$0xff]
          %346 = vst [vmem:[%s92 + $0x3f0] sm:$0xff] %v345
          %v347 = vld [vmem:[%s91 + $0x3f8] sm:$0xff]
          %348 = vst [vmem:[%s92 + $0x3f8] sm:$0xff] %v347
        $region65: #{corn_forward.1} parent=59 // loop_footer
          %s90 = sadd.s32 1, %s86
        $region66: #{corn_forward.1} parent=59 // loop_footer_branch
          %85 = sbr.rel target = $region62
        $region67: #{corn_forward.1} parent=59 // loop_exit
          _
      $region60: #{corn_forward.1} parent=44 // pred_fallthru
        _
      %p349 = pneg %p81
      // Predicated region
      $region68: #{corn_forward.1} parent=44 // pred_check
        _
      $region69: #{corn_forward.1} parent=44 // pred_check_branch
        %351 = sbr.rel (%p81) target = $region71
      $region70: #{corn_forward.1} parent=44 // pred_region
        %s352 = sand.u32 1024, 7
      $region71: #{corn_forward.1} parent=44 // pred_fallthru
        _
    $region45: #{corn_forward.1} parent=1 // pred_fallthru
      _
    // Predicated region
    $region46: #{corn_forward.1} parent=1 // pred_check
      %p65 = pneg %p61
    $region47: #{corn_forward.1} parent=1 // pred_check_branch
      %67 = sbr.rel (%p65) target = $region49
    $region48: #{corn_forward.1} parent=1 // pred_region
      %s68 = sshll.u32 1, 1024
      %s69 = ssub.s32 %s68, 1
      loop: start=0, step=1, limit=1
      $region50: #{corn_forward.1} parent=48 // loop_pre_header
        _
      $region51: #{corn_forward.1} parent=48 // loop_header
        %s71 = sphi 0, %s75
        %p72 = scmp.ge.s32.totalorder %s71, 1
        %s76 = sphi %s8, %s8
        %s77 = sphi [#allocation2], [#allocation2]
      $region52: #{corn_forward.1} parent=48 // loop_header_branch
        %74 = sbr.rel (%p72) target = $region56
      $region53: #{corn_forward.1} parent=48 // loop_body
        %v78 = vld [vmem:[%s76] sm:%s69]
        %79 = vst [vmem:[%s77] sm:%s69] %v78
      $region54: #{corn_forward.1} parent=48 // loop_footer
        %s75 = sadd.s32 1, %s71
      $region55: #{corn_forward.1} parent=48 // loop_footer_branch
        %70 = sbr.rel target = $region51
      $region56: #{corn_forward.1} parent=48 // loop_exit
        _
    $region49: #{corn_forward.1} parent=1 // pred_fallthru
      _
    // Predicated region
    $region72: #{corn_forward.1} parent=1 // pred_check
      _
    $region73: #{corn_forward.1} parent=1 // pred_check_branch
      %355 = sbr.rel (0) target = $region75
    $region74: #{corn_forward.1} parent=1 // pred_region
      %356 = vsyncadd [#allocation5], 16384
    $region75: #{corn_forward.1} parent=1 // pred_fallthru
      _
    %s357 = scalar_lea.sflag [#allocation5], 1
    // Predicated region
    $region76: #{corn_forward.1} parent=1 // pred_check
      _
    $region77: #{corn_forward.1} parent=1 // pred_check_branch
      %359 = sbr.rel target = $region79
    $region78: #{corn_forward.1} parent=1 // pred_region
      %360 = sst [smem:[#allocation13]] [#allocation12]
      %361 = sst [smem:[#allocation14]] [#allocation11]
    $region79: #{corn_forward.1} parent=1 // pred_fallthru
      _
    %363 = shalt.err (0)
    %s365 = sshll.u32 [#allocation3], 4
    %s366 = int_to_ptr.vmem [resolvable:$true] %s365
    %368 = dma.hbm_to_vmem [thread:$0]  %s9, 8192, %s366, %s357
    %s369 = scalar_lea.sflag [#allocation5], 2
    // Predicated region
    $region80: #{corn_forward.1} parent=1 // pred_check
      _
    $region81: #{corn_forward.1} parent=1 // pred_check_branch
      %371 = sbr.rel target = $region83
    $region82: #{corn_forward.1} parent=1 // pred_region
      %372 = sst [smem:[#allocation13]] [#allocation16]
      %373 = sst [smem:[#allocation14]] [#allocation15]
    $region83: #{corn_forward.1} parent=1 // pred_fallthru
      _
    %375 = shalt.err (0)
    %s377 = sshll.u32 [#allocation4], 4
    %s378 = int_to_ptr.vmem [resolvable:$true] %s377
    %380 = dma.hbm_to_vmem [thread:$0]  %s10, 16384, %s378, %s369
    %v381 = vld [vmem:[%s0] sm:$0xff]
    %v382 = vld [vmem:[%s0 + $0x8] sm:$0xff]
    %v383 = vld [vmem:[%s0 + $0x10] sm:$0xff]
    %v384 = vld [vmem:[%s0 + $0x18] sm:$0xff]
    %v385 = vld [vmem:[%s0 + $0x20] sm:$0xff]
    %v386 = vld [vmem:[%s0 + $0x28] sm:$0xff]
    %v387 = vld [vmem:[%s0 + $0x30] sm:$0xff]
    %v388 = vld [vmem:[%s0 + $0x38] sm:$0xff]
    %v389 = vld [vmem:[#allocation6] sm:$0xff]
    %v390 = vld [vmem:[#allocation6 + $0x8] sm:$0xff]
    %v391 = vld [vmem:[#allocation6 + $0x10] sm:$0xff]
    %v392 = vld [vmem:[#allocation6 + $0x18] sm:$0xff]
    %v393 = vld [vmem:[#allocation6 + $0x20] sm:$0xff]
    %v394 = vld [vmem:[#allocation6 + $0x28] sm:$0xff]
    %v395 = vld [vmem:[#allocation6 + $0x30] sm:$0xff]
    %v396 = vld [vmem:[#allocation6 + $0x38] sm:$0xff]
    %v397 = vld [vmem:[#allocation6 + $0x40] sm:$0xff]
    %v398 = vld [vmem:[#allocation6 + $0x48] sm:$0xff]
    %v399 = vld [vmem:[#allocation6 + $0x50] sm:$0xff]
    %v400 = vld [vmem:[#allocation6 + $0x58] sm:$0xff]
    %v401 = vld [vmem:[#allocation6 + $0x60] sm:$0xff]
    %v402 = vld [vmem:[#allocation6 + $0x68] sm:$0xff]
    %v403 = vld [vmem:[#allocation6 + $0x70] sm:$0xff]
    %v404 = vld [vmem:[#allocation6 + $0x78] sm:$0xff]
    %v405 = vld [vmem:[#allocation6 + $0x80] sm:$0xff]
    %v406 = vld [vmem:[#allocation6 + $0x88] sm:$0xff]
    %v407 = vld [vmem:[#allocation6 + $0x90] sm:$0xff]
    %v408 = vld [vmem:[#allocation6 + $0x98] sm:$0xff]
    %v409 = vld [vmem:[#allocation6 + $0xa0] sm:$0xff]
    %v410 = vld [vmem:[#allocation6 + $0xa8] sm:$0xff]
    %v411 = vld [vmem:[#allocation6 + $0xb0] sm:$0xff]
    %v412 = vld [vmem:[#allocation6 + $0xb8] sm:$0xff]
    %v413 = vld [vmem:[#allocation6 + $0xc0] sm:$0xff]
    %v414 = vld [vmem:[#allocation6 + $0xc8] sm:$0xff]
    %v415 = vld [vmem:[#allocation6 + $0xd0] sm:$0xff]
    %v416 = vld [vmem:[#allocation6 + $0xd8] sm:$0xff]
    %v417 = vld [vmem:[#allocation6 + $0xe0] sm:$0xff]
    %v418 = vld [vmem:[#allocation6 + $0xe8] sm:$0xff]
    %v419 = vld [vmem:[#allocation6 + $0xf0] sm:$0xff]
    %v420 = vld [vmem:[#allocation6 + $0xf8] sm:$0xff]
    %v421 = vld [vmem:[#allocation6 + $0x100] sm:$0xff]
    %v422 = vld [vmem:[#allocation6 + $0x108] sm:$0xff]
    %v423 = vld [vmem:[#allocation6 + $0x110] sm:$0xff]
    %v424 = vld [vmem:[#allocation6 + $0x118] sm:$0xff]
    %v425 = vld [vmem:[#allocation6 + $0x120] sm:$0xff]
    %v426 = vld [vmem:[#allocation6 + $0x128] sm:$0xff]
    %v427 = vld [vmem:[#allocation6 + $0x130] sm:$0xff]
    %v428 = vld [vmem:[#allocation6 + $0x138] sm:$0xff]
    %v429 = vld [vmem:[#allocation6 + $0x140] sm:$0x1]
    %v430 = vld [vmem:[#allocation6 + $0x148] sm:$0x1]
    %v431 = vld [vmem:[#allocation6 + $0x150] sm:$0x1]
    %v432 = vld [vmem:[#allocation6 + $0x158] sm:$0x1]
    %vm433 = vcmask 662528
    %v435 = vsel %vm433, %v381, 0
    %v438 = vsel %vm433, %v382, 0
    %v441 = vsel %vm433, %v383, 0
    %v444 = vsel %vm433, %v384, 0
    %v447 = vsel %vm433, %v385, 0
    %v450 = vsel %vm433, %v386, 0
    %v453 = vsel %vm433, %v387, 0
    %v456 = vsel %vm433, %v388, 0
    %vm458 = vcmask 1040384
    %v460 = vsel %vm458, %v429, 0
    %v463 = vsel %vm458, %v430, 0
    %v466 = vsel %vm458, %v431, 0
    %v469 = vsel %vm458, %v432, 0
    %471 = vmatprep.subr.mxu0 0.0
    %472 = vmatpush1.msra.mxu0 0.0
    %473 = vmatprep.subr.mxu0 0.0
    %474 = vmatpush1.msra.mxu0 0.0
    %475 = vmatprep.subr.mxu0 0.0
    %476 = vmatpush1.msra.mxu0 0.0
    %477 = vmatprep.subr.mxu0 0.0
    %478 = vmatpush1.msra.mxu0 0.0
    %479 = vmatprep.subr.mxu0 0.0
    %480 = vmatpush1.msra.mxu0 0.0
    %481 = vmatprep.subr.mxu0 %v463
    %482 = vmatpush1.msra.mxu0 %v460
    %483 = vmatprep.subr.mxu0 %v426
    %484 = vmatpush1.msra.mxu0 %v425
    %485 = vmatprep.subr.mxu0 %v422
    %486 = vmatpush1.msra.mxu0 %v421
    %487 = vmatprep.subr.mxu0 %v418
    %488 = vmatpush1.msra.mxu0 %v417
    %489 = vmatprep.subr.mxu0 %v414
    %490 = vmatpush1.msra.mxu0 %v413
    %491 = vmatprep.subr.mxu0 %v410
    %492 = vmatpush1.msra.mxu0 %v409
    %493 = vmatprep.subr.mxu0 %v406
    %494 = vmatpush1.msra.mxu0 %v405
    %495 = vmatprep.subr.mxu0 %v402
    %496 = vmatpush1.msra.mxu0 %v401
    %497 = vmatprep.subr.mxu0 %v398
    %498 = vmatpush1.msra.mxu0 %v397
    %499 = vmatprep.subr.mxu0 %v394
    %500 = vmatpush1.msra.mxu0 %v393
    %501 = vmatprep.subr.mxu0 %v390
    %502 = vmatpush1.msra.mxu0 %v389
    %503 = vmatprep.subr.mxu0 0.0
    %504 = vmatpush2.msra.mxu0 0.0
    %505 = vmatprep.subr.mxu0 0.0
    %506 = vmatpush2.msra.mxu0 0.0
    %507 = vmatprep.subr.mxu0 0.0
    %508 = vmatpush2.msra.mxu0 0.0
    %509 = vmatprep.subr.mxu0 0.0
    %510 = vmatpush2.msra.mxu0 0.0
    %511 = vmatprep.subr.mxu0 0.0
    %512 = vmatpush2.msra.mxu0 0.0
    %513 = vmatprep.subr.mxu0 0.0
    %514 = vmatpush2.msra.mxu0 0.0
    %515 = vmatprep.subr.mxu0 0.0
    %516 = vmatpush2.msra.mxu0 0.0
    %517 = vmatprep.subr.mxu0 0.0
    %518 = vmatpush2.msra.mxu0 0.0
    %519 = vmatprep.subr.mxu0 0.0
    %520 = vmatpush2.msra.mxu0 0.0
    %521 = vmatprep.subr.mxu0 0.0
    %522 = vmatpush2.msra.mxu0 0.0
    %523 = vmatprep.subr.mxu0 0.0
    %524 = vmatpush2.msra.mxu0 0.0
    %525 = vmatprep.subr.mxu0 0.0
    %526 = vmatpush2.msra.mxu0 0.0
    %527 = vmatprep.subr.mxu0 0.0
    %528 = vmatpush2.msra.mxu0 0.0
    %529 = vmatprep.subr.mxu0 0.0
    %530 = vmatpush2.msra.mxu0 0.0
    %531 = vmatprep.subr.mxu0 0.0
    %532 = vmatpush2.msra.mxu0 0.0
    %533 = vmatprep.subr.mxu0 0.0
    %534 = vmatpush2.msra.mxu0 0.0
    %535 = vmatprep.mubr.f32.mxu0 0.0
    %536 = vmatmul.mubr.f32.gmra.mxu0 %v435
    %v537 = vpop.f32.mrf.mxu0
    %v538 = vadd.f32 0.0, %v537
    %v539 = vpop.f32.mrf.mxu0
    %v540 = vadd.f32 0.0, %v539
    %541 = vmatprep.mubr.f32.mxu0 0.0
    %542 = vmatmul.mubr.f32.gmra.mxu0 %v438
    %v543 = vpop.f32.mrf.mxu0
    %v544 = vadd.f32 0.0, %v543
    %v545 = vpop.f32.mrf.mxu0
    %v546 = vadd.f32 0.0, %v545
    %547 = vmatprep.mubr.f32.mxu0 0.0
    %548 = vmatmul.mubr.f32.gmra.mxu0 %v441
    %v549 = vpop.f32.mrf.mxu0
    %v550 = vadd.f32 0.0, %v549
    %v551 = vpop.f32.mrf.mxu0
    %v552 = vadd.f32 0.0, %v551
    %553 = vmatprep.mubr.f32.mxu0 0.0
    %554 = vmatmul.mubr.f32.gmra.mxu0 %v444
    %v555 = vpop.f32.mrf.mxu0
    %v556 = vadd.f32 0.0, %v555
    %v557 = vpop.f32.mrf.mxu0
    %v558 = vadd.f32 0.0, %v557
    %559 = vmatprep.mubr.f32.mxu0 0.0
    %560 = vmatmul.mubr.f32.gmra.mxu0 %v447
    %v561 = vpop.f32.mrf.mxu0
    %v562 = vadd.f32 0.0, %v561
    %v563 = vpop.f32.mrf.mxu0
    %v564 = vadd.f32 0.0, %v563
    %565 = vmatprep.mubr.f32.mxu0 0.0
    %566 = vmatmul.mubr.f32.gmra.mxu0 %v450
    %v567 = vpop.f32.mrf.mxu0
    %v568 = vadd.f32 0.0, %v567
    %v569 = vpop.f32.mrf.mxu0
    %v570 = vadd.f32 0.0, %v569
    %571 = vmatprep.mubr.f32.mxu0 0.0
    %572 = vmatmul.mubr.f32.gmra.mxu0 %v453
    %v573 = vpop.f32.mrf.mxu0
    %v574 = vadd.f32 0.0, %v573
    %v575 = vpop.f32.mrf.mxu0
    %v576 = vadd.f32 0.0, %v575
    %577 = vmatprep.mubr.f32.mxu0 0.0
    %578 = vmatmul.mubr.f32.gmra.mxu0 %v456
    %v579 = vpop.f32.mrf.mxu0
    %v580 = vadd.f32 0.0, %v579
    %v581 = vpop.f32.mrf.mxu0
    %v582 = vadd.f32 0.0, %v581
    %583 = vdwg.mxu0
    %584 = vmatprep.subr.mxu0 0.0
    %585 = vmatpush1.msra.mxu0 0.0
    %586 = vmatprep.subr.mxu0 0.0
    %587 = vmatpush1.msra.mxu0 0.0
    %588 = vmatprep.subr.mxu0 0.0
    %589 = vmatpush1.msra.mxu0 0.0
    %590 = vmatprep.subr.mxu0 0.0
    %591 = vmatpush1.msra.mxu0 0.0
    %592 = vmatprep.subr.mxu0 0.0
    %593 = vmatpush1.msra.mxu0 0.0
    %594 = vmatprep.subr.mxu0 %v469
    %595 = vmatpush1.msra.mxu0 %v466
    %596 = vmatprep.subr.mxu0 %v428
    %597 = vmatpush1.msra.mxu0 %v427
    %598 = vmatprep.subr.mxu0 %v424
    %599 = vmatpush1.msra.mxu0 %v423
    %600 = vmatprep.subr.mxu0 %v420
    %601 = vmatpush1.msra.mxu0 %v419
    %602 = vmatprep.subr.mxu0 %v416
    %603 = vmatpush1.msra.mxu0 %v415
    %604 = vmatprep.subr.mxu0 %v412
    %605 = vmatpush1.msra.mxu0 %v411
    %606 = vmatprep.subr.mxu0 %v408
    %607 = vmatpush1.msra.mxu0 %v407
    %608 = vmatprep.subr.mxu0 %v404
    %609 = vmatpush1.msra.mxu0 %v403
    %610 = vmatprep.subr.mxu0 %v400
    %611 = vmatpush1.msra.mxu0 %v399
    %612 = vmatprep.subr.mxu0 %v396
    %613 = vmatpush1.msra.mxu0 %v395
    %614 = vmatprep.subr.mxu0 %v392
    %615 = vmatpush1.msra.mxu0 %v391
    %616 = vmatprep.subr.mxu0 0.0
    %617 = vmatpush2.msra.mxu0 0.0
    %618 = vmatprep.subr.mxu0 0.0
    %619 = vmatpush2.msra.mxu0 0.0
    %620 = vmatprep.subr.mxu0 0.0
    %621 = vmatpush2.msra.mxu0 0.0
    %622 = vmatprep.subr.mxu0 0.0
    %623 = vmatpush2.msra.mxu0 0.0
    %624 = vmatprep.subr.mxu0 0.0
    %625 = vmatpush2.msra.mxu0 0.0
    %626 = vmatprep.subr.mxu0 0.0
    %627 = vmatpush2.msra.mxu0 0.0
    %628 = vmatprep.subr.mxu0 0.0
    %629 = vmatpush2.msra.mxu0 0.0
    %630 = vmatprep.subr.mxu0 0.0
    %631 = vmatpush2.msra.mxu0 0.0
    %632 = vmatprep.subr.mxu0 0.0
    %633 = vmatpush2.msra.mxu0 0.0
    %634 = vmatprep.subr.mxu0 0.0
    %635 = vmatpush2.msra.mxu0 0.0
    %636 = vmatprep.subr.mxu0 0.0
    %637 = vmatpush2.msra.mxu0 0.0
    %638 = vmatprep.subr.mxu0 0.0
    %639 = vmatpush2.msra.mxu0 0.0
    %640 = vmatprep.subr.mxu0 0.0
    %641 = vmatpush2.msra.mxu0 0.0
    %642 = vmatprep.subr.mxu0 0.0
    %643 = vmatpush2.msra.mxu0 0.0
    %644 = vmatprep.subr.mxu0 0.0
    %645 = vmatpush2.msra.mxu0 0.0
    %646 = vmatprep.subr.mxu0 0.0
    %647 = vmatpush2.msra.mxu0 0.0
    %648 = vmatprep.mubr.f32.mxu0 0.0
    %649 = vmatmul.mubr.f32.gmra.mxu0 %v435
    %v650 = vpop.f32.mrf.mxu0
    %v651 = vadd.f32 0.0, %v650
    %v652 = vpop.f32.mrf.mxu0
    %v653 = vadd.f32 0.0, %v652
    %654 = vmatprep.mubr.f32.mxu0 0.0
    %655 = vmatmul.mubr.f32.gmra.mxu0 %v438
    %v656 = vpop.f32.mrf.mxu0
    %v657 = vadd.f32 0.0, %v656
    %v658 = vpop.f32.mrf.mxu0
    %v659 = vadd.f32 0.0, %v658
    %660 = vmatprep.mubr.f32.mxu0 0.0
    %661 = vmatmul.mubr.f32.gmra.mxu0 %v441
    %v662 = vpop.f32.mrf.mxu0
    %v663 = vadd.f32 0.0, %v662
    %v664 = vpop.f32.mrf.mxu0
    %v665 = vadd.f32 0.0, %v664
    %666 = vmatprep.mubr.f32.mxu0 0.0
    %667 = vmatmul.mubr.f32.gmra.mxu0 %v444
    %v668 = vpop.f32.mrf.mxu0
    %v669 = vadd.f32 0.0, %v668
    %v670 = vpop.f32.mrf.mxu0
    %v671 = vadd.f32 0.0, %v670
    %672 = vmatprep.mubr.f32.mxu0 0.0
    %673 = vmatmul.mubr.f32.gmra.mxu0 %v447
    %v674 = vpop.f32.mrf.mxu0
    %v675 = vadd.f32 0.0, %v674
    %v676 = vpop.f32.mrf.mxu0
    %v677 = vadd.f32 0.0, %v676
    %678 = vmatprep.mubr.f32.mxu0 0.0
    %679 = vmatmul.mubr.f32.gmra.mxu0 %v450
    %v680 = vpop.f32.mrf.mxu0
    %v681 = vadd.f32 0.0, %v680
    %v682 = vpop.f32.mrf.mxu0
    %v683 = vadd.f32 0.0, %v682
    %684 = vmatprep.mubr.f32.mxu0 0.0
    %685 = vmatmul.mubr.f32.gmra.mxu0 %v453
    %v686 = vpop.f32.mrf.mxu0
    %v687 = vadd.f32 0.0, %v686
    %v688 = vpop.f32.mrf.mxu0
    %v689 = vadd.f32 0.0, %v688
    %690 = vmatprep.mubr.f32.mxu0 0.0
    %691 = vmatmul.mubr.f32.gmra.mxu0 %v456
    %v692 = vpop.f32.mrf.mxu0
    %v693 = vadd.f32 0.0, %v692
    %v694 = vpop.f32.mrf.mxu0
    %v695 = vadd.f32 0.0, %v694
    %696 = vdwg.mxu0
    %v697 = vld [vmem:[#allocation8] sm:$0xff]
    %v698 = vld [vmem:[#allocation8 + $0x8] sm:$0xff]
    %v699 = vld [vmem:[#allocation8 + $0x10] sm:$0xff]
    %v700 = vld [vmem:[#allocation8 + $0x18] sm:$0xff]
    %v701 = vld [vmem:[#allocation8 + $0x20] sm:$0xff]
    %v702 = vld [vmem:[#allocation8 + $0x28] sm:$0xff]
    %v703 = vld [vmem:[#allocation8 + $0x30] sm:$0xff]
    %v704 = vld [vmem:[#allocation8 + $0x38] sm:$0xff]
    %v705 = vld [vmem:[#allocation8 + $0x40] sm:$0xff]
    %v706 = vld [vmem:[#allocation8 + $0x48] sm:$0xff]
    %v707 = vld [vmem:[#allocation8 + $0x50] sm:$0xff]
    %v708 = vld [vmem:[#allocation8 + $0x58] sm:$0xff]
    %v709 = vld [vmem:[#allocation8 + $0x60] sm:$0xff]
    %v710 = vld [vmem:[#allocation8 + $0x68] sm:$0xff]
    %v711 = vld [vmem:[#allocation8 + $0x70] sm:$0xff]
    %v712 = vld [vmem:[#allocation8 + $0x78] sm:$0xff]
    %v713 = vld [vmem:[#allocation8 + $0x80] sm:$0xff]
    %v714 = vld [vmem:[#allocation8 + $0x88] sm:$0xff]
    %v715 = vld [vmem:[#allocation8 + $0x90] sm:$0xff]
    %v716 = vld [vmem:[#allocation8 + $0x98] sm:$0xff]
    %v717 = vld [vmem:[#allocation8 + $0xa0] sm:$0xff]
    %v718 = vld [vmem:[#allocation8 + $0xa8] sm:$0xff]
    %v719 = vld [vmem:[#allocation8 + $0xb0] sm:$0xff]
    %v720 = vld [vmem:[#allocation8 + $0xb8] sm:$0xff]
    %v721 = vld [vmem:[#allocation8 + $0xc0] sm:$0xff]
    %v722 = vld [vmem:[#allocation8 + $0xc8] sm:$0xff]
    %v723 = vld [vmem:[#allocation8 + $0xd0] sm:$0xff]
    %v724 = vld [vmem:[#allocation8 + $0xd8] sm:$0xff]
    %v725 = vld [vmem:[#allocation8 + $0xe0] sm:$0xff]
    %v726 = vld [vmem:[#allocation8 + $0xe8] sm:$0xff]
    %v727 = vld [vmem:[#allocation8 + $0xf0] sm:$0xff]
    %v728 = vld [vmem:[#allocation8 + $0xf8] sm:$0xff]
    %v729 = vld [vmem:[#allocation8 + $0x100] sm:$0xff]
    %v730 = vld [vmem:[#allocation8 + $0x108] sm:$0xff]
    %v731 = vld [vmem:[#allocation8 + $0x110] sm:$0xff]
    %v732 = vld [vmem:[#allocation8 + $0x118] sm:$0xff]
    %v733 = vld [vmem:[#allocation8 + $0x120] sm:$0xff]
    %v734 = vld [vmem:[#allocation8 + $0x128] sm:$0xff]
    %v735 = vld [vmem:[#allocation8 + $0x130] sm:$0xff]
    %v736 = vld [vmem:[#allocation8 + $0x138] sm:$0xff]
    %v737 = vld [vmem:[#allocation8 + $0x140] sm:$0xff]
    %v738 = vld [vmem:[#allocation8 + $0x148] sm:$0xff]
    %v739 = vld [vmem:[#allocation8 + $0x150] sm:$0xff]
    %v740 = vld [vmem:[#allocation8 + $0x158] sm:$0xff]
    %v741 = vld [vmem:[#allocation8 + $0x160] sm:$0xff]
    %v742 = vld [vmem:[#allocation8 + $0x168] sm:$0xff]
    %v743 = vld [vmem:[#allocation8 + $0x170] sm:$0xff]
    %v744 = vld [vmem:[#allocation8 + $0x178] sm:$0xff]
    %v745 = vld [vmem:[#allocation8 + $0x180] sm:$0xff]
    %v746 = vld [vmem:[#allocation8 + $0x188] sm:$0xff]
    %v747 = vld [vmem:[#allocation8 + $0x190] sm:$0xff]
    %v748 = vld [vmem:[#allocation8 + $0x198] sm:$0xff]
    %v749 = vld [vmem:[#allocation8 + $0x1a0] sm:$0xff]
    %v750 = vld [vmem:[#allocation8 + $0x1a8] sm:$0xff]
    %v751 = vld [vmem:[#allocation8 + $0x1b0] sm:$0xff]
    %v752 = vld [vmem:[#allocation8 + $0x1b8] sm:$0xff]
    %v753 = vld [vmem:[#allocation8 + $0x1c0] sm:$0xff]
    %v754 = vld [vmem:[#allocation8 + $0x1c8] sm:$0xff]
    %v755 = vld [vmem:[#allocation8 + $0x1d0] sm:$0xff]
    %v756 = vld [vmem:[#allocation8 + $0x1d8] sm:$0xff]
    %v757 = vld [vmem:[#allocation8 + $0x1e0] sm:$0xff]
    %v758 = vld [vmem:[#allocation8 + $0x1e8] sm:$0xff]
    %v759 = vld [vmem:[#allocation8 + $0x1f0] sm:$0xff]
    %v760 = vld [vmem:[#allocation8 + $0x1f8] sm:$0xff]
    %v761 = vld [vmem:[%s1] sm:$0xff]
    %v762 = vld [vmem:[%s1 + $0x8] sm:$0xff]
    %v763 = vld [vmem:[%s1 + $0x10] sm:$0xff]
    %v764 = vld [vmem:[%s1 + $0x18] sm:$0xff]
    %v765 = vld [vmem:[%s1 + $0x20] sm:$0xff]
    %v766 = vld [vmem:[%s1 + $0x28] sm:$0xff]
    %v767 = vld [vmem:[%s1 + $0x30] sm:$0xff]
    %v768 = vld [vmem:[%s1 + $0x38] sm:$0xff]
    %769 = vmatprep.subr.mxu0 %v758
    %770 = vmatpush1.msra.mxu0 %v757
    %771 = vmatprep.subr.mxu0 %v754
    %772 = vmatpush1.msra.mxu0 %v753
    %773 = vmatprep.subr.mxu0 %v750
    %774 = vmatpush1.msra.mxu0 %v749
    %775 = vmatprep.subr.mxu0 %v746
    %776 = vmatpush1.msra.mxu0 %v745
    %777 = vmatprep.subr.mxu0 %v742
    %778 = vmatpush1.msra.mxu0 %v741
    %779 = vmatprep.subr.mxu0 %v738
    %780 = vmatpush1.msra.mxu0 %v737
    %781 = vmatprep.subr.mxu0 %v734
    %782 = vmatpush1.msra.mxu0 %v733
    %783 = vmatprep.subr.mxu0 %v730
    %784 = vmatpush1.msra.mxu0 %v729
    %785 = vmatprep.subr.mxu0 %v726
    %786 = vmatpush1.msra.mxu0 %v725
    %787 = vmatprep.subr.mxu0 %v722
    %788 = vmatpush1.msra.mxu0 %v721
    %789 = vmatprep.subr.mxu0 %v718
    %790 = vmatpush1.msra.mxu0 %v717
    %791 = vmatprep.subr.mxu0 %v714
    %792 = vmatpush1.msra.mxu0 %v713
    %793 = vmatprep.subr.mxu0 %v710
    %794 = vmatpush1.msra.mxu0 %v709
    %795 = vmatprep.subr.mxu0 %v706
    %796 = vmatpush1.msra.mxu0 %v705
    %797 = vmatprep.subr.mxu0 %v702
    %798 = vmatpush1.msra.mxu0 %v701
    %799 = vmatprep.subr.mxu0 %v698
    %800 = vmatpush1.msra.mxu0 %v697
    %801 = vmatprep.subr.mxu0 0.0
    %802 = vmatpush2.msra.mxu0 0.0
    %803 = vmatprep.subr.mxu0 0.0
    %804 = vmatpush2.msra.mxu0 0.0
    %805 = vmatprep.subr.mxu0 0.0
    %806 = vmatpush2.msra.mxu0 0.0
    %807 = vmatprep.subr.mxu0 0.0
    %808 = vmatpush2.msra.mxu0 0.0
    %809 = vmatprep.subr.mxu0 0.0
    %810 = vmatpush2.msra.mxu0 0.0
    %811 = vmatprep.subr.mxu0 0.0
    %812 = vmatpush2.msra.mxu0 0.0
    %813 = vmatprep.subr.mxu0 0.0
    %814 = vmatpush2.msra.mxu0 0.0
    %815 = vmatprep.subr.mxu0 0.0
    %816 = vmatpush2.msra.mxu0 0.0
    %817 = vmatprep.subr.mxu0 0.0
    %818 = vmatpush2.msra.mxu0 0.0
    %819 = vmatprep.subr.mxu0 0.0
    %820 = vmatpush2.msra.mxu0 0.0
    %821 = vmatprep.subr.mxu0 0.0
    %822 = vmatpush2.msra.mxu0 0.0
    %823 = vmatprep.subr.mxu0 0.0
    %824 = vmatpush2.msra.mxu0 0.0
    %825 = vmatprep.subr.mxu0 0.0
    %826 = vmatpush2.msra.mxu0 0.0
    %827 = vmatprep.subr.mxu0 0.0
    %828 = vmatpush2.msra.mxu0 0.0
    %829 = vmatprep.subr.mxu0 0.0
    %830 = vmatpush2.msra.mxu0 0.0
    %831 = vmatprep.subr.mxu0 0.0
    %832 = vmatpush2.msra.mxu0 0.0
    %833 = vmatprep.mubr.f32.mxu0 0.0
    %834 = vmatmul.mubr.f32.gmra.mxu0 0.0
    %v835 = vpop.f32.mrf.mxu0
    %v836 = vadd.f32 0.0, %v835
    %v837 = vpop.f32.mrf.mxu0
    %v838 = vadd.f32 0.0, %v837
    %839 = vdwg.mxu0
    %840 = vmatprep.subr.mxu0 %v760
    %841 = vmatpush1.msra.mxu0 %v759
    %842 = vmatprep.subr.mxu0 %v756
    %843 = vmatpush1.msra.mxu0 %v755
    %844 = vmatprep.subr.mxu0 %v752
    %845 = vmatpush1.msra.mxu0 %v751
    %846 = vmatprep.subr.mxu0 %v748
    %847 = vmatpush1.msra.mxu0 %v747
    %848 = vmatprep.subr.mxu0 %v744
    %849 = vmatpush1.msra.mxu0 %v743
    %850 = vmatprep.subr.mxu0 %v740
    %851 = vmatpush1.msra.mxu0 %v739
    %852 = vmatprep.subr.mxu0 %v736
    %853 = vmatpush1.msra.mxu0 %v735
    %854 = vmatprep.subr.mxu0 %v732
    %855 = vmatpush1.msra.mxu0 %v731
    %856 = vmatprep.subr.mxu0 %v728
    %857 = vmatpush1.msra.mxu0 %v727
    %858 = vmatprep.subr.mxu0 %v724
    %859 = vmatpush1.msra.mxu0 %v723
    %860 = vmatprep.subr.mxu0 %v720
    %861 = vmatpush1.msra.mxu0 %v719
    %862 = vmatprep.subr.mxu0 %v716
    %863 = vmatpush1.msra.mxu0 %v715
    %864 = vmatprep.subr.mxu0 %v712
    %865 = vmatpush1.msra.mxu0 %v711
    %866 = vmatprep.subr.mxu0 %v708
    %867 = vmatpush1.msra.mxu0 %v707
    %868 = vmatprep.subr.mxu0 %v704
    %869 = vmatpush1.msra.mxu0 %v703
    %870 = vmatprep.subr.mxu0 %v700
    %871 = vmatpush1.msra.mxu0 %v699
    %872 = vmatprep.subr.mxu0 0.0
    %873 = vmatpush2.msra.mxu0 0.0
    %874 = vmatprep.subr.mxu0 0.0
    %875 = vmatpush2.msra.mxu0 0.0
    %876 = vmatprep.subr.mxu0 0.0
    %877 = vmatpush2.msra.mxu0 0.0
    %878 = vmatprep.subr.mxu0 0.0
    %879 = vmatpush2.msra.mxu0 0.0
    %880 = vmatprep.subr.mxu0 0.0
    %881 = vmatpush2.msra.mxu0 0.0
    %882 = vmatprep.subr.mxu0 0.0
    %883 = vmatpush2.msra.mxu0 0.0
    %884 = vmatprep.subr.mxu0 0.0
    %885 = vmatpush2.msra.mxu0 0.0
    %886 = vmatprep.subr.mxu0 0.0
    %887 = vmatpush2.msra.mxu0 0.0
    %888 = vmatprep.subr.mxu0 0.0
    %889 = vmatpush2.msra.mxu0 0.0
    %890 = vmatprep.subr.mxu0 0.0
    %891 = vmatpush2.msra.mxu0 0.0
    %892 = vmatprep.subr.mxu0 0.0
    %893 = vmatpush2.msra.mxu0 0.0
    %894 = vmatprep.subr.mxu0 0.0
    %895 = vmatpush2.msra.mxu0 0.0
    %896 = vmatprep.subr.mxu0 0.0
    %897 = vmatpush2.msra.mxu0 0.0
    %898 = vmatprep.subr.mxu0 0.0
    %899 = vmatpush2.msra.mxu0 0.0
    %900 = vmatprep.subr.mxu0 0.0
    %901 = vmatpush2.msra.mxu0 0.0
    %902 = vmatprep.subr.mxu0 0.0
    %903 = vmatpush2.msra.mxu0 0.0
    %904 = vmatprep.mubr.f32.mxu0 0.0
    %905 = vmatmul.mubr.f32.gmra.mxu0 0.0
    %v906 = vpop.f32.mrf.mxu0
    %v907 = vadd.f32 0.0, %v906
    %v908 = vpop.f32.mrf.mxu0
    %v909 = vadd.f32 0.0, %v908
    %910 = vdwg.mxu0
    %v911 = vadd.f32 %v538, %v836
    %v912 = vadd.f32 %v540, %v838
    %v913 = vadd.f32 %v651, %v907
    %v914 = vadd.f32 %v653, %v909
    %v915 = vmul.f32 %v911, 0.5
    %v916 = vtanh.pop %v915
    %v917 = vmul.f32 %v916, 0.5
    %v918 = vadd.f32 %v917, 0.5
    %v919 = vmul.f32 %v912, 0.5
    %v920 = vtanh.pop %v919
    %v921 = vmul.f32 %v920, 0.5
    %v922 = vadd.f32 %v921, 0.5
    %v923 = vtanh.pop %v913
    %v924 = vmul.f32 %v914, 0.5
    %v925 = vtanh.pop %v924
    %v926 = vmul.f32 %v925, 0.5
    %v927 = vadd.f32 %v926, 0.5
    %v928 = vmul.f32 %v922, 0.0
    %v929 = vmul.f32 %v918, %v923
    %v930 = vadd.f32 %v928, %v929
    %v931 = vtanh.pop %v930
    %v932 = vmul.f32 %v927, %v931
    %vm933 = vcmp.gt.f32.partialorder %v761, 0.5
    %v934 = vsel %vm933, %v932, 0.0
    %v935 = vsel %vm933, %v930, 0.0
    %936 = vmatprep.subr.mxu0 %v758
    %937 = vmatpush1.msra.mxu0 %v757
    %938 = vmatprep.subr.mxu0 %v754
    %939 = vmatpush1.msra.mxu0 %v753
    %940 = vmatprep.subr.mxu0 %v750
    %941 = vmatpush1.msra.mxu0 %v749
    %942 = vmatprep.subr.mxu0 %v746
    %943 = vmatpush1.msra.mxu0 %v745
    %944 = vmatprep.subr.mxu0 %v742
    %945 = vmatpush1.msra.mxu0 %v741
    %946 = vmatprep.subr.mxu0 %v738
    %947 = vmatpush1.msra.mxu0 %v737
    %948 = vmatprep.subr.mxu0 %v734
    %949 = vmatpush1.msra.mxu0 %v733
    %950 = vmatprep.subr.mxu0 %v730
    %951 = vmatpush1.msra.mxu0 %v729
    %952 = vmatprep.subr.mxu0 %v726
    %953 = vmatpush1.msra.mxu0 %v725
    %954 = vmatprep.subr.mxu0 %v722
    %955 = vmatpush1.msra.mxu0 %v721
    %956 = vmatprep.subr.mxu0 %v718
    %957 = vmatpush1.msra.mxu0 %v717
    %958 = vmatprep.subr.mxu0 %v714
    %959 = vmatpush1.msra.mxu0 %v713
    %960 = vmatprep.subr.mxu0 %v710
    %961 = vmatpush1.msra.mxu0 %v709
    %962 = vmatprep.subr.mxu0 %v706
    %963 = vmatpush1.msra.mxu0 %v705
    %964 = vmatprep.subr.mxu0 %v702
    %965 = vmatpush1.msra.mxu0 %v701
    %966 = vmatprep.subr.mxu0 %v698
    %967 = vmatpush1.msra.mxu0 %v697
    %968 = vmatprep.subr.mxu0 0.0
    %969 = vmatpush2.msra.mxu0 0.0
    %970 = vmatprep.subr.mxu0 0.0
    %971 = vmatpush2.msra.mxu0 0.0
    %972 = vmatprep.subr.mxu0 0.0
    %973 = vmatpush2.msra.mxu0 0.0
    %974 = vmatprep.subr.mxu0 0.0
    %975 = vmatpush2.msra.mxu0 0.0
    %976 = vmatprep.subr.mxu0 0.0
    %977 = vmatpush2.msra.mxu0 0.0
    %978 = vmatprep.subr.mxu0 0.0
    %979 = vmatpush2.msra.mxu0 0.0
    %980 = vmatprep.subr.mxu0 0.0
    %981 = vmatpush2.msra.mxu0 0.0
    %982 = vmatprep.subr.mxu0 0.0
    %983 = vmatpush2.msra.mxu0 0.0
    %984 = vmatprep.subr.mxu0 0.0
    %985 = vmatpush2.msra.mxu0 0.0
    %986 = vmatprep.subr.mxu0 0.0
    %987 = vmatpush2.msra.mxu0 0.0
    %988 = vmatprep.subr.mxu0 0.0
    %989 = vmatpush2.msra.mxu0 0.0
    %990 = vmatprep.subr.mxu0 0.0
    %991 = vmatpush2.msra.mxu0 0.0
    %992 = vmatprep.subr.mxu0 0.0
    %993 = vmatpush2.msra.mxu0 0.0
    %994 = vmatprep.subr.mxu0 0.0
    %995 = vmatpush2.msra.mxu0 0.0
    %996 = vmatprep.subr.mxu0 0.0
    %997 = vmatpush2.msra.mxu0 0.0
    %998 = vmatprep.subr.mxu0 0.0
    %999 = vmatpush2.msra.mxu0 0.0
    %1000 = vmatprep.mubr.f32.mxu0 0.0
    %1001 = vmatmul.mubr.f32.gmra.mxu0 %v934
    %v1002 = vpop.f32.mrf.mxu0
    %v1003 = vadd.f32 0.0, %v1002
    %v1004 = vpop.f32.mrf.mxu0
    %v1005 = vadd.f32 0.0, %v1004
    %1006 = vdwg.mxu0
    %1007 = vmatprep.subr.mxu0 %v760
    %1008 = vmatpush1.msra.mxu0 %v759
    %1009 = vmatprep.subr.mxu0 %v756
    %1010 = vmatpush1.msra.mxu0 %v755
    %1011 = vmatprep.subr.mxu0 %v752
    %1012 = vmatpush1.msra.mxu0 %v751
    %1013 = vmatprep.subr.mxu0 %v748
    %1014 = vmatpush1.msra.mxu0 %v747
    %1015 = vmatprep.subr.mxu0 %v744
    %1016 = vmatpush1.msra.mxu0 %v743
    %1017 = vmatprep.subr.mxu0 %v740
    %1018 = vmatpush1.msra.mxu0 %v739
    %1019 = vmatprep.subr.mxu0 %v736
    %1020 = vmatpush1.msra.mxu0 %v735
    %1021 = vmatprep.subr.mxu0 %v732
    %1022 = vmatpush1.msra.mxu0 %v731
    %1023 = vmatprep.subr.mxu0 %v728
    %1024 = vmatpush1.msra.mxu0 %v727
    %1025 = vmatprep.subr.mxu0 %v724
    %1026 = vmatpush1.msra.mxu0 %v723
    %1027 = vmatprep.subr.mxu0 %v720
    %1028 = vmatpush1.msra.mxu0 %v719
    %1029 = vmatprep.subr.mxu0 %v716
    %1030 = vmatpush1.msra.mxu0 %v715
    %1031 = vmatprep.subr.mxu0 %v712
    %1032 = vmatpush1.msra.mxu0 %v711
    %1033 = vmatprep.subr.mxu0 %v708
    %1034 = vmatpush1.msra.mxu0 %v707
    %1035 = vmatprep.subr.mxu0 %v704
    %1036 = vmatpush1.msra.mxu0 %v703
    %1037 = vmatprep.subr.mxu0 %v700
    %1038 = vmatpush1.msra.mxu0 %v699
    %1039 = vmatprep.subr.mxu0 0.0
    %1040 = vmatpush2.msra.mxu0 0.0
    %1041 = vmatprep.subr.mxu0 0.0
    %1042 = vmatpush2.msra.mxu0 0.0
    %1043 = vmatprep.subr.mxu0 0.0
    %1044 = vmatpush2.msra.mxu0 0.0
    %1045 = vmatprep.subr.mxu0 0.0
    %1046 = vmatpush2.msra.mxu0 0.0
    %1047 = vmatprep.subr.mxu0 0.0
    %1048 = vmatpush2.msra.mxu0 0.0
    %1049 = vmatprep.subr.mxu0 0.0
    %1050 = vmatpush2.msra.mxu0 0.0
    %1051 = vmatprep.subr.mxu0 0.0
    %1052 = vmatpush2.msra.mxu0 0.0
    %1053 = vmatprep.subr.mxu0 0.0
    %1054 = vmatpush2.msra.mxu0 0.0
    %1055 = vmatprep.subr.mxu0 0.0
    %1056 = vmatpush2.msra.mxu0 0.0
    %1057 = vmatprep.subr.mxu0 0.0
    %1058 = vmatpush2.msra.mxu0 0.0
    %1059 = vmatprep.subr.mxu0 0.0
    %1060 = vmatpush2.msra.mxu0 0.0
    %1061 = vmatprep.subr.mxu0 0.0
    %1062 = vmatpush2.msra.mxu0 0.0
    %1063 = vmatprep.subr.mxu0 0.0
    %1064 = vmatpush2.msra.mxu0 0.0
    %1065 = vmatprep.subr.mxu0 0.0
    %1066 = vmatpush2.msra.mxu0 0.0
    %1067 = vmatprep.subr.mxu0 0.0
    %1068 = vmatpush2.msra.mxu0 0.0
    %1069 = vmatprep.subr.mxu0 0.0
    %1070 = vmatpush2.msra.mxu0 0.0
    %1071 = vmatprep.mubr.f32.mxu0 0.0
    %1072 = vmatmul.mubr.f32.gmra.mxu0 %v934
    %v1073 = vpop.f32.mrf.mxu0
    %v1074 = vadd.f32 0.0, %v1073
    %v1075 = vpop.f32.mrf.mxu0
    %v1076 = vadd.f32 0.0, %v1075
    %1077 = vdwg.mxu0
    %v1078 = vadd.f32 %v544, %v1003
    %v1079 = vadd.f32 %v546, %v1005
    %v1080 = vadd.f32 %v657, %v1074
    %v1081 = vadd.f32 %v659, %v1076
    %v1082 = vmul.f32 %v1078, 0.5
    %v1083 = vtanh.pop %v1082
    %v1084 = vmul.f32 %v1083, 0.5
    %v1085 = vadd.f32 %v1084, 0.5
    %v1086 = vmul.f32 %v1079, 0.5
    %v1087 = vtanh.pop %v1086
    %v1088 = vmul.f32 %v1087, 0.5
    %v1089 = vadd.f32 %v1088, 0.5
    %v1090 = vtanh.pop %v1080
    %v1091 = vmul.f32 %v1081, 0.5
    %v1092 = vtanh.pop %v1091
    %v1093 = vmul.f32 %v1092, 0.5
    %v1094 = vadd.f32 %v1093, 0.5
    %v1095 = vmul.f32 %v1089, %v935
    %v1096 = vmul.f32 %v1085, %v1090
    %v1097 = vadd.f32 %v1095, %v1096
    %v1098 = vtanh.pop %v1097
    %v1099 = vmul.f32 %v1094, %v1098
    %vm1100 = vcmp.gt.f32.partialorder %v762, 0.5
    %v1101 = vsel %vm1100, %v1099, %v934
    %v1102 = vsel %vm1100, %v1097, %v935
    %1103 = vmatprep.subr.mxu0 %v758
    %1104 = vmatpush1.msra.mxu0 %v757
    %1105 = vmatprep.subr.mxu0 %v754
    %1106 = vmatpush1.msra.mxu0 %v753
    %1107 = vmatprep.subr.mxu0 %v750
    %1108 = vmatpush1.msra.mxu0 %v749
    %1109 = vmatprep.subr.mxu0 %v746
    %1110 = vmatpush1.msra.mxu0 %v745
    %1111 = vmatprep.subr.mxu0 %v742
    %1112 = vmatpush1.msra.mxu0 %v741
    %1113 = vmatprep.subr.mxu0 %v738
    %1114 = vmatpush1.msra.mxu0 %v737
    %1115 = vmatprep.subr.mxu0 %v734
    %1116 = vmatpush1.msra.mxu0 %v733
    %1117 = vmatprep.subr.mxu0 %v730
    %1118 = vmatpush1.msra.mxu0 %v729
    %1119 = vmatprep.subr.mxu0 %v726
    %1120 = vmatpush1.msra.mxu0 %v725
    %1121 = vmatprep.subr.mxu0 %v722
    %1122 = vmatpush1.msra.mxu0 %v721
    %1123 = vmatprep.subr.mxu0 %v718
    %1124 = vmatpush1.msra.mxu0 %v717
    %1125 = vmatprep.subr.mxu0 %v714
    %1126 = vmatpush1.msra.mxu0 %v713
    %1127 = vmatprep.subr.mxu0 %v710
    %1128 = vmatpush1.msra.mxu0 %v709
    %1129 = vmatprep.subr.mxu0 %v706
    %1130 = vmatpush1.msra.mxu0 %v705
    %1131 = vmatprep.subr.mxu0 %v702
    %1132 = vmatpush1.msra.mxu0 %v701
    %1133 = vmatprep.subr.mxu0 %v698
    %1134 = vmatpush1.msra.mxu0 %v697
    %1135 = vmatprep.subr.mxu0 0.0
    %1136 = vmatpush2.msra.mxu0 0.0
    %1137 = vmatprep.subr.mxu0 0.0
    %1138 = vmatpush2.msra.mxu0 0.0
    %1139 = vmatprep.subr.mxu0 0.0
    %1140 = vmatpush2.msra.mxu0 0.0
    %1141 = vmatprep.subr.mxu0 0.0
    %1142 = vmatpush2.msra.mxu0 0.0
    %1143 = vmatprep.subr.mxu0 0.0
    %1144 = vmatpush2.msra.mxu0 0.0
    %1145 = vmatprep.subr.mxu0 0.0
    %1146 = vmatpush2.msra.mxu0 0.0
    %1147 = vmatprep.subr.mxu0 0.0
    %1148 = vmatpush2.msra.mxu0 0.0
    %1149 = vmatprep.subr.mxu0 0.0
    %1150 = vmatpush2.msra.mxu0 0.0
    %1151 = vmatprep.subr.mxu0 0.0
    %1152 = vmatpush2.msra.mxu0 0.0
    %1153 = vmatprep.subr.mxu0 0.0
    %1154 = vmatpush2.msra.mxu0 0.0
    %1155 = vmatprep.subr.mxu0 0.0
    %1156 = vmatpush2.msra.mxu0 0.0
    %1157 = vmatprep.subr.mxu0 0.0
    %1158 = vmatpush2.msra.mxu0 0.0
    %1159 = vmatprep.subr.mxu0 0.0
    %1160 = vmatpush2.msra.mxu0 0.0
    %1161 = vmatprep.subr.mxu0 0.0
    %1162 = vmatpush2.msra.mxu0 0.0
    %1163 = vmatprep.subr.mxu0 0.0
    %1164 = vmatpush2.msra.mxu0 0.0
    %1165 = vmatprep.subr.mxu0 0.0
    %1166 = vmatpush2.msra.mxu0 0.0
    %1167 = vmatprep.mubr.f32.mxu0 0.0
    %1168 = vmatmul.mubr.f32.gmra.mxu0 %v1101
    %v1169 = vpop.f32.mrf.mxu0
    %v1170 = vadd.f32 0.0, %v1169
    %v1171 = vpop.f32.mrf.mxu0
    %v1172 = vadd.f32 0.0, %v1171
    %1173 = vdwg.mxu0
    %1174 = vmatprep.subr.mxu0 %v760
    %1175 = vmatpush1.msra.mxu0 %v759
    %1176 = vmatprep.subr.mxu0 %v756
    %1177 = vmatpush1.msra.mxu0 %v755
    %1178 = vmatprep.subr.mxu0 %v752
    %1179 = vmatpush1.msra.mxu0 %v751
    %1180 = vmatprep.subr.mxu0 %v748
    %1181 = vmatpush1.msra.mxu0 %v747
    %1182 = vmatprep.subr.mxu0 %v744
    %1183 = vmatpush1.msra.mxu0 %v743
    %1184 = vmatprep.subr.mxu0 %v740
    %1185 = vmatpush1.msra.mxu0 %v739
    %1186 = vmatprep.subr.mxu0 %v736
    %1187 = vmatpush1.msra.mxu0 %v735
    %1188 = vmatprep.subr.mxu0 %v732
    %1189 = vmatpush1.msra.mxu0 %v731
    %1190 = vmatprep.subr.mxu0 %v728
    %1191 = vmatpush1.msra.mxu0 %v727
    %1192 = vmatprep.subr.mxu0 %v724
    %1193 = vmatpush1.msra.mxu0 %v723
    %1194 = vmatprep.subr.mxu0 %v720
    %1195 = vmatpush1.msra.mxu0 %v719
    %1196 = vmatprep.subr.mxu0 %v716
    %1197 = vmatpush1.msra.mxu0 %v715
    %1198 = vmatprep.subr.mxu0 %v712
    %1199 = vmatpush1.msra.mxu0 %v711
    %1200 = vmatprep.subr.mxu0 %v708
    %1201 = vmatpush1.msra.mxu0 %v707
    %1202 = vmatprep.subr.mxu0 %v704
    %1203 = vmatpush1.msra.mxu0 %v703
    %1204 = vmatprep.subr.mxu0 %v700
    %1205 = vmatpush1.msra.mxu0 %v699
    %1206 = vmatprep.subr.mxu0 0.0
    %1207 = vmatpush2.msra.mxu0 0.0
    %1208 = vmatprep.subr.mxu0 0.0
    %1209 = vmatpush2.msra.mxu0 0.0
    %1210 = vmatprep.subr.mxu0 0.0
    %1211 = vmatpush2.msra.mxu0 0.0
    %1212 = vmatprep.subr.mxu0 0.0
    %1213 = vmatpush2.msra.mxu0 0.0
    %1214 = vmatprep.subr.mxu0 0.0
    %1215 = vmatpush2.msra.mxu0 0.0
    %1216 = vmatprep.subr.mxu0 0.0
    %1217 = vmatpush2.msra.mxu0 0.0
    %1218 = vmatprep.subr.mxu0 0.0
    %1219 = vmatpush2.msra.mxu0 0.0
    %1220 = vmatprep.subr.mxu0 0.0
    %1221 = vmatpush2.msra.mxu0 0.0
    %1222 = vmatprep.subr.mxu0 0.0
    %1223 = vmatpush2.msra.mxu0 0.0
    %1224 = vmatprep.subr.mxu0 0.0
    %1225 = vmatpush2.msra.mxu0 0.0
    %1226 = vmatprep.subr.mxu0 0.0
    %1227 = vmatpush2.msra.mxu0 0.0
    %1228 = vmatprep.subr.mxu0 0.0
    %1229 = vmatpush2.msra.mxu0 0.0
    %1230 = vmatprep.subr.mxu0 0.0
    %1231 = vmatpush2.msra.mxu0 0.0
    %1232 = vmatprep.subr.mxu0 0.0
    %1233 = vmatpush2.msra.mxu0 0.0
    %1234 = vmatprep.subr.mxu0 0.0
    %1235 = vmatpush2.msra.mxu0 0.0
    %1236 = vmatprep.subr.mxu0 0.0
    %1237 = vmatpush2.msra.mxu0 0.0
    %1238 = vmatprep.mubr.f32.mxu0 0.0
    %1239 = vmatmul.mubr.f32.gmra.mxu0 %v1101
    %v1240 = vpop.f32.mrf.mxu0
    %v1241 = vadd.f32 0.0, %v1240
    %v1242 = vpop.f32.mrf.mxu0
    %v1243 = vadd.f32 0.0, %v1242
    %1244 = vdwg.mxu0
    %v1245 = vadd.f32 %v550, %v1170
    %v1246 = vadd.f32 %v552, %v1172
    %v1247 = vadd.f32 %v663, %v1241
    %v1248 = vadd.f32 %v665, %v1243
    %v1249 = vmul.f32 %v1245, 0.5
    %v1250 = vtanh.pop %v1249
    %v1251 = vmul.f32 %v1250, 0.5
    %v1252 = vadd.f32 %v1251, 0.5
    %v1253 = vmul.f32 %v1246, 0.5
    %v1254 = vtanh.pop %v1253
    %v1255 = vmul.f32 %v1254, 0.5
    %v1256 = vadd.f32 %v1255, 0.5
    %v1257 = vtanh.pop %v1247
    %v1258 = vmul.f32 %v1248, 0.5
    %v1259 = vtanh.pop %v1258
    %v1260 = vmul.f32 %v1259, 0.5
    %v1261 = vadd.f32 %v1260, 0.5
    %v1262 = vmul.f32 %v1256, %v1102
    %v1263 = vmul.f32 %v1252, %v1257
    %v1264 = vadd.f32 %v1262, %v1263
    %v1265 = vtanh.pop %v1264
    %v1266 = vmul.f32 %v1261, %v1265
    %vm1267 = vcmp.gt.f32.partialorder %v763, 0.5
    %v1268 = vsel %vm1267, %v1266, %v1101
    %v1269 = vsel %vm1267, %v1264, %v1102
    %1270 = vmatprep.subr.mxu0 %v758
    %1271 = vmatpush1.msra.mxu0 %v757
    %1272 = vmatprep.subr.mxu0 %v754
    %1273 = vmatpush1.msra.mxu0 %v753
    %1274 = vmatprep.subr.mxu0 %v750
    %1275 = vmatpush1.msra.mxu0 %v749
    %1276 = vmatprep.subr.mxu0 %v746
    %1277 = vmatpush1.msra.mxu0 %v745
    %1278 = vmatprep.subr.mxu0 %v742
    %1279 = vmatpush1.msra.mxu0 %v741
    %1280 = vmatprep.subr.mxu0 %v738
    %1281 = vmatpush1.msra.mxu0 %v737
    %1282 = vmatprep.subr.mxu0 %v734
    %1283 = vmatpush1.msra.mxu0 %v733
    %1284 = vmatprep.subr.mxu0 %v730
    %1285 = vmatpush1.msra.mxu0 %v729
    %1286 = vmatprep.subr.mxu0 %v726
    %1287 = vmatpush1.msra.mxu0 %v725
    %1288 = vmatprep.subr.mxu0 %v722
    %1289 = vmatpush1.msra.mxu0 %v721
    %1290 = vmatprep.subr.mxu0 %v718
    %1291 = vmatpush1.msra.mxu0 %v717
    %1292 = vmatprep.subr.mxu0 %v714
    %1293 = vmatpush1.msra.mxu0 %v713
    %1294 = vmatprep.subr.mxu0 %v710
    %1295 = vmatpush1.msra.mxu0 %v709
    %1296 = vmatprep.subr.mxu0 %v706
    %1297 = vmatpush1.msra.mxu0 %v705
    %1298 = vmatprep.subr.mxu0 %v702
    %1299 = vmatpush1.msra.mxu0 %v701
    %1300 = vmatprep.subr.mxu0 %v698
    %1301 = vmatpush1.msra.mxu0 %v697
    %1302 = vmatprep.subr.mxu0 0.0
    %1303 = vmatpush2.msra.mxu0 0.0
    %1304 = vmatprep.subr.mxu0 0.0
    %1305 = vmatpush2.msra.mxu0 0.0
    %1306 = vmatprep.subr.mxu0 0.0
    %1307 = vmatpush2.msra.mxu0 0.0
    %1308 = vmatprep.subr.mxu0 0.0
    %1309 = vmatpush2.msra.mxu0 0.0
    %1310 = vmatprep.subr.mxu0 0.0
    %1311 = vmatpush2.msra.mxu0 0.0
    %1312 = vmatprep.subr.mxu0 0.0
    %1313 = vmatpush2.msra.mxu0 0.0
    %1314 = vmatprep.subr.mxu0 0.0
    %1315 = vmatpush2.msra.mxu0 0.0
    %1316 = vmatprep.subr.mxu0 0.0
    %1317 = vmatpush2.msra.mxu0 0.0
    %1318 = vmatprep.subr.mxu0 0.0
    %1319 = vmatpush2.msra.mxu0 0.0
    %1320 = vmatprep.subr.mxu0 0.0
    %1321 = vmatpush2.msra.mxu0 0.0
    %1322 = vmatprep.subr.mxu0 0.0
    %1323 = vmatpush2.msra.mxu0 0.0
    %1324 = vmatprep.subr.mxu0 0.0
    %1325 = vmatpush2.msra.mxu0 0.0
    %1326 = vmatprep.subr.mxu0 0.0
    %1327 = vmatpush2.msra.mxu0 0.0
    %1328 = vmatprep.subr.mxu0 0.0
    %1329 = vmatpush2.msra.mxu0 0.0
    %1330 = vmatprep.subr.mxu0 0.0
    %1331 = vmatpush2.msra.mxu0 0.0
    %1332 = vmatprep.subr.mxu0 0.0
    %1333 = vmatpush2.msra.mxu0 0.0
    %1334 = vmatprep.mubr.f32.mxu0 0.0
    %1335 = vmatmul.mubr.f32.gmra.mxu0 %v1268
    %v1336 = vpop.f32.mrf.mxu0
    %v1337 = vadd.f32 0.0, %v1336
    %v1338 = vpop.f32.mrf.mxu0
    %v1339 = vadd.f32 0.0, %v1338
    %1340 = vdwg.mxu0
    %1341 = vmatprep.subr.mxu0 %v760
    %1342 = vmatpush1.msra.mxu0 %v759
    %1343 = vmatprep.subr.mxu0 %v756
    %1344 = vmatpush1.msra.mxu0 %v755
    %1345 = vmatprep.subr.mxu0 %v752
    %1346 = vmatpush1.msra.mxu0 %v751
    %1347 = vmatprep.subr.mxu0 %v748
    %1348 = vmatpush1.msra.mxu0 %v747
    %1349 = vmatprep.subr.mxu0 %v744
    %1350 = vmatpush1.msra.mxu0 %v743
    %1351 = vmatprep.subr.mxu0 %v740
    %1352 = vmatpush1.msra.mxu0 %v739
    %1353 = vmatprep.subr.mxu0 %v736
    %1354 = vmatpush1.msra.mxu0 %v735
    %1355 = vmatprep.subr.mxu0 %v732
    %1356 = vmatpush1.msra.mxu0 %v731
    %1357 = vmatprep.subr.mxu0 %v728
    %1358 = vmatpush1.msra.mxu0 %v727
    %1359 = vmatprep.subr.mxu0 %v724
    %1360 = vmatpush1.msra.mxu0 %v723
    %1361 = vmatprep.subr.mxu0 %v720
    %1362 = vmatpush1.msra.mxu0 %v719
    %1363 = vmatprep.subr.mxu0 %v716
    %1364 = vmatpush1.msra.mxu0 %v715
    %1365 = vmatprep.subr.mxu0 %v712
    %1366 = vmatpush1.msra.mxu0 %v711
    %1367 = vmatprep.subr.mxu0 %v708
    %1368 = vmatpush1.msra.mxu0 %v707
    %1369 = vmatprep.subr.mxu0 %v704
    %1370 = vmatpush1.msra.mxu0 %v703
    %1371 = vmatprep.subr.mxu0 %v700
    %1372 = vmatpush1.msra.mxu0 %v699
    %1373 = vmatprep.subr.mxu0 0.0
    %1374 = vmatpush2.msra.mxu0 0.0
    %1375 = vmatprep.subr.mxu0 0.0
    %1376 = vmatpush2.msra.mxu0 0.0
    %1377 = vmatprep.subr.mxu0 0.0
    %1378 = vmatpush2.msra.mxu0 0.0
    %1379 = vmatprep.subr.mxu0 0.0
    %1380 = vmatpush2.msra.mxu0 0.0
    %1381 = vmatprep.subr.mxu0 0.0
    %1382 = vmatpush2.msra.mxu0 0.0
    %1383 = vmatprep.subr.mxu0 0.0
    %1384 = vmatpush2.msra.mxu0 0.0
    %1385 = vmatprep.subr.mxu0 0.0
    %1386 = vmatpush2.msra.mxu0 0.0
    %1387 = vmatprep.subr.mxu0 0.0
    %1388 = vmatpush2.msra.mxu0 0.0
    %1389 = vmatprep.subr.mxu0 0.0
    %1390 = vmatpush2.msra.mxu0 0.0
    %1391 = vmatprep.subr.mxu0 0.0
    %1392 = vmatpush2.msra.mxu0 0.0
    %1393 = vmatprep.subr.mxu0 0.0
    %1394 = vmatpush2.msra.mxu0 0.0
    %1395 = vmatprep.subr.mxu0 0.0
    %1396 = vmatpush2.msra.mxu0 0.0
    %1397 = vmatprep.subr.mxu0 0.0
    %1398 = vmatpush2.msra.mxu0 0.0
    %1399 = vmatprep.subr.mxu0 0.0
    %1400 = vmatpush2.msra.mxu0 0.0
    %1401 = vmatprep.subr.mxu0 0.0
    %1402 = vmatpush2.msra.mxu0 0.0
    %1403 = vmatprep.subr.mxu0 0.0
    %1404 = vmatpush2.msra.mxu0 0.0
    %1405 = vmatprep.mubr.f32.mxu0 0.0
    %1406 = vmatmul.mubr.f32.gmra.mxu0 %v1268
    %v1407 = vpop.f32.mrf.mxu0
    %v1408 = vadd.f32 0.0, %v1407
    %v1409 = vpop.f32.mrf.mxu0
    %v1410 = vadd.f32 0.0, %v1409
    %1411 = vdwg.mxu0
    %v1412 = vadd.f32 %v556, %v1337
    %v1413 = vadd.f32 %v558, %v1339
    %v1414 = vadd.f32 %v669, %v1408
    %v1415 = vadd.f32 %v671, %v1410
    %v1416 = vmul.f32 %v1412, 0.5
    %v1417 = vtanh.pop %v1416
    %v1418 = vmul.f32 %v1417, 0.5
    %v1419 = vadd.f32 %v1418, 0.5
    %v1420 = vmul.f32 %v1413, 0.5
    %v1421 = vtanh.pop %v1420
    %v1422 = vmul.f32 %v1421, 0.5
    %v1423 = vadd.f32 %v1422, 0.5
    %v1424 = vtanh.pop %v1414
    %v1425 = vmul.f32 %v1415, 0.5
    %v1426 = vtanh.pop %v1425
    %v1427 = vmul.f32 %v1426, 0.5
    %v1428 = vadd.f32 %v1427, 0.5
    %v1429 = vmul.f32 %v1423, %v1269
    %v1430 = vmul.f32 %v1419, %v1424
    %v1431 = vadd.f32 %v1429, %v1430
    %v1432 = vtanh.pop %v1431
    %v1433 = vmul.f32 %v1428, %v1432
    %vm1434 = vcmp.gt.f32.partialorder %v764, 0.5
    %v1435 = vsel %vm1434, %v1433, %v1268
    %v1436 = vsel %vm1434, %v1431, %v1269
    %1437 = vmatprep.subr.mxu0 %v758
    %1438 = vmatpush1.msra.mxu0 %v757
    %1439 = vmatprep.subr.mxu0 %v754
    %1440 = vmatpush1.msra.mxu0 %v753
    %1441 = vmatprep.subr.mxu0 %v750
    %1442 = vmatpush1.msra.mxu0 %v749
    %1443 = vmatprep.subr.mxu0 %v746
    %1444 = vmatpush1.msra.mxu0 %v745
    %1445 = vmatprep.subr.mxu0 %v742
    %1446 = vmatpush1.msra.mxu0 %v741
    %1447 = vmatprep.subr.mxu0 %v738
    %1448 = vmatpush1.msra.mxu0 %v737
    %1449 = vmatprep.subr.mxu0 %v734
    %1450 = vmatpush1.msra.mxu0 %v733
    %1451 = vmatprep.subr.mxu0 %v730
    %1452 = vmatpush1.msra.mxu0 %v729
    %1453 = vmatprep.subr.mxu0 %v726
    %1454 = vmatpush1.msra.mxu0 %v725
    %1455 = vmatprep.subr.mxu0 %v722
    %1456 = vmatpush1.msra.mxu0 %v721
    %1457 = vmatprep.subr.mxu0 %v718
    %1458 = vmatpush1.msra.mxu0 %v717
    %1459 = vmatprep.subr.mxu0 %v714
    %1460 = vmatpush1.msra.mxu0 %v713
    %1461 = vmatprep.subr.mxu0 %v710
    %1462 = vmatpush1.msra.mxu0 %v709
    %1463 = vmatprep.subr.mxu0 %v706
    %1464 = vmatpush1.msra.mxu0 %v705
    %1465 = vmatprep.subr.mxu0 %v702
    %1466 = vmatpush1.msra.mxu0 %v701
    %1467 = vmatprep.subr.mxu0 %v698
    %1468 = vmatpush1.msra.mxu0 %v697
    %1469 = vmatprep.subr.mxu0 0.0
    %1470 = vmatpush2.msra.mxu0 0.0
    %1471 = vmatprep.subr.mxu0 0.0
    %1472 = vmatpush2.msra.mxu0 0.0
    %1473 = vmatprep.subr.mxu0 0.0
    %1474 = vmatpush2.msra.mxu0 0.0
    %1475 = vmatprep.subr.mxu0 0.0
    %1476 = vmatpush2.msra.mxu0 0.0
    %1477 = vmatprep.subr.mxu0 0.0
    %1478 = vmatpush2.msra.mxu0 0.0
    %1479 = vmatprep.subr.mxu0 0.0
    %1480 = vmatpush2.msra.mxu0 0.0
    %1481 = vmatprep.subr.mxu0 0.0
    %1482 = vmatpush2.msra.mxu0 0.0
    %1483 = vmatprep.subr.mxu0 0.0
    %1484 = vmatpush2.msra.mxu0 0.0
    %1485 = vmatprep.subr.mxu0 0.0
    %1486 = vmatpush2.msra.mxu0 0.0
    %1487 = vmatprep.subr.mxu0 0.0
    %1488 = vmatpush2.msra.mxu0 0.0
    %1489 = vmatprep.subr.mxu0 0.0
    %1490 = vmatpush2.msra.mxu0 0.0
    %1491 = vmatprep.subr.mxu0 0.0
    %1492 = vmatpush2.msra.mxu0 0.0
    %1493 = vmatprep.subr.mxu0 0.0
    %1494 = vmatpush2.msra.mxu0 0.0
    %1495 = vmatprep.subr.mxu0 0.0
    %1496 = vmatpush2.msra.mxu0 0.0
    %1497 = vmatprep.subr.mxu0 0.0
    %1498 = vmatpush2.msra.mxu0 0.0
    %1499 = vmatprep.subr.mxu0 0.0
    %1500 = vmatpush2.msra.mxu0 0.0
    %1501 = vmatprep.mubr.f32.mxu0 0.0
    %1502 = vmatmul.mubr.f32.gmra.mxu0 %v1435
    %v1503 = vpop.f32.mrf.mxu0
    %v1504 = vadd.f32 0.0, %v1503
    %v1505 = vpop.f32.mrf.mxu0
    %v1506 = vadd.f32 0.0, %v1505
    %1507 = vdwg.mxu0
    %1508 = vmatprep.subr.mxu0 %v760
    %1509 = vmatpush1.msra.mxu0 %v759
    %1510 = vmatprep.subr.mxu0 %v756
    %1511 = vmatpush1.msra.mxu0 %v755
    %1512 = vmatprep.subr.mxu0 %v752
    %1513 = vmatpush1.msra.mxu0 %v751
    %1514 = vmatprep.subr.mxu0 %v748
    %1515 = vmatpush1.msra.mxu0 %v747
    %1516 = vmatprep.subr.mxu0 %v744
    %1517 = vmatpush1.msra.mxu0 %v743
    %1518 = vmatprep.subr.mxu0 %v740
    %1519 = vmatpush1.msra.mxu0 %v739
    %1520 = vmatprep.subr.mxu0 %v736
    %1521 = vmatpush1.msra.mxu0 %v735
    %1522 = vmatprep.subr.mxu0 %v732
    %1523 = vmatpush1.msra.mxu0 %v731
    %1524 = vmatprep.subr.mxu0 %v728
    %1525 = vmatpush1.msra.mxu0 %v727
    %1526 = vmatprep.subr.mxu0 %v724
    %1527 = vmatpush1.msra.mxu0 %v723
    %1528 = vmatprep.subr.mxu0 %v720
    %1529 = vmatpush1.msra.mxu0 %v719
    %1530 = vmatprep.subr.mxu0 %v716
    %1531 = vmatpush1.msra.mxu0 %v715
    %1532 = vmatprep.subr.mxu0 %v712
    %1533 = vmatpush1.msra.mxu0 %v711
    %1534 = vmatprep.subr.mxu0 %v708
    %1535 = vmatpush1.msra.mxu0 %v707
    %1536 = vmatprep.subr.mxu0 %v704
    %1537 = vmatpush1.msra.mxu0 %v703
    %1538 = vmatprep.subr.mxu0 %v700
    %1539 = vmatpush1.msra.mxu0 %v699
    %1540 = vmatprep.subr.mxu0 0.0
    %1541 = vmatpush2.msra.mxu0 0.0
    %1542 = vmatprep.subr.mxu0 0.0
    %1543 = vmatpush2.msra.mxu0 0.0
    %1544 = vmatprep.subr.mxu0 0.0
    %1545 = vmatpush2.msra.mxu0 0.0
    %1546 = vmatprep.subr.mxu0 0.0
    %1547 = vmatpush2.msra.mxu0 0.0
    %1548 = vmatprep.subr.mxu0 0.0
    %1549 = vmatpush2.msra.mxu0 0.0
    %1550 = vmatprep.subr.mxu0 0.0
    %1551 = vmatpush2.msra.mxu0 0.0
    %1552 = vmatprep.subr.mxu0 0.0
    %1553 = vmatpush2.msra.mxu0 0.0
    %1554 = vmatprep.subr.mxu0 0.0
    %1555 = vmatpush2.msra.mxu0 0.0
    %1556 = vmatprep.subr.mxu0 0.0
    %1557 = vmatpush2.msra.mxu0 0.0
    %1558 = vmatprep.subr.mxu0 0.0
    %1559 = vmatpush2.msra.mxu0 0.0
    %1560 = vmatprep.subr.mxu0 0.0
    %1561 = vmatpush2.msra.mxu0 0.0
    %1562 = vmatprep.subr.mxu0 0.0
    %1563 = vmatpush2.msra.mxu0 0.0
    %1564 = vmatprep.subr.mxu0 0.0
    %1565 = vmatpush2.msra.mxu0 0.0
    %1566 = vmatprep.subr.mxu0 0.0
    %1567 = vmatpush2.msra.mxu0 0.0
    %1568 = vmatprep.subr.mxu0 0.0
    %1569 = vmatpush2.msra.mxu0 0.0
    %1570 = vmatprep.subr.mxu0 0.0
    %1571 = vmatpush2.msra.mxu0 0.0
    %1572 = vmatprep.mubr.f32.mxu0 0.0
    %1573 = vmatmul.mubr.f32.gmra.mxu0 %v1435
    %v1574 = vpop.f32.mrf.mxu0
    %v1575 = vadd.f32 0.0, %v1574
    %v1576 = vpop.f32.mrf.mxu0
    %v1577 = vadd.f32 0.0, %v1576
    %1578 = vdwg.mxu0
    %v1579 = vadd.f32 %v562, %v1504
    %v1580 = vadd.f32 %v564, %v1506
    %v1581 = vadd.f32 %v675, %v1575
    %v1582 = vadd.f32 %v677, %v1577
    %v1583 = vmul.f32 %v1579, 0.5
    %v1584 = vtanh.pop %v1583
    %v1585 = vmul.f32 %v1584, 0.5
    %v1586 = vadd.f32 %v1585, 0.5
    %v1587 = vmul.f32 %v1580, 0.5
    %v1588 = vtanh.pop %v1587
    %v1589 = vmul.f32 %v1588, 0.5
    %v1590 = vadd.f32 %v1589, 0.5
    %v1591 = vtanh.pop %v1581
    %v1592 = vmul.f32 %v1582, 0.5
    %v1593 = vtanh.pop %v1592
    %v1594 = vmul.f32 %v1593, 0.5
    %v1595 = vadd.f32 %v1594, 0.5
    %v1596 = vmul.f32 %v1590, %v1436
    %v1597 = vmul.f32 %v1586, %v1591
    %v1598 = vadd.f32 %v1596, %v1597
    %v1599 = vtanh.pop %v1598
    %v1600 = vmul.f32 %v1595, %v1599
    %vm1601 = vcmp.gt.f32.partialorder %v765, 0.5
    %v1602 = vsel %vm1601, %v1600, %v1435
    %v1603 = vsel %vm1601, %v1598, %v1436
    %1604 = vmatprep.subr.mxu0 %v758
    %1605 = vmatpush1.msra.mxu0 %v757
    %1606 = vmatprep.subr.mxu0 %v754
    %1607 = vmatpush1.msra.mxu0 %v753
    %1608 = vmatprep.subr.mxu0 %v750
    %1609 = vmatpush1.msra.mxu0 %v749
    %1610 = vmatprep.subr.mxu0 %v746
    %1611 = vmatpush1.msra.mxu0 %v745
    %1612 = vmatprep.subr.mxu0 %v742
    %1613 = vmatpush1.msra.mxu0 %v741
    %1614 = vmatprep.subr.mxu0 %v738
    %1615 = vmatpush1.msra.mxu0 %v737
    %1616 = vmatprep.subr.mxu0 %v734
    %1617 = vmatpush1.msra.mxu0 %v733
    %1618 = vmatprep.subr.mxu0 %v730
    %1619 = vmatpush1.msra.mxu0 %v729
    %1620 = vmatprep.subr.mxu0 %v726
    %1621 = vmatpush1.msra.mxu0 %v725
    %1622 = vmatprep.subr.mxu0 %v722
    %1623 = vmatpush1.msra.mxu0 %v721
    %1624 = vmatprep.subr.mxu0 %v718
    %1625 = vmatpush1.msra.mxu0 %v717
    %1626 = vmatprep.subr.mxu0 %v714
    %1627 = vmatpush1.msra.mxu0 %v713
    %1628 = vmatprep.subr.mxu0 %v710
    %1629 = vmatpush1.msra.mxu0 %v709
    %1630 = vmatprep.subr.mxu0 %v706
    %1631 = vmatpush1.msra.mxu0 %v705
    %1632 = vmatprep.subr.mxu0 %v702
    %1633 = vmatpush1.msra.mxu0 %v701
    %1634 = vmatprep.subr.mxu0 %v698
    %1635 = vmatpush1.msra.mxu0 %v697
    %1636 = vmatprep.subr.mxu0 0.0
    %1637 = vmatpush2.msra.mxu0 0.0
    %1638 = vmatprep.subr.mxu0 0.0
    %1639 = vmatpush2.msra.mxu0 0.0
    %1640 = vmatprep.subr.mxu0 0.0
    %1641 = vmatpush2.msra.mxu0 0.0
    %1642 = vmatprep.subr.mxu0 0.0
    %1643 = vmatpush2.msra.mxu0 0.0
    %1644 = vmatprep.subr.mxu0 0.0
    %1645 = vmatpush2.msra.mxu0 0.0
    %1646 = vmatprep.subr.mxu0 0.0
    %1647 = vmatpush2.msra.mxu0 0.0
    %1648 = vmatprep.subr.mxu0 0.0
    %1649 = vmatpush2.msra.mxu0 0.0
    %1650 = vmatprep.subr.mxu0 0.0
    %1651 = vmatpush2.msra.mxu0 0.0
    %1652 = vmatprep.subr.mxu0 0.0
    %1653 = vmatpush2.msra.mxu0 0.0
    %1654 = vmatprep.subr.mxu0 0.0
    %1655 = vmatpush2.msra.mxu0 0.0
    %1656 = vmatprep.subr.mxu0 0.0
    %1657 = vmatpush2.msra.mxu0 0.0
    %1658 = vmatprep.subr.mxu0 0.0
    %1659 = vmatpush2.msra.mxu0 0.0
    %1660 = vmatprep.subr.mxu0 0.0
    %1661 = vmatpush2.msra.mxu0 0.0
    %1662 = vmatprep.subr.mxu0 0.0
    %1663 = vmatpush2.msra.mxu0 0.0
    %1664 = vmatprep.subr.mxu0 0.0
    %1665 = vmatpush2.msra.mxu0 0.0
    %1666 = vmatprep.subr.mxu0 0.0
    %1667 = vmatpush2.msra.mxu0 0.0
    %1668 = vmatprep.mubr.f32.mxu0 0.0
    %1669 = vmatmul.mubr.f32.gmra.mxu0 %v1602
    %v1670 = vpop.f32.mrf.mxu0
    %v1671 = vadd.f32 0.0, %v1670
    %v1672 = vpop.f32.mrf.mxu0
    %v1673 = vadd.f32 0.0, %v1672
    %1674 = vdwg.mxu0
    %1675 = vmatprep.subr.mxu0 %v760
    %1676 = vmatpush1.msra.mxu0 %v759
    %1677 = vmatprep.subr.mxu0 %v756
    %1678 = vmatpush1.msra.mxu0 %v755
    %1679 = vmatprep.subr.mxu0 %v752
    %1680 = vmatpush1.msra.mxu0 %v751
    %1681 = vmatprep.subr.mxu0 %v748
    %1682 = vmatpush1.msra.mxu0 %v747
    %1683 = vmatprep.subr.mxu0 %v744
    %1684 = vmatpush1.msra.mxu0 %v743
    %1685 = vmatprep.subr.mxu0 %v740
    %1686 = vmatpush1.msra.mxu0 %v739
    %1687 = vmatprep.subr.mxu0 %v736
    %1688 = vmatpush1.msra.mxu0 %v735
    %1689 = vmatprep.subr.mxu0 %v732
    %1690 = vmatpush1.msra.mxu0 %v731
    %1691 = vmatprep.subr.mxu0 %v728
    %1692 = vmatpush1.msra.mxu0 %v727
    %1693 = vmatprep.subr.mxu0 %v724
    %1694 = vmatpush1.msra.mxu0 %v723
    %1695 = vmatprep.subr.mxu0 %v720
    %1696 = vmatpush1.msra.mxu0 %v719
    %1697 = vmatprep.subr.mxu0 %v716
    %1698 = vmatpush1.msra.mxu0 %v715
    %1699 = vmatprep.subr.mxu0 %v712
    %1700 = vmatpush1.msra.mxu0 %v711
    %1701 = vmatprep.subr.mxu0 %v708
    %1702 = vmatpush1.msra.mxu0 %v707
    %1703 = vmatprep.subr.mxu0 %v704
    %1704 = vmatpush1.msra.mxu0 %v703
    %1705 = vmatprep.subr.mxu0 %v700
    %1706 = vmatpush1.msra.mxu0 %v699
    %1707 = vmatprep.subr.mxu0 0.0
    %1708 = vmatpush2.msra.mxu0 0.0
    %1709 = vmatprep.subr.mxu0 0.0
    %1710 = vmatpush2.msra.mxu0 0.0
    %1711 = vmatprep.subr.mxu0 0.0
    %1712 = vmatpush2.msra.mxu0 0.0
    %1713 = vmatprep.subr.mxu0 0.0
    %1714 = vmatpush2.msra.mxu0 0.0
    %1715 = vmatprep.subr.mxu0 0.0
    %1716 = vmatpush2.msra.mxu0 0.0
    %1717 = vmatprep.subr.mxu0 0.0
    %1718 = vmatpush2.msra.mxu0 0.0
    %1719 = vmatprep.subr.mxu0 0.0
    %1720 = vmatpush2.msra.mxu0 0.0
    %1721 = vmatprep.subr.mxu0 0.0
    %1722 = vmatpush2.msra.mxu0 0.0
    %1723 = vmatprep.subr.mxu0 0.0
    %1724 = vmatpush2.msra.mxu0 0.0
    %1725 = vmatprep.subr.mxu0 0.0
    %1726 = vmatpush2.msra.mxu0 0.0
    %1727 = vmatprep.subr.mxu0 0.0
    %1728 = vmatpush2.msra.mxu0 0.0
    %1729 = vmatprep.subr.mxu0 0.0
    %1730 = vmatpush2.msra.mxu0 0.0
    %1731 = vmatprep.subr.mxu0 0.0
    %1732 = vmatpush2.msra.mxu0 0.0
    %1733 = vmatprep.subr.mxu0 0.0
    %1734 = vmatpush2.msra.mxu0 0.0
    %1735 = vmatprep.subr.mxu0 0.0
    %1736 = vmatpush2.msra.mxu0 0.0
    %1737 = vmatprep.subr.mxu0 0.0
    %1738 = vmatpush2.msra.mxu0 0.0
    %1739 = vmatprep.mubr.f32.mxu0 0.0
    %1740 = vmatmul.mubr.f32.gmra.mxu0 %v1602
    %v1741 = vpop.f32.mrf.mxu0
    %v1742 = vadd.f32 0.0, %v1741
    %v1743 = vpop.f32.mrf.mxu0
    %v1744 = vadd.f32 0.0, %v1743
    %1745 = vdwg.mxu0
    %v1746 = vadd.f32 %v568, %v1671
    %v1747 = vadd.f32 %v570, %v1673
    %v1748 = vadd.f32 %v681, %v1742
    %v1749 = vadd.f32 %v683, %v1744
    %v1750 = vmul.f32 %v1746, 0.5
    %v1751 = vtanh.pop %v1750
    %v1752 = vmul.f32 %v1751, 0.5
    %v1753 = vadd.f32 %v1752, 0.5
    %v1754 = vmul.f32 %v1747, 0.5
    %v1755 = vtanh.pop %v1754
    %v1756 = vmul.f32 %v1755, 0.5
    %v1757 = vadd.f32 %v1756, 0.5
    %v1758 = vtanh.pop %v1748
    %v1759 = vmul.f32 %v1749, 0.5
    %v1760 = vtanh.pop %v1759
    %v1761 = vmul.f32 %v1760, 0.5
    %v1762 = vadd.f32 %v1761, 0.5
    %v1763 = vmul.f32 %v1757, %v1603
    %v1764 = vmul.f32 %v1753, %v1758
    %v1765 = vadd.f32 %v1763, %v1764
    %v1766 = vtanh.pop %v1765
    %v1767 = vmul.f32 %v1762, %v1766
    %vm1768 = vcmp.gt.f32.partialorder %v766, 0.5
    %v1769 = vsel %vm1768, %v1767, %v1602
    %v1770 = vsel %vm1768, %v1765, %v1603
    %1771 = vmatprep.subr.mxu0 %v758
    %1772 = vmatpush1.msra.mxu0 %v757
    %1773 = vmatprep.subr.mxu0 %v754
    %1774 = vmatpush1.msra.mxu0 %v753
    %1775 = vmatprep.subr.mxu0 %v750
    %1776 = vmatpush1.msra.mxu0 %v749
    %1777 = vmatprep.subr.mxu0 %v746
    %1778 = vmatpush1.msra.mxu0 %v745
    %1779 = vmatprep.subr.mxu0 %v742
    %1780 = vmatpush1.msra.mxu0 %v741
    %1781 = vmatprep.subr.mxu0 %v738
    %1782 = vmatpush1.msra.mxu0 %v737
    %1783 = vmatprep.subr.mxu0 %v734
    %1784 = vmatpush1.msra.mxu0 %v733
    %1785 = vmatprep.subr.mxu0 %v730
    %1786 = vmatpush1.msra.mxu0 %v729
    %1787 = vmatprep.subr.mxu0 %v726
    %1788 = vmatpush1.msra.mxu0 %v725
    %1789 = vmatprep.subr.mxu0 %v722
    %1790 = vmatpush1.msra.mxu0 %v721
    %1791 = vmatprep.subr.mxu0 %v718
    %1792 = vmatpush1.msra.mxu0 %v717
    %1793 = vmatprep.subr.mxu0 %v714
    %1794 = vmatpush1.msra.mxu0 %v713
    %1795 = vmatprep.subr.mxu0 %v710
    %1796 = vmatpush1.msra.mxu0 %v709
    %1797 = vmatprep.subr.mxu0 %v706
    %1798 = vmatpush1.msra.mxu0 %v705
    %1799 = vmatprep.subr.mxu0 %v702
    %1800 = vmatpush1.msra.mxu0 %v701
    %1801 = vmatprep.subr.mxu0 %v698
    %1802 = vmatpush1.msra.mxu0 %v697
    %1803 = vmatprep.subr.mxu0 0.0
    %1804 = vmatpush2.msra.mxu0 0.0
    %1805 = vmatprep.subr.mxu0 0.0
    %1806 = vmatpush2.msra.mxu0 0.0
    %1807 = vmatprep.subr.mxu0 0.0
    %1808 = vmatpush2.msra.mxu0 0.0
    %1809 = vmatprep.subr.mxu0 0.0
    %1810 = vmatpush2.msra.mxu0 0.0
    %1811 = vmatprep.subr.mxu0 0.0
    %1812 = vmatpush2.msra.mxu0 0.0
    %1813 = vmatprep.subr.mxu0 0.0
    %1814 = vmatpush2.msra.mxu0 0.0
    %1815 = vmatprep.subr.mxu0 0.0
    %1816 = vmatpush2.msra.mxu0 0.0
    %1817 = vmatprep.subr.mxu0 0.0
    %1818 = vmatpush2.msra.mxu0 0.0
    %1819 = vmatprep.subr.mxu0 0.0
    %1820 = vmatpush2.msra.mxu0 0.0
    %1821 = vmatprep.subr.mxu0 0.0
    %1822 = vmatpush2.msra.mxu0 0.0
    %1823 = vmatprep.subr.mxu0 0.0
    %1824 = vmatpush2.msra.mxu0 0.0
    %1825 = vmatprep.subr.mxu0 0.0
    %1826 = vmatpush2.msra.mxu0 0.0
    %1827 = vmatprep.subr.mxu0 0.0
    %1828 = vmatpush2.msra.mxu0 0.0
    %1829 = vmatprep.subr.mxu0 0.0
    %1830 = vmatpush2.msra.mxu0 0.0
    %1831 = vmatprep.subr.mxu0 0.0
    %1832 = vmatpush2.msra.mxu0 0.0
    %1833 = vmatprep.subr.mxu0 0.0
    %1834 = vmatpush2.msra.mxu0 0.0
    %1835 = vmatprep.mubr.f32.mxu0 0.0
    %1836 = vmatmul.mubr.f32.gmra.mxu0 %v1769
    %v1837 = vpop.f32.mrf.mxu0
    %v1838 = vadd.f32 0.0, %v1837
    %v1839 = vpop.f32.mrf.mxu0
    %v1840 = vadd.f32 0.0, %v1839
    %1841 = vdwg.mxu0
    %1842 = vmatprep.subr.mxu0 %v760
    %1843 = vmatpush1.msra.mxu0 %v759
    %1844 = vmatprep.subr.mxu0 %v756
    %1845 = vmatpush1.msra.mxu0 %v755
    %1846 = vmatprep.subr.mxu0 %v752
    %1847 = vmatpush1.msra.mxu0 %v751
    %1848 = vmatprep.subr.mxu0 %v748
    %1849 = vmatpush1.msra.mxu0 %v747
    %1850 = vmatprep.subr.mxu0 %v744
    %1851 = vmatpush1.msra.mxu0 %v743
    %1852 = vmatprep.subr.mxu0 %v740
    %1853 = vmatpush1.msra.mxu0 %v739
    %1854 = vmatprep.subr.mxu0 %v736
    %1855 = vmatpush1.msra.mxu0 %v735
    %1856 = vmatprep.subr.mxu0 %v732
    %1857 = vmatpush1.msra.mxu0 %v731
    %1858 = vmatprep.subr.mxu0 %v728
    %1859 = vmatpush1.msra.mxu0 %v727
    %1860 = vmatprep.subr.mxu0 %v724
    %1861 = vmatpush1.msra.mxu0 %v723
    %1862 = vmatprep.subr.mxu0 %v720
    %1863 = vmatpush1.msra.mxu0 %v719
    %1864 = vmatprep.subr.mxu0 %v716
    %1865 = vmatpush1.msra.mxu0 %v715
    %1866 = vmatprep.subr.mxu0 %v712
    %1867 = vmatpush1.msra.mxu0 %v711
    %1868 = vmatprep.subr.mxu0 %v708
    %1869 = vmatpush1.msra.mxu0 %v707
    %1870 = vmatprep.subr.mxu0 %v704
    %1871 = vmatpush1.msra.mxu0 %v703
    %1872 = vmatprep.subr.mxu0 %v700
    %1873 = vmatpush1.msra.mxu0 %v699
    %1874 = vmatprep.subr.mxu0 0.0
    %1875 = vmatpush2.msra.mxu0 0.0
    %1876 = vmatprep.subr.mxu0 0.0
    %1877 = vmatpush2.msra.mxu0 0.0
    %1878 = vmatprep.subr.mxu0 0.0
    %1879 = vmatpush2.msra.mxu0 0.0
    %1880 = vmatprep.subr.mxu0 0.0
    %1881 = vmatpush2.msra.mxu0 0.0
    %1882 = vmatprep.subr.mxu0 0.0
    %1883 = vmatpush2.msra.mxu0 0.0
    %1884 = vmatprep.subr.mxu0 0.0
    %1885 = vmatpush2.msra.mxu0 0.0
    %1886 = vmatprep.subr.mxu0 0.0
    %1887 = vmatpush2.msra.mxu0 0.0
    %1888 = vmatprep.subr.mxu0 0.0
    %1889 = vmatpush2.msra.mxu0 0.0
    %1890 = vmatprep.subr.mxu0 0.0
    %1891 = vmatpush2.msra.mxu0 0.0
    %1892 = vmatprep.subr.mxu0 0.0
    %1893 = vmatpush2.msra.mxu0 0.0
    %1894 = vmatprep.subr.mxu0 0.0
    %1895 = vmatpush2.msra.mxu0 0.0
    %1896 = vmatprep.subr.mxu0 0.0
    %1897 = vmatpush2.msra.mxu0 0.0
    %1898 = vmatprep.subr.mxu0 0.0
    %1899 = vmatpush2.msra.mxu0 0.0
    %1900 = vmatprep.subr.mxu0 0.0
    %1901 = vmatpush2.msra.mxu0 0.0
    %1902 = vmatprep.subr.mxu0 0.0
    %1903 = vmatpush2.msra.mxu0 0.0
    %1904 = vmatprep.subr.mxu0 0.0
    %1905 = vmatpush2.msra.mxu0 0.0
    %1906 = vmatprep.mubr.f32.mxu0 0.0
    %1907 = vmatmul.mubr.f32.gmra.mxu0 %v1769
    %v1908 = vpop.f32.mrf.mxu0
    %v1909 = vadd.f32 0.0, %v1908
    %v1910 = vpop.f32.mrf.mxu0
    %v1911 = vadd.f32 0.0, %v1910
    %1912 = vdwg.mxu0
    %v1913 = vadd.f32 %v574, %v1838
    %v1914 = vadd.f32 %v576, %v1840
    %v1915 = vadd.f32 %v687, %v1909
    %v1916 = vadd.f32 %v689, %v1911
    %v1917 = vmul.f32 %v1913, 0.5
    %v1918 = vtanh.pop %v1917
    %v1919 = vmul.f32 %v1918, 0.5
    %v1920 = vadd.f32 %v1919, 0.5
    %v1921 = vmul.f32 %v1914, 0.5
    %v1922 = vtanh.pop %v1921
    %v1923 = vmul.f32 %v1922, 0.5
    %v1924 = vadd.f32 %v1923, 0.5
    %v1925 = vtanh.pop %v1915
    %v1926 = vmul.f32 %v1916, 0.5
    %v1927 = vtanh.pop %v1926
    %v1928 = vmul.f32 %v1927, 0.5
    %v1929 = vadd.f32 %v1928, 0.5
    %v1930 = vmul.f32 %v1924, %v1770
    %v1931 = vmul.f32 %v1920, %v1925
    %v1932 = vadd.f32 %v1930, %v1931
    %v1933 = vtanh.pop %v1932
    %v1934 = vmul.f32 %v1929, %v1933
    %vm1935 = vcmp.gt.f32.partialorder %v767, 0.5
    %v1936 = vsel %vm1935, %v1934, %v1769
    %v1937 = vsel %vm1935, %v1932, %v1770
    %1938 = vmatprep.subr.mxu0 %v758
    %1939 = vmatpush1.msra.mxu0 %v757
    %1940 = vmatprep.subr.mxu0 %v754
    %1941 = vmatpush1.msra.mxu0 %v753
    %1942 = vmatprep.subr.mxu0 %v750
    %1943 = vmatpush1.msra.mxu0 %v749
    %1944 = vmatprep.subr.mxu0 %v746
    %1945 = vmatpush1.msra.mxu0 %v745
    %1946 = vmatprep.subr.mxu0 %v742
    %1947 = vmatpush1.msra.mxu0 %v741
    %1948 = vmatprep.subr.mxu0 %v738
    %1949 = vmatpush1.msra.mxu0 %v737
    %1950 = vmatprep.subr.mxu0 %v734
    %1951 = vmatpush1.msra.mxu0 %v733
    %1952 = vmatprep.subr.mxu0 %v730
    %1953 = vmatpush1.msra.mxu0 %v729
    %1954 = vmatprep.subr.mxu0 %v726
    %1955 = vmatpush1.msra.mxu0 %v725
    %1956 = vmatprep.subr.mxu0 %v722
    %1957 = vmatpush1.msra.mxu0 %v721
    %1958 = vmatprep.subr.mxu0 %v718
    %1959 = vmatpush1.msra.mxu0 %v717
    %1960 = vmatprep.subr.mxu0 %v714
    %1961 = vmatpush1.msra.mxu0 %v713
    %1962 = vmatprep.subr.mxu0 %v710
    %1963 = vmatpush1.msra.mxu0 %v709
    %1964 = vmatprep.subr.mxu0 %v706
    %1965 = vmatpush1.msra.mxu0 %v705
    %1966 = vmatprep.subr.mxu0 %v702
    %1967 = vmatpush1.msra.mxu0 %v701
    %1968 = vmatprep.subr.mxu0 %v698
    %1969 = vmatpush1.msra.mxu0 %v697
    %1970 = vmatprep.subr.mxu0 0.0
    %1971 = vmatpush2.msra.mxu0 0.0
    %1972 = vmatprep.subr.mxu0 0.0
    %1973 = vmatpush2.msra.mxu0 0.0
    %1974 = vmatprep.subr.mxu0 0.0
    %1975 = vmatpush2.msra.mxu0 0.0
    %1976 = vmatprep.subr.mxu0 0.0
    %1977 = vmatpush2.msra.mxu0 0.0
    %1978 = vmatprep.subr.mxu0 0.0
    %1979 = vmatpush2.msra.mxu0 0.0
    %1980 = vmatprep.subr.mxu0 0.0
    %1981 = vmatpush2.msra.mxu0 0.0
    %1982 = vmatprep.subr.mxu0 0.0
    %1983 = vmatpush2.msra.mxu0 0.0
    %1984 = vmatprep.subr.mxu0 0.0
    %1985 = vmatpush2.msra.mxu0 0.0
    %1986 = vmatprep.subr.mxu0 0.0
    %1987 = vmatpush2.msra.mxu0 0.0
    %1988 = vmatprep.subr.mxu0 0.0
    %1989 = vmatpush2.msra.mxu0 0.0
    %1990 = vmatprep.subr.mxu0 0.0
    %1991 = vmatpush2.msra.mxu0 0.0
    %1992 = vmatprep.subr.mxu0 0.0
    %1993 = vmatpush2.msra.mxu0 0.0
    %1994 = vmatprep.subr.mxu0 0.0
    %1995 = vmatpush2.msra.mxu0 0.0
    %1996 = vmatprep.subr.mxu0 0.0
    %1997 = vmatpush2.msra.mxu0 0.0
    %1998 = vmatprep.subr.mxu0 0.0
    %1999 = vmatpush2.msra.mxu0 0.0
    %2000 = vmatprep.subr.mxu0 0.0
    %2001 = vmatpush2.msra.mxu0 0.0
    %2002 = vmatprep.mubr.f32.mxu0 0.0
    %2003 = vmatmul.mubr.f32.gmra.mxu0 %v1936
    %v2004 = vpop.f32.mrf.mxu0
    %v2005 = vadd.f32 0.0, %v2004
    %v2006 = vpop.f32.mrf.mxu0
    %v2007 = vadd.f32 0.0, %v2006
    %2008 = vdwg.mxu0
    %2009 = vmatprep.subr.mxu0 %v760
    %2010 = vmatpush1.msra.mxu0 %v759
    %2011 = vmatprep.subr.mxu0 %v756
    %2012 = vmatpush1.msra.mxu0 %v755
    %2013 = vmatprep.subr.mxu0 %v752
    %2014 = vmatpush1.msra.mxu0 %v751
    %2015 = vmatprep.subr.mxu0 %v748
    %2016 = vmatpush1.msra.mxu0 %v747
    %2017 = vmatprep.subr.mxu0 %v744
    %2018 = vmatpush1.msra.mxu0 %v743
    %2019 = vmatprep.subr.mxu0 %v740
    %2020 = vmatpush1.msra.mxu0 %v739
    %2021 = vmatprep.subr.mxu0 %v736
    %2022 = vmatpush1.msra.mxu0 %v735
    %2023 = vmatprep.subr.mxu0 %v732
    %2024 = vmatpush1.msra.mxu0 %v731
    %2025 = vmatprep.subr.mxu0 %v728
    %2026 = vmatpush1.msra.mxu0 %v727
    %2027 = vmatprep.subr.mxu0 %v724
    %2028 = vmatpush1.msra.mxu0 %v723
    %2029 = vmatprep.subr.mxu0 %v720
    %2030 = vmatpush1.msra.mxu0 %v719
    %2031 = vmatprep.subr.mxu0 %v716
    %2032 = vmatpush1.msra.mxu0 %v715
    %2033 = vmatprep.subr.mxu0 %v712
    %2034 = vmatpush1.msra.mxu0 %v711
    %2035 = vmatprep.subr.mxu0 %v708
    %2036 = vmatpush1.msra.mxu0 %v707
    %2037 = vmatprep.subr.mxu0 %v704
    %2038 = vmatpush1.msra.mxu0 %v703
    %2039 = vmatprep.subr.mxu0 %v700
    %2040 = vmatpush1.msra.mxu0 %v699
    %2041 = vmatprep.subr.mxu0 0.0
    %2042 = vmatpush2.msra.mxu0 0.0
    %2043 = vmatprep.subr.mxu0 0.0
    %2044 = vmatpush2.msra.mxu0 0.0
    %2045 = vmatprep.subr.mxu0 0.0
    %2046 = vmatpush2.msra.mxu0 0.0
    %2047 = vmatprep.subr.mxu0 0.0
    %2048 = vmatpush2.msra.mxu0 0.0
    %2049 = vmatprep.subr.mxu0 0.0
    %2050 = vmatpush2.msra.mxu0 0.0
    %2051 = vmatprep.subr.mxu0 0.0
    %2052 = vmatpush2.msra.mxu0 0.0
    %2053 = vmatprep.subr.mxu0 0.0
    %2054 = vmatpush2.msra.mxu0 0.0
    %2055 = vmatprep.subr.mxu0 0.0
    %2056 = vmatpush2.msra.mxu0 0.0
    %2057 = vmatprep.subr.mxu0 0.0
    %2058 = vmatpush2.msra.mxu0 0.0
    %2059 = vmatprep.subr.mxu0 0.0
    %2060 = vmatpush2.msra.mxu0 0.0
    %2061 = vmatprep.subr.mxu0 0.0
    %2062 = vmatpush2.msra.mxu0 0.0
    %2063 = vmatprep.subr.mxu0 0.0
    %2064 = vmatpush2.msra.mxu0 0.0
    %2065 = vmatprep.subr.mxu0 0.0
    %2066 = vmatpush2.msra.mxu0 0.0
    %2067 = vmatprep.subr.mxu0 0.0
    %2068 = vmatpush2.msra.mxu0 0.0
    %2069 = vmatprep.subr.mxu0 0.0
    %2070 = vmatpush2.msra.mxu0 0.0
    %2071 = vmatprep.subr.mxu0 0.0
    %2072 = vmatpush2.msra.mxu0 0.0
    %2073 = vmatprep.mubr.f32.mxu0 0.0
    %2074 = vmatmul.mubr.f32.gmra.mxu0 %v1936
    %v2075 = vpop.f32.mrf.mxu0
    %v2076 = vadd.f32 0.0, %v2075
    %v2077 = vpop.f32.mrf.mxu0
    %v2078 = vadd.f32 0.0, %v2077
    %2079 = vdwg.mxu0
    %v2080 = vadd.f32 %v580, %v2005
    %v2081 = vadd.f32 %v582, %v2007
    %v2082 = vadd.f32 %v693, %v2076
    %v2083 = vadd.f32 %v695, %v2078
    %v2084 = vmul.f32 %v2080, 0.5
    %v2085 = vtanh.pop %v2084
    %v2086 = vmul.f32 %v2085, 0.5
    %v2087 = vadd.f32 %v2086, 0.5
    %v2088 = vmul.f32 %v2081, 0.5
    %v2089 = vtanh.pop %v2088
    %v2090 = vmul.f32 %v2089, 0.5
    %v2091 = vadd.f32 %v2090, 0.5
    %v2092 = vtanh.pop %v2082
    %v2093 = vmul.f32 %v2083, 0.5
    %v2094 = vtanh.pop %v2093
    %v2095 = vmul.f32 %v2094, 0.5
    %v2096 = vadd.f32 %v2095, 0.5
    %v2097 = vmul.f32 %v2091, %v1937
    %v2098 = vmul.f32 %v2087, %v2092
    %v2099 = vadd.f32 %v2097, %v2098
    %v2100 = vtanh.pop %v2099
    %v2101 = vmul.f32 %v2096, %v2100
    %vm2102 = vcmp.gt.f32.partialorder %v768, 0.5
    %v2103 = vsel %vm2102, %v2101, %v1936
    %v2104 = vld [vmem:[%s2] sm:$0xff]
    %v2105 = vld [vmem:[%s5] sm:$0xff]
    %v2106 = vld [vmem:[%s5 + $0x8] sm:$0xff]
    %v2107 = vld [vmem:[%s5 + $0x10] sm:$0xff]
    %v2108 = vld [vmem:[%s5 + $0x18] sm:$0xff]
    %v2109 = vld [vmem:[%s5 + $0x20] sm:$0xff]
    %v2110 = vld [vmem:[%s5 + $0x28] sm:$0xff]
    %v2111 = vld [vmem:[%s5 + $0x30] sm:$0xff]
    %v2112 = vld [vmem:[%s5 + $0x38] sm:$0xff]
    %v2113 = vld [vmem:[%s5 + $0x40] sm:$0xff]
    %v2114 = vld [vmem:[%s5 + $0x48] sm:$0xff]
    %v2115 = vld [vmem:[%s5 + $0x50] sm:$0xff]
    %v2116 = vld [vmem:[%s5 + $0x58] sm:$0x1]
    %vm2117 = vcmask 728064
    %v2119 = vsel %vm2117, %v2104, 0
    %v2122 = vsel %vm458, %v2116, 0
    %2124 = vmatprep.subr.mxu0 0.0
    %2125 = vmatpush1.msra.mxu0 0.0
    %2126 = vmatprep.subr.mxu0 0.0
    %2127 = vmatpush1.msra.mxu0 0.0
    %2128 = vmatprep.subr.mxu0 0.0
    %2129 = vmatpush1.msra.mxu0 0.0
    %2130 = vmatprep.subr.mxu0 0.0
    %2131 = vmatpush1.msra.mxu0 0.0
    %2132 = vmatprep.subr.mxu0 0.0
    %2133 = vmatpush1.msra.mxu0 %v2122
    %2134 = vmatprep.subr.mxu0 0.0
    %2135 = vmatpush1.msra.mxu0 %v2115
    %2136 = vmatprep.subr.mxu0 0.0
    %2137 = vmatpush1.msra.mxu0 %v2114
    %2138 = vmatprep.subr.mxu0 0.0
    %2139 = vmatpush1.msra.mxu0 %v2113
    %2140 = vmatprep.subr.mxu0 0.0
    %2141 = vmatpush1.msra.mxu0 %v2112
    %2142 = vmatprep.subr.mxu0 0.0
    %2143 = vmatpush1.msra.mxu0 %v2111
    %2144 = vmatprep.subr.mxu0 0.0
    %2145 = vmatpush1.msra.mxu0 %v2110
    %2146 = vmatprep.subr.mxu0 0.0
    %2147 = vmatpush1.msra.mxu0 %v2109
    %2148 = vmatprep.subr.mxu0 0.0
    %2149 = vmatpush1.msra.mxu0 %v2108
    %2150 = vmatprep.subr.mxu0 0.0
    %2151 = vmatpush1.msra.mxu0 %v2107
    %2152 = vmatprep.subr.mxu0 0.0
    %2153 = vmatpush1.msra.mxu0 %v2106
    %2154 = vmatprep.subr.mxu0 0.0
    %2155 = vmatpush1.msra.mxu0 %v2105
    %2156 = vmatprep.subr.mxu0 0.0
    %2157 = vmatpush2.msra.mxu0 0.0
    %2158 = vmatprep.subr.mxu0 0.0
    %2159 = vmatpush2.msra.mxu0 0.0
    %2160 = vmatprep.subr.mxu0 0.0
    %2161 = vmatpush2.msra.mxu0 0.0
    %2162 = vmatprep.subr.mxu0 0.0
    %2163 = vmatpush2.msra.mxu0 0.0
    %2164 = vmatprep.subr.mxu0 0.0
    %2165 = vmatpush2.msra.mxu0 0.0
    %2166 = vmatprep.subr.mxu0 0.0
    %2167 = vmatpush2.msra.mxu0 0.0
    %2168 = vmatprep.subr.mxu0 0.0
    %2169 = vmatpush2.msra.mxu0 0.0
    %2170 = vmatprep.subr.mxu0 0.0
    %2171 = vmatpush2.msra.mxu0 0.0
    %2172 = vmatprep.subr.mxu0 0.0
    %2173 = vmatpush2.msra.mxu0 0.0
    %2174 = vmatprep.subr.mxu0 0.0
    %2175 = vmatpush2.msra.mxu0 0.0
    %2176 = vmatprep.subr.mxu0 0.0
    %2177 = vmatpush2.msra.mxu0 0.0
    %2178 = vmatprep.subr.mxu0 0.0
    %2179 = vmatpush2.msra.mxu0 0.0
    %2180 = vmatprep.subr.mxu0 0.0
    %2181 = vmatpush2.msra.mxu0 0.0
    %2182 = vmatprep.subr.mxu0 0.0
    %2183 = vmatpush2.msra.mxu0 0.0
    %2184 = vmatprep.subr.mxu0 0.0
    %2185 = vmatpush2.msra.mxu0 0.0
    %2186 = vmatprep.subr.mxu0 0.0
    %2187 = vmatpush2.msra.mxu0 0.0
    %2188 = vmatprep.mubr.f32.mxu0 0.0
    %2189 = vmatmul.mubr.f32.gmra.mxu0 %v2119
    %v2190 = vpop.f32.mrf.mxu0
    %v2191 = vadd.f32 0.0, %v2190
    %v2192 = vpop.f32.mrf.mxu0
    %2193 = vdwg.mxu0
    %v2194 = vmax.f32 %v2191, 0.0
    %s2195 = smul.u32 8, 16
    %s2196 = smul.u32 %s2195, 8
    %s2197 = sshll.u32 %s2196, 4
    %2198 = dma.done [#allocation5], %s2197
    %s2199 = smul.u32 8, 8
    %s2200 = smul.u32 %s2199, 8
    %s2201 = sshll.u32 %s2200, 4
    %2202 = dma.done %s357, %s2201
    %s2203 = smul.u32 1024, 1
    %s2204 = sshll.u32 %s2203, 4
    %2205 = dma.done %s369, %s2204
    %v2206 = vld [vmem:[#allocation2] sm:$0xff]
    %v2207 = vld [vmem:[#allocation2 + $0x8] sm:$0xff]
    %v2208 = vld [vmem:[#allocation2 + $0x10] sm:$0xff]
    %v2209 = vld [vmem:[#allocation2 + $0x18] sm:$0xff]
    %v2210 = vld [vmem:[#allocation2 + $0x20] sm:$0xff]
    %v2211 = vld [vmem:[#allocation2 + $0x28] sm:$0xff]
    %v2212 = vld [vmem:[#allocation2 + $0x30] sm:$0xff]
    %v2213 = vld [vmem:[#allocation2 + $0x38] sm:$0xff]
    %v2214 = vld [vmem:[#allocation2 + $0x40] sm:$0xff]
    %v2215 = vld [vmem:[#allocation2 + $0x48] sm:$0xff]
    %v2216 = vld [vmem:[#allocation2 + $0x50] sm:$0xff]
    %v2217 = vld [vmem:[#allocation2 + $0x58] sm:$0xff]
    %v2218 = vld [vmem:[#allocation2 + $0x60] sm:$0xff]
    %v2219 = vld [vmem:[#allocation2 + $0x68] sm:$0xff]
    %v2220 = vld [vmem:[#allocation2 + $0x70] sm:$0xff]
    %v2221 = vld [vmem:[#allocation2 + $0x78] sm:$0xff]
    %v2222 = vld [vmem:[#allocation2 + $0x80] sm:$0xff]
    %v2223 = vld [vmem:[#allocation2 + $0x88] sm:$0xff]
    %v2224 = vld [vmem:[#allocation2 + $0x90] sm:$0xff]
    %v2225 = vld [vmem:[#allocation2 + $0x98] sm:$0xff]
    %v2226 = vld [vmem:[#allocation2 + $0xa0] sm:$0xff]
    %v2227 = vld [vmem:[#allocation2 + $0xa8] sm:$0xff]
    %v2228 = vld [vmem:[#allocation2 + $0xb0] sm:$0xff]
    %v2229 = vld [vmem:[#allocation2 + $0xb8] sm:$0xff]
    %v2230 = vld [vmem:[#allocation2 + $0xc0] sm:$0xff]
    %v2231 = vld [vmem:[#allocation2 + $0xc8] sm:$0xff]
    %v2232 = vld [vmem:[#allocation2 + $0xd0] sm:$0xff]
    %v2233 = vld [vmem:[#allocation2 + $0xd8] sm:$0xff]
    %v2234 = vld [vmem:[#allocation2 + $0xe0] sm:$0xff]
    %v2235 = vld [vmem:[#allocation2 + $0xe8] sm:$0xff]
    %v2236 = vld [vmem:[#allocation2 + $0xf0] sm:$0xff]
    %v2237 = vld [vmem:[#allocation2 + $0xf8] sm:$0xff]
    %v2238 = vld [vmem:[#allocation2 + $0x100] sm:$0xff]
    %v2239 = vld [vmem:[#allocation2 + $0x108] sm:$0xff]
    %v2240 = vld [vmem:[#allocation2 + $0x110] sm:$0xff]
    %v2241 = vld [vmem:[#allocation2 + $0x118] sm:$0xff]
    %v2242 = vld [vmem:[#allocation2 + $0x120] sm:$0xff]
    %v2243 = vld [vmem:[#allocation2 + $0x128] sm:$0xff]
    %v2244 = vld [vmem:[#allocation2 + $0x130] sm:$0xff]
    %v2245 = vld [vmem:[#allocation2 + $0x138] sm:$0xff]
    %v2246 = vld [vmem:[#allocation2 + $0x140] sm:$0xff]
    %v2247 = vld [vmem:[#allocation2 + $0x148] sm:$0xff]
    %v2248 = vld [vmem:[#allocation2 + $0x150] sm:$0xff]
    %v2249 = vld [vmem:[#allocation2 + $0x158] sm:$0xff]
    %v2250 = vld [vmem:[#allocation2 + $0x160] sm:$0xff]
    %v2251 = vld [vmem:[#allocation2 + $0x168] sm:$0xff]
    %v2252 = vld [vmem:[#allocation2 + $0x170] sm:$0xff]
    %v2253 = vld [vmem:[#allocation2 + $0x178] sm:$0xff]
    %v2254 = vld [vmem:[#allocation2 + $0x180] sm:$0xff]
    %v2255 = vld [vmem:[#allocation2 + $0x188] sm:$0xff]
    %v2256 = vld [vmem:[#allocation2 + $0x190] sm:$0xff]
    %v2257 = vld [vmem:[#allocation2 + $0x198] sm:$0xff]
    %v2258 = vld [vmem:[#allocation2 + $0x1a0] sm:$0xff]
    %v2259 = vld [vmem:[#allocation2 + $0x1a8] sm:$0xff]
    %v2260 = vld [vmem:[#allocation2 + $0x1b0] sm:$0xff]
    %v2261 = vld [vmem:[#allocation2 + $0x1b8] sm:$0xff]
    %v2262 = vld [vmem:[#allocation2 + $0x1c0] sm:$0xff]
    %v2263 = vld [vmem:[#allocation2 + $0x1c8] sm:$0xff]
    %v2264 = vld [vmem:[#allocation2 + $0x1d0] sm:$0xff]
    %v2265 = vld [vmem:[#allocation2 + $0x1d8] sm:$0xff]
    %v2266 = vld [vmem:[#allocation2 + $0x1e0] sm:$0xff]
    %v2267 = vld [vmem:[#allocation2 + $0x1e8] sm:$0xff]
    %v2268 = vld [vmem:[#allocation2 + $0x1f0] sm:$0xff]
    %v2269 = vld [vmem:[#allocation2 + $0x1f8] sm:$0xff]
    %v2270 = vld [vmem:[#allocation2 + $0x200] sm:$0xff]
    %v2271 = vld [vmem:[#allocation2 + $0x208] sm:$0xff]
    %v2272 = vld [vmem:[#allocation2 + $0x210] sm:$0xff]
    %v2273 = vld [vmem:[#allocation2 + $0x218] sm:$0xff]
    %v2274 = vld [vmem:[#allocation2 + $0x220] sm:$0xff]
    %v2275 = vld [vmem:[#allocation2 + $0x228] sm:$0xff]
    %v2276 = vld [vmem:[#allocation2 + $0x230] sm:$0xff]
    %v2277 = vld [vmem:[#allocation2 + $0x238] sm:$0xff]
    %v2278 = vld [vmem:[#allocation2 + $0x240] sm:$0xff]
    %v2279 = vld [vmem:[#allocation2 + $0x248] sm:$0xff]
    %v2280 = vld [vmem:[#allocation2 + $0x250] sm:$0xff]
    %v2281 = vld [vmem:[#allocation2 + $0x258] sm:$0xff]
    %v2282 = vld [vmem:[#allocation2 + $0x260] sm:$0xff]
    %v2283 = vld [vmem:[#allocation2 + $0x268] sm:$0xff]
    %v2284 = vld [vmem:[#allocation2 + $0x270] sm:$0xff]
    %v2285 = vld [vmem:[#allocation2 + $0x278] sm:$0xff]
    %v2286 = vld [vmem:[#allocation2 + $0x280] sm:$0xff]
    %v2287 = vld [vmem:[#allocation2 + $0x288] sm:$0xff]
    %v2288 = vld [vmem:[#allocation2 + $0x290] sm:$0xff]
    %v2289 = vld [vmem:[#allocation2 + $0x298] sm:$0xff]
    %v2290 = vld [vmem:[#allocation2 + $0x2a0] sm:$0xff]
    %v2291 = vld [vmem:[#allocation2 + $0x2a8] sm:$0xff]
    %v2292 = vld [vmem:[#allocation2 + $0x2b0] sm:$0xff]
    %v2293 = vld [vmem:[#allocation2 + $0x2b8] sm:$0xff]
    %v2294 = vld [vmem:[#allocation2 + $0x2c0] sm:$0xff]
    %v2295 = vld [vmem:[#allocation2 + $0x2c8] sm:$0xff]
    %v2296 = vld [vmem:[#allocation2 + $0x2d0] sm:$0xff]
    %v2297 = vld [vmem:[#allocation2 + $0x2d8] sm:$0xff]
    %v2298 = vld [vmem:[#allocation2 + $0x2e0] sm:$0xff]
    %v2299 = vld [vmem:[#allocation2 + $0x2e8] sm:$0xff]
    %v2300 = vld [vmem:[#allocation2 + $0x2f0] sm:$0xff]
    %v2301 = vld [vmem:[#allocation2 + $0x2f8] sm:$0xff]
    %v2302 = vld [vmem:[#allocation2 + $0x300] sm:$0xff]
    %v2303 = vld [vmem:[#allocation2 + $0x308] sm:$0xff]
    %v2304 = vld [vmem:[#allocation2 + $0x310] sm:$0xff]
    %v2305 = vld [vmem:[#allocation2 + $0x318] sm:$0xff]
    %v2306 = vld [vmem:[#allocation2 + $0x320] sm:$0xff]
    %v2307 = vld [vmem:[#allocation2 + $0x328] sm:$0xff]
    %v2308 = vld [vmem:[#allocation2 + $0x330] sm:$0xff]
    %v2309 = vld [vmem:[#allocation2 + $0x338] sm:$0xff]
    %v2310 = vld [vmem:[#allocation2 + $0x340] sm:$0xff]
    %v2311 = vld [vmem:[#allocation2 + $0x348] sm:$0xff]
    %v2312 = vld [vmem:[#allocation2 + $0x350] sm:$0xff]
    %v2313 = vld [vmem:[#allocation2 + $0x358] sm:$0xff]
    %v2314 = vld [vmem:[#allocation2 + $0x360] sm:$0xff]
    %v2315 = vld [vmem:[#allocation2 + $0x368] sm:$0xff]
    %v2316 = vld [vmem:[#allocation2 + $0x370] sm:$0xff]
    %v2317 = vld [vmem:[#allocation2 + $0x378] sm:$0xff]
    %v2318 = vld [vmem:[#allocation2 + $0x380] sm:$0xff]
    %v2319 = vld [vmem:[#allocation2 + $0x388] sm:$0xff]
    %v2320 = vld [vmem:[#allocation2 + $0x390] sm:$0xff]
    %v2321 = vld [vmem:[#allocation2 + $0x398] sm:$0xff]
    %v2322 = vld [vmem:[#allocation2 + $0x3a0] sm:$0xff]
    %v2323 = vld [vmem:[#allocation2 + $0x3a8] sm:$0xff]
    %v2324 = vld [vmem:[#allocation2 + $0x3b0] sm:$0xff]
    %v2325 = vld [vmem:[#allocation2 + $0x3b8] sm:$0xff]
    %v2326 = vld [vmem:[#allocation2 + $0x3c0] sm:$0xff]
    %v2327 = vld [vmem:[#allocation2 + $0x3c8] sm:$0xff]
    %v2328 = vld [vmem:[#allocation2 + $0x3d0] sm:$0xff]
    %v2329 = vld [vmem:[#allocation2 + $0x3d8] sm:$0xff]
    %v2330 = vld [vmem:[#allocation2 + $0x3e0] sm:$0xff]
    %v2331 = vld [vmem:[#allocation2 + $0x3e8] sm:$0xff]
    %v2332 = vld [vmem:[#allocation2 + $0x3f0] sm:$0xff]
    %v2333 = vld [vmem:[#allocation2 + $0x3f8] sm:$0xff]
    %v2334 = vld [vmem:[#allocation3] sm:$0xff]
    %v2335 = vld [vmem:[#allocation3 + $0x8] sm:$0xff]
    %v2336 = vld [vmem:[#allocation3 + $0x10] sm:$0xff]
    %v2337 = vld [vmem:[#allocation3 + $0x18] sm:$0xff]
    %v2338 = vld [vmem:[#allocation3 + $0x20] sm:$0xff]
    %v2339 = vld [vmem:[#allocation3 + $0x28] sm:$0xff]
    %v2340 = vld [vmem:[#allocation3 + $0x30] sm:$0xff]
    %v2341 = vld [vmem:[#allocation3 + $0x38] sm:$0xff]
    %v2342 = vld [vmem:[#allocation3 + $0x40] sm:$0xff]
    %v2343 = vld [vmem:[#allocation3 + $0x48] sm:$0xff]
    %v2344 = vld [vmem:[#allocation3 + $0x50] sm:$0xff]
    %v2345 = vld [vmem:[#allocation3 + $0x58] sm:$0xff]
    %v2346 = vld [vmem:[#allocation3 + $0x60] sm:$0xff]
    %v2347 = vld [vmem:[#allocation3 + $0x68] sm:$0xff]
    %v2348 = vld [vmem:[#allocation3 + $0x70] sm:$0xff]
    %v2349 = vld [vmem:[#allocation3 + $0x78] sm:$0xff]
    %v2350 = vld [vmem:[#allocation3 + $0x80] sm:$0xff]
    %v2351 = vld [vmem:[#allocation3 + $0x88] sm:$0xff]
    %v2352 = vld [vmem:[#allocation3 + $0x90] sm:$0xff]
    %v2353 = vld [vmem:[#allocation3 + $0x98] sm:$0xff]
    %v2354 = vld [vmem:[#allocation3 + $0xa0] sm:$0xff]
    %v2355 = vld [vmem:[#allocation3 + $0xa8] sm:$0xff]
    %v2356 = vld [vmem:[#allocation3 + $0xb0] sm:$0xff]
    %v2357 = vld [vmem:[#allocation3 + $0xb8] sm:$0xff]
    %v2358 = vld [vmem:[#allocation3 + $0xc0] sm:$0xff]
    %v2359 = vld [vmem:[#allocation3 + $0xc8] sm:$0xff]
    %v2360 = vld [vmem:[#allocation3 + $0xd0] sm:$0xff]
    %v2361 = vld [vmem:[#allocation3 + $0xd8] sm:$0xff]
    %v2362 = vld [vmem:[#allocation3 + $0xe0] sm:$0xff]
    %v2363 = vld [vmem:[#allocation3 + $0xe8] sm:$0xff]
    %v2364 = vld [vmem:[#allocation3 + $0xf0] sm:$0xff]
    %v2365 = vld [vmem:[#allocation3 + $0xf8] sm:$0xff]
    %v2366 = vld [vmem:[#allocation3 + $0x100] sm:$0xff]
    %v2367 = vld [vmem:[#allocation3 + $0x108] sm:$0xff]
    %v2368 = vld [vmem:[#allocation3 + $0x110] sm:$0xff]
    %v2369 = vld [vmem:[#allocation3 + $0x118] sm:$0xff]
    %v2370 = vld [vmem:[#allocation3 + $0x120] sm:$0xff]
    %v2371 = vld [vmem:[#allocation3 + $0x128] sm:$0xff]
    %v2372 = vld [vmem:[#allocation3 + $0x130] sm:$0xff]
    %v2373 = vld [vmem:[#allocation3 + $0x138] sm:$0xff]
    %v2374 = vld [vmem:[#allocation3 + $0x140] sm:$0xff]
    %v2375 = vld [vmem:[#allocation3 + $0x148] sm:$0xff]
    %v2376 = vld [vmem:[#allocation3 + $0x150] sm:$0xff]
    %v2377 = vld [vmem:[#allocation3 + $0x158] sm:$0xff]
    %v2378 = vld [vmem:[#allocation3 + $0x160] sm:$0xff]
    %v2379 = vld [vmem:[#allocation3 + $0x168] sm:$0xff]
    %v2380 = vld [vmem:[#allocation3 + $0x170] sm:$0xff]
    %v2381 = vld [vmem:[#allocation3 + $0x178] sm:$0xff]
    %v2382 = vld [vmem:[#allocation3 + $0x180] sm:$0xff]
    %v2383 = vld [vmem:[#allocation3 + $0x188] sm:$0xff]
    %v2384 = vld [vmem:[#allocation3 + $0x190] sm:$0xff]
    %v2385 = vld [vmem:[#allocation3 + $0x198] sm:$0xff]
    %v2386 = vld [vmem:[#allocation3 + $0x1a0] sm:$0xff]
    %v2387 = vld [vmem:[#allocation3 + $0x1a8] sm:$0xff]
    %v2388 = vld [vmem:[#allocation3 + $0x1b0] sm:$0xff]
    %v2389 = vld [vmem:[#allocation3 + $0x1b8] sm:$0xff]
    %v2390 = vld [vmem:[#allocation3 + $0x1c0] sm:$0xff]
    %v2391 = vld [vmem:[#allocation3 + $0x1c8] sm:$0xff]
    %v2392 = vld [vmem:[#allocation3 + $0x1d0] sm:$0xff]
    %v2393 = vld [vmem:[#allocation3 + $0x1d8] sm:$0xff]
    %v2394 = vld [vmem:[#allocation3 + $0x1e0] sm:$0xff]
    %v2395 = vld [vmem:[#allocation3 + $0x1e8] sm:$0xff]
    %v2396 = vld [vmem:[#allocation3 + $0x1f0] sm:$0xff]
    %v2397 = vld [vmem:[#allocation3 + $0x1f8] sm:$0xff]
    %vm2398 = vcmask 523264
    %v2400 = vsel %vm2398, %v2194, 0
    %2402 = vmatprep.subr.mxu0 0.0
    %2403 = vmatpush1.msra.mxu0 0.0
    %2404 = vmatprep.subr.mxu0 0.0
    %2405 = vmatpush1.msra.mxu0 0.0
    %2406 = vmatprep.subr.mxu0 0.0
    %2407 = vmatpush1.msra.mxu0 0.0
    %2408 = vmatprep.subr.mxu0 0.0
    %2409 = vmatpush1.msra.mxu0 0.0
    %2410 = vmatprep.subr.mxu0 0.0
    %2411 = vmatpush1.msra.mxu0 0.0
    %2412 = vmatprep.subr.mxu0 0.0
    %2413 = vmatpush1.msra.mxu0 0.0
    %2414 = vmatprep.subr.mxu0 0.0
    %2415 = vmatpush1.msra.mxu0 0.0
    %2416 = vmatprep.subr.mxu0 0.0
    %2417 = vmatpush1.msra.mxu0 0.0
    %2418 = vmatprep.subr.mxu0 %v2391
    %2419 = vmatpush1.msra.mxu0 %v2390
    %2420 = vmatprep.subr.mxu0 %v2383
    %2421 = vmatpush1.msra.mxu0 %v2382
    %2422 = vmatprep.subr.mxu0 %v2375
    %2423 = vmatpush1.msra.mxu0 %v2374
    %2424 = vmatprep.subr.mxu0 %v2367
    %2425 = vmatpush1.msra.mxu0 %v2366
    %2426 = vmatprep.subr.mxu0 %v2359
    %2427 = vmatpush1.msra.mxu0 %v2358
    %2428 = vmatprep.subr.mxu0 %v2351
    %2429 = vmatpush1.msra.mxu0 %v2350
    %2430 = vmatprep.subr.mxu0 %v2343
    %2431 = vmatpush1.msra.mxu0 %v2342
    %2432 = vmatprep.subr.mxu0 %v2335
    %2433 = vmatpush1.msra.mxu0 %v2334
    %2434 = vmatprep.subr.mxu0 0.0
    %2435 = vmatpush2.msra.mxu0 0.0
    %2436 = vmatprep.subr.mxu0 0.0
    %2437 = vmatpush2.msra.mxu0 0.0
    %2438 = vmatprep.subr.mxu0 0.0
    %2439 = vmatpush2.msra.mxu0 0.0
    %2440 = vmatprep.subr.mxu0 0.0
    %2441 = vmatpush2.msra.mxu0 0.0
    %2442 = vmatprep.subr.mxu0 0.0
    %2443 = vmatpush2.msra.mxu0 0.0
    %2444 = vmatprep.subr.mxu0 0.0
    %2445 = vmatpush2.msra.mxu0 0.0
    %2446 = vmatprep.subr.mxu0 0.0
    %2447 = vmatpush2.msra.mxu0 0.0
    %2448 = vmatprep.subr.mxu0 0.0
    %2449 = vmatpush2.msra.mxu0 0.0
    %2450 = vmatprep.subr.mxu0 0.0
    %2451 = vmatpush2.msra.mxu0 0.0
    %2452 = vmatprep.subr.mxu0 0.0
    %2453 = vmatpush2.msra.mxu0 0.0
    %2454 = vmatprep.subr.mxu0 0.0
    %2455 = vmatpush2.msra.mxu0 0.0
    %2456 = vmatprep.subr.mxu0 0.0
    %2457 = vmatpush2.msra.mxu0 0.0
    %2458 = vmatprep.subr.mxu0 0.0
    %2459 = vmatpush2.msra.mxu0 0.0
    %2460 = vmatprep.subr.mxu0 0.0
    %2461 = vmatpush2.msra.mxu0 0.0
    %2462 = vmatprep.subr.mxu0 0.0
    %2463 = vmatpush2.msra.mxu0 0.0
    %2464 = vmatprep.subr.mxu0 0.0
    %2465 = vmatpush2.msra.mxu0 0.0
    %2466 = vmatprep.mubr.f32.mxu0 0.0
    %2467 = vmatmul.mubr.f32.gmra.mxu0 %v2400
    %v2468 = vpop.f32.mrf.mxu0
    %v2469 = vadd.f32 0.0, %v2468
    %v2470 = vpop.f32.mrf.mxu0
    %v2471 = vadd.f32 0.0, %v2470
    %2472 = vdwg.mxu0
    %2473 = vmatprep.subr.mxu0 0.0
    %2474 = vmatpush1.msra.mxu0 0.0
    %2475 = vmatprep.subr.mxu0 0.0
    %2476 = vmatpush1.msra.mxu0 0.0
    %2477 = vmatprep.subr.mxu0 0.0
    %2478 = vmatpush1.msra.mxu0 0.0
    %2479 = vmatprep.subr.mxu0 0.0
    %2480 = vmatpush1.msra.mxu0 0.0
    %2481 = vmatprep.subr.mxu0 0.0
    %2482 = vmatpush1.msra.mxu0 0.0
    %2483 = vmatprep.subr.mxu0 0.0
    %2484 = vmatpush1.msra.mxu0 0.0
    %2485 = vmatprep.subr.mxu0 0.0
    %2486 = vmatpush1.msra.mxu0 0.0
    %2487 = vmatprep.subr.mxu0 0.0
    %2488 = vmatpush1.msra.mxu0 0.0
    %2489 = vmatprep.subr.mxu0 %v2393
    %2490 = vmatpush1.msra.mxu0 %v2392
    %2491 = vmatprep.subr.mxu0 %v2385
    %2492 = vmatpush1.msra.mxu0 %v2384
    %2493 = vmatprep.subr.mxu0 %v2377
    %2494 = vmatpush1.msra.mxu0 %v2376
    %2495 = vmatprep.subr.mxu0 %v2369
    %2496 = vmatpush1.msra.mxu0 %v2368
    %2497 = vmatprep.subr.mxu0 %v2361
    %2498 = vmatpush1.msra.mxu0 %v2360
    %2499 = vmatprep.subr.mxu0 %v2353
    %2500 = vmatpush1.msra.mxu0 %v2352
    %2501 = vmatprep.subr.mxu0 %v2345
    %2502 = vmatpush1.msra.mxu0 %v2344
    %2503 = vmatprep.subr.mxu0 %v2337
    %2504 = vmatpush1.msra.mxu0 %v2336
    %2505 = vmatprep.subr.mxu0 0.0
    %2506 = vmatpush2.msra.mxu0 0.0
    %2507 = vmatprep.subr.mxu0 0.0
    %2508 = vmatpush2.msra.mxu0 0.0
    %2509 = vmatprep.subr.mxu0 0.0
    %2510 = vmatpush2.msra.mxu0 0.0
    %2511 = vmatprep.subr.mxu0 0.0
    %2512 = vmatpush2.msra.mxu0 0.0
    %2513 = vmatprep.subr.mxu0 0.0
    %2514 = vmatpush2.msra.mxu0 0.0
    %2515 = vmatprep.subr.mxu0 0.0
    %2516 = vmatpush2.msra.mxu0 0.0
    %2517 = vmatprep.subr.mxu0 0.0
    %2518 = vmatpush2.msra.mxu0 0.0
    %2519 = vmatprep.subr.mxu0 0.0
    %2520 = vmatpush2.msra.mxu0 0.0
    %2521 = vmatprep.subr.mxu0 0.0
    %2522 = vmatpush2.msra.mxu0 0.0
    %2523 = vmatprep.subr.mxu0 0.0
    %2524 = vmatpush2.msra.mxu0 0.0
    %2525 = vmatprep.subr.mxu0 0.0
    %2526 = vmatpush2.msra.mxu0 0.0
    %2527 = vmatprep.subr.mxu0 0.0
    %2528 = vmatpush2.msra.mxu0 0.0
    %2529 = vmatprep.subr.mxu0 0.0
    %2530 = vmatpush2.msra.mxu0 0.0
    %2531 = vmatprep.subr.mxu0 0.0
    %2532 = vmatpush2.msra.mxu0 0.0
    %2533 = vmatprep.subr.mxu0 0.0
    %2534 = vmatpush2.msra.mxu0 0.0
    %2535 = vmatprep.subr.mxu0 0.0
    %2536 = vmatpush2.msra.mxu0 0.0
    %2537 = vmatprep.mubr.f32.mxu0 0.0
    %2538 = vmatmul.mubr.f32.gmra.mxu0 %v2400
    %v2539 = vpop.f32.mrf.mxu0
    %v2540 = vadd.f32 0.0, %v2539
    %v2541 = vpop.f32.mrf.mxu0
    %v2542 = vadd.f32 0.0, %v2541
    %2543 = vdwg.mxu0
    %2544 = vmatprep.subr.mxu0 0.0
    %2545 = vmatpush1.msra.mxu0 0.0
    %2546 = vmatprep.subr.mxu0 0.0
    %2547 = vmatpush1.msra.mxu0 0.0
    %2548 = vmatprep.subr.mxu0 0.0
    %2549 = vmatpush1.msra.mxu0 0.0
    %2550 = vmatprep.subr.mxu0 0.0
    %2551 = vmatpush1.msra.mxu0 0.0
    %2552 = vmatprep.subr.mxu0 0.0
    %2553 = vmatpush1.msra.mxu0 0.0
    %2554 = vmatprep.subr.mxu0 0.0
    %2555 = vmatpush1.msra.mxu0 0.0
    %2556 = vmatprep.subr.mxu0 0.0
    %2557 = vmatpush1.msra.mxu0 0.0
    %2558 = vmatprep.subr.mxu0 0.0
    %2559 = vmatpush1.msra.mxu0 0.0
    %2560 = vmatprep.subr.mxu0 %v2395
    %2561 = vmatpush1.msra.mxu0 %v2394
    %2562 = vmatprep.subr.mxu0 %v2387
    %2563 = vmatpush1.msra.mxu0 %v2386
    %2564 = vmatprep.subr.mxu0 %v2379
    %2565 = vmatpush1.msra.mxu0 %v2378
    %2566 = vmatprep.subr.mxu0 %v2371
    %2567 = vmatpush1.msra.mxu0 %v2370
    %2568 = vmatprep.subr.mxu0 %v2363
    %2569 = vmatpush1.msra.mxu0 %v2362
    %2570 = vmatprep.subr.mxu0 %v2355
    %2571 = vmatpush1.msra.mxu0 %v2354
    %2572 = vmatprep.subr.mxu0 %v2347
    %2573 = vmatpush1.msra.mxu0 %v2346
    %2574 = vmatprep.subr.mxu0 %v2339
    %2575 = vmatpush1.msra.mxu0 %v2338
    %2576 = vmatprep.subr.mxu0 0.0
    %2577 = vmatpush2.msra.mxu0 0.0
    %2578 = vmatprep.subr.mxu0 0.0
    %2579 = vmatpush2.msra.mxu0 0.0
    %2580 = vmatprep.subr.mxu0 0.0
    %2581 = vmatpush2.msra.mxu0 0.0
    %2582 = vmatprep.subr.mxu0 0.0
    %2583 = vmatpush2.msra.mxu0 0.0
    %2584 = vmatprep.subr.mxu0 0.0
    %2585 = vmatpush2.msra.mxu0 0.0
    %2586 = vmatprep.subr.mxu0 0.0
    %2587 = vmatpush2.msra.mxu0 0.0
    %2588 = vmatprep.subr.mxu0 0.0
    %2589 = vmatpush2.msra.mxu0 0.0
    %2590 = vmatprep.subr.mxu0 0.0
    %2591 = vmatpush2.msra.mxu0 0.0
    %2592 = vmatprep.subr.mxu0 0.0
    %2593 = vmatpush2.msra.mxu0 0.0
    %2594 = vmatprep.subr.mxu0 0.0
    %2595 = vmatpush2.msra.mxu0 0.0
    %2596 = vmatprep.subr.mxu0 0.0
    %2597 = vmatpush2.msra.mxu0 0.0
    %2598 = vmatprep.subr.mxu0 0.0
    %2599 = vmatpush2.msra.mxu0 0.0
    %2600 = vmatprep.subr.mxu0 0.0
    %2601 = vmatpush2.msra.mxu0 0.0
    %2602 = vmatprep.subr.mxu0 0.0
    %2603 = vmatpush2.msra.mxu0 0.0
    %2604 = vmatprep.subr.mxu0 0.0
    %2605 = vmatpush2.msra.mxu0 0.0
    %2606 = vmatprep.subr.mxu0 0.0
    %2607 = vmatpush2.msra.mxu0 0.0
    %2608 = vmatprep.mubr.f32.mxu0 0.0
    %2609 = vmatmul.mubr.f32.gmra.mxu0 %v2400
    %v2610 = vpop.f32.mrf.mxu0
    %v2611 = vadd.f32 0.0, %v2610
    %v2612 = vpop.f32.mrf.mxu0
    %v2613 = vadd.f32 0.0, %v2612
    %2614 = vdwg.mxu0
    %2615 = vmatprep.subr.mxu0 0.0
    %2616 = vmatpush1.msra.mxu0 0.0
    %2617 = vmatprep.subr.mxu0 0.0
    %2618 = vmatpush1.msra.mxu0 0.0
    %2619 = vmatprep.subr.mxu0 0.0
    %2620 = vmatpush1.msra.mxu0 0.0
    %2621 = vmatprep.subr.mxu0 0.0
    %2622 = vmatpush1.msra.mxu0 0.0
    %2623 = vmatprep.subr.mxu0 0.0
    %2624 = vmatpush1.msra.mxu0 0.0
    %2625 = vmatprep.subr.mxu0 0.0
    %2626 = vmatpush1.msra.mxu0 0.0
    %2627 = vmatprep.subr.mxu0 0.0
    %2628 = vmatpush1.msra.mxu0 0.0
    %2629 = vmatprep.subr.mxu0 0.0
    %2630 = vmatpush1.msra.mxu0 0.0
    %2631 = vmatprep.subr.mxu0 %v2397
    %2632 = vmatpush1.msra.mxu0 %v2396
    %2633 = vmatprep.subr.mxu0 %v2389
    %2634 = vmatpush1.msra.mxu0 %v2388
    %2635 = vmatprep.subr.mxu0 %v2381
    %2636 = vmatpush1.msra.mxu0 %v2380
    %2637 = vmatprep.subr.mxu0 %v2373
    %2638 = vmatpush1.msra.mxu0 %v2372
    %2639 = vmatprep.subr.mxu0 %v2365
    %2640 = vmatpush1.msra.mxu0 %v2364
    %2641 = vmatprep.subr.mxu0 %v2357
    %2642 = vmatpush1.msra.mxu0 %v2356
    %2643 = vmatprep.subr.mxu0 %v2349
    %2644 = vmatpush1.msra.mxu0 %v2348
    %2645 = vmatprep.subr.mxu0 %v2341
    %2646 = vmatpush1.msra.mxu0 %v2340
    %2647 = vmatprep.subr.mxu0 0.0
    %2648 = vmatpush2.msra.mxu0 0.0
    %2649 = vmatprep.subr.mxu0 0.0
    %2650 = vmatpush2.msra.mxu0 0.0
    %2651 = vmatprep.subr.mxu0 0.0
    %2652 = vmatpush2.msra.mxu0 0.0
    %2653 = vmatprep.subr.mxu0 0.0
    %2654 = vmatpush2.msra.mxu0 0.0
    %2655 = vmatprep.subr.mxu0 0.0
    %2656 = vmatpush2.msra.mxu0 0.0
    %2657 = vmatprep.subr.mxu0 0.0
    %2658 = vmatpush2.msra.mxu0 0.0
    %2659 = vmatprep.subr.mxu0 0.0
    %2660 = vmatpush2.msra.mxu0 0.0
    %2661 = vmatprep.subr.mxu0 0.0
    %2662 = vmatpush2.msra.mxu0 0.0
    %2663 = vmatprep.subr.mxu0 0.0
    %2664 = vmatpush2.msra.mxu0 0.0
    %2665 = vmatprep.subr.mxu0 0.0
    %2666 = vmatpush2.msra.mxu0 0.0
    %2667 = vmatprep.subr.mxu0 0.0
    %2668 = vmatpush2.msra.mxu0 0.0
    %2669 = vmatprep.subr.mxu0 0.0
    %2670 = vmatpush2.msra.mxu0 0.0
    %2671 = vmatprep.subr.mxu0 0.0
    %2672 = vmatpush2.msra.mxu0 0.0
    %2673 = vmatprep.subr.mxu0 0.0
    %2674 = vmatpush2.msra.mxu0 0.0
    %2675 = vmatprep.subr.mxu0 0.0
    %2676 = vmatpush2.msra.mxu0 0.0
    %2677 = vmatprep.subr.mxu0 0.0
    %2678 = vmatpush2.msra.mxu0 0.0
    %2679 = vmatprep.mubr.f32.mxu0 0.0
    %2680 = vmatmul.mubr.f32.gmra.mxu0 %v2400
    %v2681 = vpop.f32.mrf.mxu0
    %v2682 = vadd.f32 0.0, %v2681
    %v2683 = vpop.f32.mrf.mxu0
    %v2684 = vadd.f32 0.0, %v2683
    %2685 = vdwg.mxu0
    %2686 = vmatprep.subr.mxu0 %v2327
    %2687 = vmatpush1.msra.mxu0 %v2326
    %2688 = vmatprep.subr.mxu0 %v2319
    %2689 = vmatpush1.msra.mxu0 %v2318
    %2690 = vmatprep.subr.mxu0 %v2311
    %2691 = vmatpush1.msra.mxu0 %v2310
    %2692 = vmatprep.subr.mxu0 %v2303
    %2693 = vmatpush1.msra.mxu0 %v2302
    %2694 = vmatprep.subr.mxu0 %v2295
    %2695 = vmatpush1.msra.mxu0 %v2294
    %2696 = vmatprep.subr.mxu0 %v2287
    %2697 = vmatpush1.msra.mxu0 %v2286
    %2698 = vmatprep.subr.mxu0 %v2279
    %2699 = vmatpush1.msra.mxu0 %v2278
    %2700 = vmatprep.subr.mxu0 %v2271
    %2701 = vmatpush1.msra.mxu0 %v2270
    %2702 = vmatprep.subr.mxu0 %v2263
    %2703 = vmatpush1.msra.mxu0 %v2262
    %2704 = vmatprep.subr.mxu0 %v2255
    %2705 = vmatpush1.msra.mxu0 %v2254
    %2706 = vmatprep.subr.mxu0 %v2247
    %2707 = vmatpush1.msra.mxu0 %v2246
    %2708 = vmatprep.subr.mxu0 %v2239
    %2709 = vmatpush1.msra.mxu0 %v2238
    %2710 = vmatprep.subr.mxu0 %v2231
    %2711 = vmatpush1.msra.mxu0 %v2230
    %2712 = vmatprep.subr.mxu0 %v2223
    %2713 = vmatpush1.msra.mxu0 %v2222
    %2714 = vmatprep.subr.mxu0 %v2215
    %2715 = vmatpush1.msra.mxu0 %v2214
    %2716 = vmatprep.subr.mxu0 %v2207
    %2717 = vmatpush1.msra.mxu0 %v2206
    %2718 = vmatprep.subr.mxu0 0.0
    %2719 = vmatpush2.msra.mxu0 0.0
    %2720 = vmatprep.subr.mxu0 0.0
    %2721 = vmatpush2.msra.mxu0 0.0
    %2722 = vmatprep.subr.mxu0 0.0
    %2723 = vmatpush2.msra.mxu0 0.0
    %2724 = vmatprep.subr.mxu0 0.0
    %2725 = vmatpush2.msra.mxu0 0.0
    %2726 = vmatprep.subr.mxu0 0.0
    %2727 = vmatpush2.msra.mxu0 0.0
    %2728 = vmatprep.subr.mxu0 0.0
    %2729 = vmatpush2.msra.mxu0 0.0
    %2730 = vmatprep.subr.mxu0 0.0
    %2731 = vmatpush2.msra.mxu0 0.0
    %2732 = vmatprep.subr.mxu0 0.0
    %2733 = vmatpush2.msra.mxu0 0.0
    %2734 = vmatprep.subr.mxu0 0.0
    %2735 = vmatpush2.msra.mxu0 0.0
    %2736 = vmatprep.subr.mxu0 0.0
    %2737 = vmatpush2.msra.mxu0 0.0
    %2738 = vmatprep.subr.mxu0 0.0
    %2739 = vmatpush2.msra.mxu0 0.0
    %2740 = vmatprep.subr.mxu0 0.0
    %2741 = vmatpush2.msra.mxu0 0.0
    %2742 = vmatprep.subr.mxu0 0.0
    %2743 = vmatpush2.msra.mxu0 0.0
    %2744 = vmatprep.subr.mxu0 0.0
    %2745 = vmatpush2.msra.mxu0 0.0
    %2746 = vmatprep.subr.mxu0 0.0
    %2747 = vmatpush2.msra.mxu0 0.0
    %2748 = vmatprep.subr.mxu0 0.0
    %2749 = vmatpush2.msra.mxu0 0.0
    %2750 = vmatprep.mubr.f32.mxu0 0.0
    %2751 = vmatmul.mubr.f32.gmra.mxu0 %v2103
    %v2752 = vpop.f32.mrf.mxu0
    %v2753 = vadd.f32 %v2469, %v2752
    %v2754 = vpop.f32.mrf.mxu0
    %v2755 = vadd.f32 %v2471, %v2754
    %2756 = vdwg.mxu0
    %2757 = vmatprep.subr.mxu0 %v2329
    %2758 = vmatpush1.msra.mxu0 %v2328
    %2759 = vmatprep.subr.mxu0 %v2321
    %2760 = vmatpush1.msra.mxu0 %v2320
    %2761 = vmatprep.subr.mxu0 %v2313
    %2762 = vmatpush1.msra.mxu0 %v2312
    %2763 = vmatprep.subr.mxu0 %v2305
    %2764 = vmatpush1.msra.mxu0 %v2304
    %2765 = vmatprep.subr.mxu0 %v2297
    %2766 = vmatpush1.msra.mxu0 %v2296
    %2767 = vmatprep.subr.mxu0 %v2289
    %2768 = vmatpush1.msra.mxu0 %v2288
    %2769 = vmatprep.subr.mxu0 %v2281
    %2770 = vmatpush1.msra.mxu0 %v2280
    %2771 = vmatprep.subr.mxu0 %v2273
    %2772 = vmatpush1.msra.mxu0 %v2272
    %2773 = vmatprep.subr.mxu0 %v2265
    %2774 = vmatpush1.msra.mxu0 %v2264
    %2775 = vmatprep.subr.mxu0 %v2257
    %2776 = vmatpush1.msra.mxu0 %v2256
    %2777 = vmatprep.subr.mxu0 %v2249
    %2778 = vmatpush1.msra.mxu0 %v2248
    %2779 = vmatprep.subr.mxu0 %v2241
    %2780 = vmatpush1.msra.mxu0 %v2240
    %2781 = vmatprep.subr.mxu0 %v2233
    %2782 = vmatpush1.msra.mxu0 %v2232
    %2783 = vmatprep.subr.mxu0 %v2225
    %2784 = vmatpush1.msra.mxu0 %v2224
    %2785 = vmatprep.subr.mxu0 %v2217
    %2786 = vmatpush1.msra.mxu0 %v2216
    %2787 = vmatprep.subr.mxu0 %v2209
    %2788 = vmatpush1.msra.mxu0 %v2208
    %2789 = vmatprep.subr.mxu0 0.0
    %2790 = vmatpush2.msra.mxu0 0.0
    %2791 = vmatprep.subr.mxu0 0.0
    %2792 = vmatpush2.msra.mxu0 0.0
    %2793 = vmatprep.subr.mxu0 0.0
    %2794 = vmatpush2.msra.mxu0 0.0
    %2795 = vmatprep.subr.mxu0 0.0
    %2796 = vmatpush2.msra.mxu0 0.0
    %2797 = vmatprep.subr.mxu0 0.0
    %2798 = vmatpush2.msra.mxu0 0.0
    %2799 = vmatprep.subr.mxu0 0.0
    %2800 = vmatpush2.msra.mxu0 0.0
    %2801 = vmatprep.subr.mxu0 0.0
    %2802 = vmatpush2.msra.mxu0 0.0
    %2803 = vmatprep.subr.mxu0 0.0
    %2804 = vmatpush2.msra.mxu0 0.0
    %2805 = vmatprep.subr.mxu0 0.0
    %2806 = vmatpush2.msra.mxu0 0.0
    %2807 = vmatprep.subr.mxu0 0.0
    %2808 = vmatpush2.msra.mxu0 0.0
    %2809 = vmatprep.subr.mxu0 0.0
    %2810 = vmatpush2.msra.mxu0 0.0
    %2811 = vmatprep.subr.mxu0 0.0
    %2812 = vmatpush2.msra.mxu0 0.0
    %2813 = vmatprep.subr.mxu0 0.0
    %2814 = vmatpush2.msra.mxu0 0.0
    %2815 = vmatprep.subr.mxu0 0.0
    %2816 = vmatpush2.msra.mxu0 0.0
    %2817 = vmatprep.subr.mxu0 0.0
    %2818 = vmatpush2.msra.mxu0 0.0
    %2819 = vmatprep.subr.mxu0 0.0
    %2820 = vmatpush2.msra.mxu0 0.0
    %2821 = vmatprep.mubr.f32.mxu0 0.0
    %2822 = vmatmul.mubr.f32.gmra.mxu0 %v2103
    %v2823 = vpop.f32.mrf.mxu0
    %v2824 = vadd.f32 %v2540, %v2823
    %v2825 = vpop.f32.mrf.mxu0
    %v2826 = vadd.f32 %v2542, %v2825
    %2827 = vdwg.mxu0
    %2828 = vmatprep.subr.mxu0 %v2331
    %2829 = vmatpush1.msra.mxu0 %v2330
    %2830 = vmatprep.subr.mxu0 %v2323
    %2831 = vmatpush1.msra.mxu0 %v2322
    %2832 = vmatprep.subr.mxu0 %v2315
    %2833 = vmatpush1.msra.mxu0 %v2314
    %2834 = vmatprep.subr.mxu0 %v2307
    %2835 = vmatpush1.msra.mxu0 %v2306
    %2836 = vmatprep.subr.mxu0 %v2299
    %2837 = vmatpush1.msra.mxu0 %v2298
    %2838 = vmatprep.subr.mxu0 %v2291
    %2839 = vmatpush1.msra.mxu0 %v2290
    %2840 = vmatprep.subr.mxu0 %v2283
    %2841 = vmatpush1.msra.mxu0 %v2282
    %2842 = vmatprep.subr.mxu0 %v2275
    %2843 = vmatpush1.msra.mxu0 %v2274
    %2844 = vmatprep.subr.mxu0 %v2267
    %2845 = vmatpush1.msra.mxu0 %v2266
    %2846 = vmatprep.subr.mxu0 %v2259
    %2847 = vmatpush1.msra.mxu0 %v2258
    %2848 = vmatprep.subr.mxu0 %v2251
    %2849 = vmatpush1.msra.mxu0 %v2250
    %2850 = vmatprep.subr.mxu0 %v2243
    %2851 = vmatpush1.msra.mxu0 %v2242
    %2852 = vmatprep.subr.mxu0 %v2235
    %2853 = vmatpush1.msra.mxu0 %v2234
    %2854 = vmatprep.subr.mxu0 %v2227
    %2855 = vmatpush1.msra.mxu0 %v2226
    %2856 = vmatprep.subr.mxu0 %v2219
    %2857 = vmatpush1.msra.mxu0 %v2218
    %2858 = vmatprep.subr.mxu0 %v2211
    %2859 = vmatpush1.msra.mxu0 %v2210
    %2860 = vmatprep.subr.mxu0 0.0
    %2861 = vmatpush2.msra.mxu0 0.0
    %2862 = vmatprep.subr.mxu0 0.0
    %2863 = vmatpush2.msra.mxu0 0.0
    %2864 = vmatprep.subr.mxu0 0.0
    %2865 = vmatpush2.msra.mxu0 0.0
    %2866 = vmatprep.subr.mxu0 0.0
    %2867 = vmatpush2.msra.mxu0 0.0
    %2868 = vmatprep.subr.mxu0 0.0
    %2869 = vmatpush2.msra.mxu0 0.0
    %2870 = vmatprep.subr.mxu0 0.0
    %2871 = vmatpush2.msra.mxu0 0.0
    %2872 = vmatprep.subr.mxu0 0.0
    %2873 = vmatpush2.msra.mxu0 0.0
    %2874 = vmatprep.subr.mxu0 0.0
    %2875 = vmatpush2.msra.mxu0 0.0
    %2876 = vmatprep.subr.mxu0 0.0
    %2877 = vmatpush2.msra.mxu0 0.0
    %2878 = vmatprep.subr.mxu0 0.0
    %2879 = vmatpush2.msra.mxu0 0.0
    %2880 = vmatprep.subr.mxu0 0.0
    %2881 = vmatpush2.msra.mxu0 0.0
    %2882 = vmatprep.subr.mxu0 0.0
    %2883 = vmatpush2.msra.mxu0 0.0
    %2884 = vmatprep.subr.mxu0 0.0
    %2885 = vmatpush2.msra.mxu0 0.0
    %2886 = vmatprep.subr.mxu0 0.0
    %2887 = vmatpush2.msra.mxu0 0.0
    %2888 = vmatprep.subr.mxu0 0.0
    %2889 = vmatpush2.msra.mxu0 0.0
    %2890 = vmatprep.subr.mxu0 0.0
    %2891 = vmatpush2.msra.mxu0 0.0
    %2892 = vmatprep.mubr.f32.mxu0 0.0
    %2893 = vmatmul.mubr.f32.gmra.mxu0 %v2103
    %v2894 = vpop.f32.mrf.mxu0
    %v2895 = vadd.f32 %v2611, %v2894
    %v2896 = vpop.f32.mrf.mxu0
    %v2897 = vadd.f32 %v2613, %v2896
    %2898 = vdwg.mxu0
    %2899 = vmatprep.subr.mxu0 %v2333
    %2900 = vmatpush1.msra.mxu0 %v2332
    %2901 = vmatprep.subr.mxu0 %v2325
    %2902 = vmatpush1.msra.mxu0 %v2324
    %2903 = vmatprep.subr.mxu0 %v2317
    %2904 = vmatpush1.msra.mxu0 %v2316
    %2905 = vmatprep.subr.mxu0 %v2309
    %2906 = vmatpush1.msra.mxu0 %v2308
    %2907 = vmatprep.subr.mxu0 %v2301
    %2908 = vmatpush1.msra.mxu0 %v2300
    %2909 = vmatprep.subr.mxu0 %v2293
    %2910 = vmatpush1.msra.mxu0 %v2292
    %2911 = vmatprep.subr.mxu0 %v2285
    %2912 = vmatpush1.msra.mxu0 %v2284
    %2913 = vmatprep.subr.mxu0 %v2277
    %2914 = vmatpush1.msra.mxu0 %v2276
    %2915 = vmatprep.subr.mxu0 %v2269
    %2916 = vmatpush1.msra.mxu0 %v2268
    %2917 = vmatprep.subr.mxu0 %v2261
    %2918 = vmatpush1.msra.mxu0 %v2260
    %2919 = vmatprep.subr.mxu0 %v2253
    %2920 = vmatpush1.msra.mxu0 %v2252
    %2921 = vmatprep.subr.mxu0 %v2245
    %2922 = vmatpush1.msra.mxu0 %v2244
    %2923 = vmatprep.subr.mxu0 %v2237
    %2924 = vmatpush1.msra.mxu0 %v2236
    %2925 = vmatprep.subr.mxu0 %v2229
    %2926 = vmatpush1.msra.mxu0 %v2228
    %2927 = vmatprep.subr.mxu0 %v2221
    %2928 = vmatpush1.msra.mxu0 %v2220
    %2929 = vmatprep.subr.mxu0 %v2213
    %2930 = vmatpush1.msra.mxu0 %v2212
    %2931 = vmatprep.subr.mxu0 0.0
    %2932 = vmatpush2.msra.mxu0 0.0
    %2933 = vmatprep.subr.mxu0 0.0
    %2934 = vmatpush2.msra.mxu0 0.0
    %2935 = vmatprep.subr.mxu0 0.0
    %2936 = vmatpush2.msra.mxu0 0.0
    %2937 = vmatprep.subr.mxu0 0.0
    %2938 = vmatpush2.msra.mxu0 0.0
    %2939 = vmatprep.subr.mxu0 0.0
    %2940 = vmatpush2.msra.mxu0 0.0
    %2941 = vmatprep.subr.mxu0 0.0
    %2942 = vmatpush2.msra.mxu0 0.0
    %2943 = vmatprep.subr.mxu0 0.0
    %2944 = vmatpush2.msra.mxu0 0.0
    %2945 = vmatprep.subr.mxu0 0.0
    %2946 = vmatpush2.msra.mxu0 0.0
    %2947 = vmatprep.subr.mxu0 0.0
    %2948 = vmatpush2.msra.mxu0 0.0
    %2949 = vmatprep.subr.mxu0 0.0
    %2950 = vmatpush2.msra.mxu0 0.0
    %2951 = vmatprep.subr.mxu0 0.0
    %2952 = vmatpush2.msra.mxu0 0.0
    %2953 = vmatprep.subr.mxu0 0.0
    %2954 = vmatpush2.msra.mxu0 0.0
    %2955 = vmatprep.subr.mxu0 0.0
    %2956 = vmatpush2.msra.mxu0 0.0
    %2957 = vmatprep.subr.mxu0 0.0
    %2958 = vmatpush2.msra.mxu0 0.0
    %2959 = vmatprep.subr.mxu0 0.0
    %2960 = vmatpush2.msra.mxu0 0.0
    %2961 = vmatprep.subr.mxu0 0.0
    %2962 = vmatpush2.msra.mxu0 0.0
    %2963 = vmatprep.mubr.f32.mxu0 0.0
    %2964 = vmatmul.mubr.f32.gmra.mxu0 %v2103
    %v2965 = vpop.f32.mrf.mxu0
    %v2966 = vadd.f32 %v2682, %v2965
    %v2967 = vpop.f32.mrf.mxu0
    %v2968 = vadd.f32 %v2684, %v2967
    %2969 = vdwg.mxu0
    %v2970 = vld [vmem:[%s6] sm:$0xff]
    %v2972 = vlaneseq
    %v2973 = vshrl.u32 %v2972, 7
    %v2974 = vsub.s32 0, %v2973
    %v2975 = vrot.slane %v2970, %v2974
    %v2976 = vlaneseq
    %v2977 = vshrl.u32 %v2976, 7
    %v2978 = vsub.s32 1, %v2977
    %v2979 = vrot.slane %v2970, %v2978
    %v2980 = vlaneseq
    %v2981 = vshrl.u32 %v2980, 7
    %v2982 = vsub.s32 2, %v2981
    %v2983 = vrot.slane %v2970, %v2982
    %v2984 = vlaneseq
    %v2985 = vshrl.u32 %v2984, 7
    %v2986 = vsub.s32 3, %v2985
    %v2987 = vrot.slane %v2970, %v2986
    %v2988 = vlaneseq
    %v2989 = vshrl.u32 %v2988, 7
    %v2990 = vsub.s32 4, %v2989
    %v2991 = vrot.slane %v2970, %v2990
    %v2992 = vlaneseq
    %v2993 = vshrl.u32 %v2992, 7
    %v2994 = vsub.s32 5, %v2993
    %v2995 = vrot.slane %v2970, %v2994
    %v2996 = vlaneseq
    %v2997 = vshrl.u32 %v2996, 7
    %v2998 = vsub.s32 6, %v2997
    %v2999 = vrot.slane %v2970, %v2998
    %v3000 = vlaneseq
    %v3001 = vshrl.u32 %v3000, 7
    %v3002 = vsub.s32 7, %v3001
    %v3003 = vrot.slane %v2970, %v3002
    %v3012 = vadd.f32 %v2753, %v2975
    %v3013 = vadd.f32 %v2755, %v2979
    %v3014 = vadd.f32 %v2824, %v2983
    %v3015 = vadd.f32 %v2826, %v2987
    %v3016 = vadd.f32 %v2895, %v2991
    %v3017 = vadd.f32 %v2897, %v2995
    %v3018 = vadd.f32 %v2966, %v2999
    %v3019 = vadd.f32 %v2968, %v3003
    %v3020 = vmax.f32 %v3012, 0.0
    %v3021 = vmax.f32 %v3013, 0.0
    %v3022 = vmax.f32 %v3014, 0.0
    %v3023 = vmax.f32 %v3015, 0.0
    %v3024 = vmax.f32 %v3016, 0.0
    %v3025 = vmax.f32 %v3017, 0.0
    %v3026 = vmax.f32 %v3018, 0.0
    %v3027 = vmax.f32 %v3019, 0.0
    %v3028 = vld [vmem:[#allocation4] sm:$0xff]
    %v3029 = vld [vmem:[#allocation4 + $0x8] sm:$0xff]
    %v3030 = vld [vmem:[#allocation4 + $0x10] sm:$0xff]
    %v3031 = vld [vmem:[#allocation4 + $0x18] sm:$0xff]
    %v3032 = vld [vmem:[#allocation4 + $0x20] sm:$0xff]
    %v3033 = vld [vmem:[#allocation4 + $0x28] sm:$0xff]
    %v3034 = vld [vmem:[#allocation4 + $0x30] sm:$0xff]
    %v3035 = vld [vmem:[#allocation4 + $0x38] sm:$0xff]
    %v3036 = vld [vmem:[#allocation4 + $0x40] sm:$0xff]
    %v3037 = vld [vmem:[#allocation4 + $0x48] sm:$0xff]
    %v3038 = vld [vmem:[#allocation4 + $0x50] sm:$0xff]
    %v3039 = vld [vmem:[#allocation4 + $0x58] sm:$0xff]
    %v3040 = vld [vmem:[#allocation4 + $0x60] sm:$0xff]
    %v3041 = vld [vmem:[#allocation4 + $0x68] sm:$0xff]
    %v3042 = vld [vmem:[#allocation4 + $0x70] sm:$0xff]
    %v3043 = vld [vmem:[#allocation4 + $0x78] sm:$0xff]
    %v3044 = vld [vmem:[#allocation4 + $0x80] sm:$0xff]
    %v3045 = vld [vmem:[#allocation4 + $0x88] sm:$0xff]
    %v3046 = vld [vmem:[#allocation4 + $0x90] sm:$0xff]
    %v3047 = vld [vmem:[#allocation4 + $0x98] sm:$0xff]
    %v3048 = vld [vmem:[#allocation4 + $0xa0] sm:$0xff]
    %v3049 = vld [vmem:[#allocation4 + $0xa8] sm:$0xff]
    %v3050 = vld [vmem:[#allocation4 + $0xb0] sm:$0xff]
    %v3051 = vld [vmem:[#allocation4 + $0xb8] sm:$0xff]
    %v3052 = vld [vmem:[#allocation4 + $0xc0] sm:$0xff]
    %v3053 = vld [vmem:[#allocation4 + $0xc8] sm:$0xff]
    %v3054 = vld [vmem:[#allocation4 + $0xd0] sm:$0xff]
    %v3055 = vld [vmem:[#allocation4 + $0xd8] sm:$0xff]
    %v3056 = vld [vmem:[#allocation4 + $0xe0] sm:$0xff]
    %v3057 = vld [vmem:[#allocation4 + $0xe8] sm:$0xff]
    %v3058 = vld [vmem:[#allocation4 + $0xf0] sm:$0xff]
    %v3059 = vld [vmem:[#allocation4 + $0xf8] sm:$0xff]
    %v3060 = vld [vmem:[#allocation4 + $0x100] sm:$0xff]
    %v3061 = vld [vmem:[#allocation4 + $0x108] sm:$0xff]
    %v3062 = vld [vmem:[#allocation4 + $0x110] sm:$0xff]
    %v3063 = vld [vmem:[#allocation4 + $0x118] sm:$0xff]
    %v3064 = vld [vmem:[#allocation4 + $0x120] sm:$0xff]
    %v3065 = vld [vmem:[#allocation4 + $0x128] sm:$0xff]
    %v3066 = vld [vmem:[#allocation4 + $0x130] sm:$0xff]
    %v3067 = vld [vmem:[#allocation4 + $0x138] sm:$0xff]
    %v3068 = vld [vmem:[#allocation4 + $0x140] sm:$0xff]
    %v3069 = vld [vmem:[#allocation4 + $0x148] sm:$0xff]
    %v3070 = vld [vmem:[#allocation4 + $0x150] sm:$0xff]
    %v3071 = vld [vmem:[#allocation4 + $0x158] sm:$0xff]
    %v3072 = vld [vmem:[#allocation4 + $0x160] sm:$0xff]
    %v3073 = vld [vmem:[#allocation4 + $0x168] sm:$0xff]
    %v3074 = vld [vmem:[#allocation4 + $0x170] sm:$0xff]
    %v3075 = vld [vmem:[#allocation4 + $0x178] sm:$0xff]
    %v3076 = vld [vmem:[#allocation4 + $0x180] sm:$0xff]
    %v3077 = vld [vmem:[#allocation4 + $0x188] sm:$0xff]
    %v3078 = vld [vmem:[#allocation4 + $0x190] sm:$0xff]
    %v3079 = vld [vmem:[#allocation4 + $0x198] sm:$0xff]
    %v3080 = vld [vmem:[#allocation4 + $0x1a0] sm:$0xff]
    %v3081 = vld [vmem:[#allocation4 + $0x1a8] sm:$0xff]
    %v3082 = vld [vmem:[#allocation4 + $0x1b0] sm:$0xff]
    %v3083 = vld [vmem:[#allocation4 + $0x1b8] sm:$0xff]
    %v3084 = vld [vmem:[#allocation4 + $0x1c0] sm:$0xff]
    %v3085 = vld [vmem:[#allocation4 + $0x1c8] sm:$0xff]
    %v3086 = vld [vmem:[#allocation4 + $0x1d0] sm:$0xff]
    %v3087 = vld [vmem:[#allocation4 + $0x1d8] sm:$0xff]
    %v3088 = vld [vmem:[#allocation4 + $0x1e0] sm:$0xff]
    %v3089 = vld [vmem:[#allocation4 + $0x1e8] sm:$0xff]
    %v3090 = vld [vmem:[#allocation4 + $0x1f0] sm:$0xff]
    %v3091 = vld [vmem:[#allocation4 + $0x1f8] sm:$0xff]
    %v3092 = vld [vmem:[#allocation4 + $0x200] sm:$0xff]
    %v3093 = vld [vmem:[#allocation4 + $0x208] sm:$0xff]
    %v3094 = vld [vmem:[#allocation4 + $0x210] sm:$0xff]
    %v3095 = vld [vmem:[#allocation4 + $0x218] sm:$0xff]
    %v3096 = vld [vmem:[#allocation4 + $0x220] sm:$0xff]
    %v3097 = vld [vmem:[#allocation4 + $0x228] sm:$0xff]
    %v3098 = vld [vmem:[#allocation4 + $0x230] sm:$0xff]
    %v3099 = vld [vmem:[#allocation4 + $0x238] sm:$0xff]
    %v3100 = vld [vmem:[#allocation4 + $0x240] sm:$0xff]
    %v3101 = vld [vmem:[#allocation4 + $0x248] sm:$0xff]
    %v3102 = vld [vmem:[#allocation4 + $0x250] sm:$0xff]
    %v3103 = vld [vmem:[#allocation4 + $0x258] sm:$0xff]
    %v3104 = vld [vmem:[#allocation4 + $0x260] sm:$0xff]
    %v3105 = vld [vmem:[#allocation4 + $0x268] sm:$0xff]
    %v3106 = vld [vmem:[#allocation4 + $0x270] sm:$0xff]
    %v3107 = vld [vmem:[#allocation4 + $0x278] sm:$0xff]
    %v3108 = vld [vmem:[#allocation4 + $0x280] sm:$0xff]
    %v3109 = vld [vmem:[#allocation4 + $0x288] sm:$0xff]
    %v3110 = vld [vmem:[#allocation4 + $0x290] sm:$0xff]
    %v3111 = vld [vmem:[#allocation4 + $0x298] sm:$0xff]
    %v3112 = vld [vmem:[#allocation4 + $0x2a0] sm:$0xff]
    %v3113 = vld [vmem:[#allocation4 + $0x2a8] sm:$0xff]
    %v3114 = vld [vmem:[#allocation4 + $0x2b0] sm:$0xff]
    %v3115 = vld [vmem:[#allocation4 + $0x2b8] sm:$0xff]
    %v3116 = vld [vmem:[#allocation4 + $0x2c0] sm:$0xff]
    %v3117 = vld [vmem:[#allocation4 + $0x2c8] sm:$0xff]
    %v3118 = vld [vmem:[#allocation4 + $0x2d0] sm:$0xff]
    %v3119 = vld [vmem:[#allocation4 + $0x2d8] sm:$0xff]
    %v3120 = vld [vmem:[#allocation4 + $0x2e0] sm:$0xff]
    %v3121 = vld [vmem:[#allocation4 + $0x2e8] sm:$0xff]
    %v3122 = vld [vmem:[#allocation4 + $0x2f0] sm:$0xff]
    %v3123 = vld [vmem:[#allocation4 + $0x2f8] sm:$0xff]
    %v3124 = vld [vmem:[#allocation4 + $0x300] sm:$0xff]
    %v3125 = vld [vmem:[#allocation4 + $0x308] sm:$0xff]
    %v3126 = vld [vmem:[#allocation4 + $0x310] sm:$0xff]
    %v3127 = vld [vmem:[#allocation4 + $0x318] sm:$0xff]
    %v3128 = vld [vmem:[#allocation4 + $0x320] sm:$0xff]
    %v3129 = vld [vmem:[#allocation4 + $0x328] sm:$0xff]
    %v3130 = vld [vmem:[#allocation4 + $0x330] sm:$0xff]
    %v3131 = vld [vmem:[#allocation4 + $0x338] sm:$0xff]
    %v3132 = vld [vmem:[#allocation4 + $0x340] sm:$0xff]
    %v3133 = vld [vmem:[#allocation4 + $0x348] sm:$0xff]
    %v3134 = vld [vmem:[#allocation4 + $0x350] sm:$0xff]
    %v3135 = vld [vmem:[#allocation4 + $0x358] sm:$0xff]
    %v3136 = vld [vmem:[#allocation4 + $0x360] sm:$0xff]
    %v3137 = vld [vmem:[#allocation4 + $0x368] sm:$0xff]
    %v3138 = vld [vmem:[#allocation4 + $0x370] sm:$0xff]
    %v3139 = vld [vmem:[#allocation4 + $0x378] sm:$0xff]
    %v3140 = vld [vmem:[#allocation4 + $0x380] sm:$0xff]
    %v3141 = vld [vmem:[#allocation4 + $0x388] sm:$0xff]
    %v3142 = vld [vmem:[#allocation4 + $0x390] sm:$0xff]
    %v3143 = vld [vmem:[#allocation4 + $0x398] sm:$0xff]
    %v3144 = vld [vmem:[#allocation4 + $0x3a0] sm:$0xff]
    %v3145 = vld [vmem:[#allocation4 + $0x3a8] sm:$0xff]
    %v3146 = vld [vmem:[#allocation4 + $0x3b0] sm:$0xff]
    %v3147 = vld [vmem:[#allocation4 + $0x3b8] sm:$0xff]
    %v3148 = vld [vmem:[#allocation4 + $0x3c0] sm:$0xff]
    %v3149 = vld [vmem:[#allocation4 + $0x3c8] sm:$0xff]
    %v3150 = vld [vmem:[#allocation4 + $0x3d0] sm:$0xff]
    %v3151 = vld [vmem:[#allocation4 + $0x3d8] sm:$0xff]
    %v3152 = vld [vmem:[#allocation4 + $0x3e0] sm:$0xff]
    %v3153 = vld [vmem:[#allocation4 + $0x3e8] sm:$0xff]
    %v3154 = vld [vmem:[#allocation4 + $0x3f0] sm:$0xff]
    %v3155 = vld [vmem:[#allocation4 + $0x3f8] sm:$0xff]
    %v3156 = vld [vmem:[%s7] sm:$0x1]
    %v3158 = vlaneseq
    %v3159 = vshrl.u32 %v3158, 7
    %v3160 = vsub.s32 0, %v3159
    %v3161 = vrot.slane %v3156, %v3160
    %3163 = vmatprep.subr.mxu0 0.0
    %3164 = vmatpush1.msra.mxu0 %v3043
    %3165 = vmatprep.subr.mxu0 0.0
    %3166 = vmatpush1.msra.mxu0 %v3042
    %3167 = vmatprep.subr.mxu0 0.0
    %3168 = vmatpush1.msra.mxu0 %v3041
    %3169 = vmatprep.subr.mxu0 0.0
    %3170 = vmatpush1.msra.mxu0 %v3040
    %3171 = vmatprep.subr.mxu0 0.0
    %3172 = vmatpush1.msra.mxu0 %v3039
    %3173 = vmatprep.subr.mxu0 0.0
    %3174 = vmatpush1.msra.mxu0 %v3038
    %3175 = vmatprep.subr.mxu0 0.0
    %3176 = vmatpush1.msra.mxu0 %v3037
    %3177 = vmatprep.subr.mxu0 0.0
    %3178 = vmatpush1.msra.mxu0 %v3036
    %3179 = vmatprep.subr.mxu0 0.0
    %3180 = vmatpush1.msra.mxu0 %v3035
    %3181 = vmatprep.subr.mxu0 0.0
    %3182 = vmatpush1.msra.mxu0 %v3034
    %3183 = vmatprep.subr.mxu0 0.0
    %3184 = vmatpush1.msra.mxu0 %v3033
    %3185 = vmatprep.subr.mxu0 0.0
    %3186 = vmatpush1.msra.mxu0 %v3032
    %3187 = vmatprep.subr.mxu0 0.0
    %3188 = vmatpush1.msra.mxu0 %v3031
    %3189 = vmatprep.subr.mxu0 0.0
    %3190 = vmatpush1.msra.mxu0 %v3030
    %3191 = vmatprep.subr.mxu0 0.0
    %3192 = vmatpush1.msra.mxu0 %v3029
    %3193 = vmatprep.subr.mxu0 0.0
    %3194 = vmatpush1.msra.mxu0 %v3028
    %3195 = vmatprep.subr.mxu0 0.0
    %3196 = vmatpush2.msra.mxu0 %v3059
    %3197 = vmatprep.subr.mxu0 0.0
    %3198 = vmatpush2.msra.mxu0 %v3058
    %3199 = vmatprep.subr.mxu0 0.0
    %3200 = vmatpush2.msra.mxu0 %v3057
    %3201 = vmatprep.subr.mxu0 0.0
    %3202 = vmatpush2.msra.mxu0 %v3056
    %3203 = vmatprep.subr.mxu0 0.0
    %3204 = vmatpush2.msra.mxu0 %v3055
    %3205 = vmatprep.subr.mxu0 0.0
    %3206 = vmatpush2.msra.mxu0 %v3054
    %3207 = vmatprep.subr.mxu0 0.0
    %3208 = vmatpush2.msra.mxu0 %v3053
    %3209 = vmatprep.subr.mxu0 0.0
    %3210 = vmatpush2.msra.mxu0 %v3052
    %3211 = vmatprep.subr.mxu0 0.0
    %3212 = vmatpush2.msra.mxu0 %v3051
    %3213 = vmatprep.subr.mxu0 0.0
    %3214 = vmatpush2.msra.mxu0 %v3050
    %3215 = vmatprep.subr.mxu0 0.0
    %3216 = vmatpush2.msra.mxu0 %v3049
    %3217 = vmatprep.subr.mxu0 0.0
    %3218 = vmatpush2.msra.mxu0 %v3048
    %3219 = vmatprep.subr.mxu0 0.0
    %3220 = vmatpush2.msra.mxu0 %v3047
    %3221 = vmatprep.subr.mxu0 0.0
    %3222 = vmatpush2.msra.mxu0 %v3046
    %3223 = vmatprep.subr.mxu0 0.0
    %3224 = vmatpush2.msra.mxu0 %v3045
    %3225 = vmatprep.subr.mxu0 0.0
    %3226 = vmatpush2.msra.mxu0 %v3044
    %3227 = vmatprep.mubr.f32.mxu0 %v3021
    %3228 = vmatmul.mubr.f32.gmra.mxu0 %v3020
    %v3229 = vpop.f32.mrf.mxu0
    %v3230 = vadd.f32 %v3161, %v3229
    %v3231 = vpop.f32.mrf.mxu0
    %3232 = vdwg.mxu0
    %3233 = vmatprep.subr.mxu0 0.0
    %3234 = vmatpush1.msra.mxu0 %v3075
    %3235 = vmatprep.subr.mxu0 0.0
    %3236 = vmatpush1.msra.mxu0 %v3074
    %3237 = vmatprep.subr.mxu0 0.0
    %3238 = vmatpush1.msra.mxu0 %v3073
    %3239 = vmatprep.subr.mxu0 0.0
    %3240 = vmatpush1.msra.mxu0 %v3072
    %3241 = vmatprep.subr.mxu0 0.0
    %3242 = vmatpush1.msra.mxu0 %v3071
    %3243 = vmatprep.subr.mxu0 0.0
    %3244 = vmatpush1.msra.mxu0 %v3070
    %3245 = vmatprep.subr.mxu0 0.0
    %3246 = vmatpush1.msra.mxu0 %v3069
    %3247 = vmatprep.subr.mxu0 0.0
    %3248 = vmatpush1.msra.mxu0 %v3068
    %3249 = vmatprep.subr.mxu0 0.0
    %3250 = vmatpush1.msra.mxu0 %v3067
    %3251 = vmatprep.subr.mxu0 0.0
    %3252 = vmatpush1.msra.mxu0 %v3066
    %3253 = vmatprep.subr.mxu0 0.0
    %3254 = vmatpush1.msra.mxu0 %v3065
    %3255 = vmatprep.subr.mxu0 0.0
    %3256 = vmatpush1.msra.mxu0 %v3064
    %3257 = vmatprep.subr.mxu0 0.0
    %3258 = vmatpush1.msra.mxu0 %v3063
    %3259 = vmatprep.subr.mxu0 0.0
    %3260 = vmatpush1.msra.mxu0 %v3062
    %3261 = vmatprep.subr.mxu0 0.0
    %3262 = vmatpush1.msra.mxu0 %v3061
    %3263 = vmatprep.subr.mxu0 0.0
    %3264 = vmatpush1.msra.mxu0 %v3060
    %3265 = vmatprep.subr.mxu0 0.0
    %3266 = vmatpush2.msra.mxu0 %v3091
    %3267 = vmatprep.subr.mxu0 0.0
    %3268 = vmatpush2.msra.mxu0 %v3090
    %3269 = vmatprep.subr.mxu0 0.0
    %3270 = vmatpush2.msra.mxu0 %v3089
    %3271 = vmatprep.subr.mxu0 0.0
    %3272 = vmatpush2.msra.mxu0 %v3088
    %3273 = vmatprep.subr.mxu0 0.0
    %3274 = vmatpush2.msra.mxu0 %v3087
    %3275 = vmatprep.subr.mxu0 0.0
    %3276 = vmatpush2.msra.mxu0 %v3086
    %3277 = vmatprep.subr.mxu0 0.0
    %3278 = vmatpush2.msra.mxu0 %v3085
    %3279 = vmatprep.subr.mxu0 0.0
    %3280 = vmatpush2.msra.mxu0 %v3084
    %3281 = vmatprep.subr.mxu0 0.0
    %3282 = vmatpush2.msra.mxu0 %v3083
    %3283 = vmatprep.subr.mxu0 0.0
    %3284 = vmatpush2.msra.mxu0 %v3082
    %3285 = vmatprep.subr.mxu0 0.0
    %3286 = vmatpush2.msra.mxu0 %v3081
    %3287 = vmatprep.subr.mxu0 0.0
    %3288 = vmatpush2.msra.mxu0 %v3080
    %3289 = vmatprep.subr.mxu0 0.0
    %3290 = vmatpush2.msra.mxu0 %v3079
    %3291 = vmatprep.subr.mxu0 0.0
    %3292 = vmatpush2.msra.mxu0 %v3078
    %3293 = vmatprep.subr.mxu0 0.0
    %3294 = vmatpush2.msra.mxu0 %v3077
    %3295 = vmatprep.subr.mxu0 0.0
    %3296 = vmatpush2.msra.mxu0 %v3076
    %3297 = vmatprep.mubr.f32.mxu0 %v3023
    %3298 = vmatmul.mubr.f32.gmra.mxu0 %v3022
    %v3299 = vpop.f32.mrf.mxu0
    %v3300 = vadd.f32 %v3230, %v3299
    %v3301 = vpop.f32.mrf.mxu0
    %3302 = vdwg.mxu0
    %3303 = vmatprep.subr.mxu0 0.0
    %3304 = vmatpush1.msra.mxu0 %v3107
    %3305 = vmatprep.subr.mxu0 0.0
    %3306 = vmatpush1.msra.mxu0 %v3106
    %3307 = vmatprep.subr.mxu0 0.0
    %3308 = vmatpush1.msra.mxu0 %v3105
    %3309 = vmatprep.subr.mxu0 0.0
    %3310 = vmatpush1.msra.mxu0 %v3104
    %3311 = vmatprep.subr.mxu0 0.0
    %3312 = vmatpush1.msra.mxu0 %v3103
    %3313 = vmatprep.subr.mxu0 0.0
    %3314 = vmatpush1.msra.mxu0 %v3102
    %3315 = vmatprep.subr.mxu0 0.0
    %3316 = vmatpush1.msra.mxu0 %v3101
    %3317 = vmatprep.subr.mxu0 0.0
    %3318 = vmatpush1.msra.mxu0 %v3100
    %3319 = vmatprep.subr.mxu0 0.0
    %3320 = vmatpush1.msra.mxu0 %v3099
    %3321 = vmatprep.subr.mxu0 0.0
    %3322 = vmatpush1.msra.mxu0 %v3098
    %3323 = vmatprep.subr.mxu0 0.0
    %3324 = vmatpush1.msra.mxu0 %v3097
    %3325 = vmatprep.subr.mxu0 0.0
    %3326 = vmatpush1.msra.mxu0 %v3096
    %3327 = vmatprep.subr.mxu0 0.0
    %3328 = vmatpush1.msra.mxu0 %v3095
    %3329 = vmatprep.subr.mxu0 0.0
    %3330 = vmatpush1.msra.mxu0 %v3094
    %3331 = vmatprep.subr.mxu0 0.0
    %3332 = vmatpush1.msra.mxu0 %v3093
    %3333 = vmatprep.subr.mxu0 0.0
    %3334 = vmatpush1.msra.mxu0 %v3092
    %3335 = vmatprep.subr.mxu0 0.0
    %3336 = vmatpush2.msra.mxu0 %v3123
    %3337 = vmatprep.subr.mxu0 0.0
    %3338 = vmatpush2.msra.mxu0 %v3122
    %3339 = vmatprep.subr.mxu0 0.0
    %3340 = vmatpush2.msra.mxu0 %v3121
    %3341 = vmatprep.subr.mxu0 0.0
    %3342 = vmatpush2.msra.mxu0 %v3120
    %3343 = vmatprep.subr.mxu0 0.0
    %3344 = vmatpush2.msra.mxu0 %v3119
    %3345 = vmatprep.subr.mxu0 0.0
    %3346 = vmatpush2.msra.mxu0 %v3118
    %3347 = vmatprep.subr.mxu0 0.0
    %3348 = vmatpush2.msra.mxu0 %v3117
    %3349 = vmatprep.subr.mxu0 0.0
    %3350 = vmatpush2.msra.mxu0 %v3116
    %3351 = vmatprep.subr.mxu0 0.0
    %3352 = vmatpush2.msra.mxu0 %v3115
    %3353 = vmatprep.subr.mxu0 0.0
    %3354 = vmatpush2.msra.mxu0 %v3114
    %3355 = vmatprep.subr.mxu0 0.0
    %3356 = vmatpush2.msra.mxu0 %v3113
    %3357 = vmatprep.subr.mxu0 0.0
    %3358 = vmatpush2.msra.mxu0 %v3112
    %3359 = vmatprep.subr.mxu0 0.0
    %3360 = vmatpush2.msra.mxu0 %v3111
    %3361 = vmatprep.subr.mxu0 0.0
    %3362 = vmatpush2.msra.mxu0 %v3110
    %3363 = vmatprep.subr.mxu0 0.0
    %3364 = vmatpush2.msra.mxu0 %v3109
    %3365 = vmatprep.subr.mxu0 0.0
    %3366 = vmatpush2.msra.mxu0 %v3108
    %3367 = vmatprep.mubr.f32.mxu0 %v3025
    %3368 = vmatmul.mubr.f32.gmra.mxu0 %v3024
    %v3369 = vpop.f32.mrf.mxu0
    %v3370 = vadd.f32 %v3300, %v3369
    %v3371 = vpop.f32.mrf.mxu0
    %3372 = vdwg.mxu0
    %3373 = vmatprep.subr.mxu0 0.0
    %3374 = vmatpush1.msra.mxu0 %v3139
    %3375 = vmatprep.subr.mxu0 0.0
    %3376 = vmatpush1.msra.mxu0 %v3138
    %3377 = vmatprep.subr.mxu0 0.0
    %3378 = vmatpush1.msra.mxu0 %v3137
    %3379 = vmatprep.subr.mxu0 0.0
    %3380 = vmatpush1.msra.mxu0 %v3136
    %3381 = vmatprep.subr.mxu0 0.0
    %3382 = vmatpush1.msra.mxu0 %v3135
    %3383 = vmatprep.subr.mxu0 0.0
    %3384 = vmatpush1.msra.mxu0 %v3134
    %3385 = vmatprep.subr.mxu0 0.0
    %3386 = vmatpush1.msra.mxu0 %v3133
    %3387 = vmatprep.subr.mxu0 0.0
    %3388 = vmatpush1.msra.mxu0 %v3132
    %3389 = vmatprep.subr.mxu0 0.0
    %3390 = vmatpush1.msra.mxu0 %v3131
    %3391 = vmatprep.subr.mxu0 0.0
    %3392 = vmatpush1.msra.mxu0 %v3130
    %3393 = vmatprep.subr.mxu0 0.0
    %3394 = vmatpush1.msra.mxu0 %v3129
    %3395 = vmatprep.subr.mxu0 0.0
    %3396 = vmatpush1.msra.mxu0 %v3128
    %3397 = vmatprep.subr.mxu0 0.0
    %3398 = vmatpush1.msra.mxu0 %v3127
    %3399 = vmatprep.subr.mxu0 0.0
    %3400 = vmatpush1.msra.mxu0 %v3126
    %3401 = vmatprep.subr.mxu0 0.0
    %3402 = vmatpush1.msra.mxu0 %v3125
    %3403 = vmatprep.subr.mxu0 0.0
    %3404 = vmatpush1.msra.mxu0 %v3124
    %3405 = vmatprep.subr.mxu0 0.0
    %3406 = vmatpush2.msra.mxu0 %v3155
    %3407 = vmatprep.subr.mxu0 0.0
    %3408 = vmatpush2.msra.mxu0 %v3154
    %3409 = vmatprep.subr.mxu0 0.0
    %3410 = vmatpush2.msra.mxu0 %v3153
    %3411 = vmatprep.subr.mxu0 0.0
    %3412 = vmatpush2.msra.mxu0 %v3152
    %3413 = vmatprep.subr.mxu0 0.0
    %3414 = vmatpush2.msra.mxu0 %v3151
    %3415 = vmatprep.subr.mxu0 0.0
    %3416 = vmatpush2.msra.mxu0 %v3150
    %3417 = vmatprep.subr.mxu0 0.0
    %3418 = vmatpush2.msra.mxu0 %v3149
    %3419 = vmatprep.subr.mxu0 0.0
    %3420 = vmatpush2.msra.mxu0 %v3148
    %3421 = vmatprep.subr.mxu0 0.0
    %3422 = vmatpush2.msra.mxu0 %v3147
    %3423 = vmatprep.subr.mxu0 0.0
    %3424 = vmatpush2.msra.mxu0 %v3146
    %3425 = vmatprep.subr.mxu0 0.0
    %3426 = vmatpush2.msra.mxu0 %v3145
    %3427 = vmatprep.subr.mxu0 0.0
    %3428 = vmatpush2.msra.mxu0 %v3144
    %3429 = vmatprep.subr.mxu0 0.0
    %3430 = vmatpush2.msra.mxu0 %v3143
    %3431 = vmatprep.subr.mxu0 0.0
    %3432 = vmatpush2.msra.mxu0 %v3142
    %3433 = vmatprep.subr.mxu0 0.0
    %3434 = vmatpush2.msra.mxu0 %v3141
    %3435 = vmatprep.subr.mxu0 0.0
    %3436 = vmatpush2.msra.mxu0 %v3140
    %3437 = vmatprep.mubr.f32.mxu0 %v3027
    %3438 = vmatmul.mubr.f32.gmra.mxu0 %v3026
    %v3439 = vpop.f32.mrf.mxu0
    %v3440 = vadd.f32 %v3370, %v3439
    %v3441 = vpop.f32.mrf.mxu0
    %3442 = vdwg.mxu0
    %3443 = vst [vmem:[%s11] sm:$0xff] %v3440
    // Predicated region
    $region84: #{corn_forward.1} parent=1 // pred_check
      _
    $region85: #{corn_forward.1} parent=1 // pred_check_branch
      %3445 = sbr.rel (0) target = $region87
    $region86: #{corn_forward.1} parent=1 // pred_region
      _
    $region87: #{corn_forward.1} parent=1 // pred_fallthru
      _
    // Predicated region
    $region88: #{corn_forward.1} parent=1 // pred_check
      _
    $region89: #{corn_forward.1} parent=1 // pred_check_branch
      %3447 = sbr.rel (0) target = $region91
    $region90: #{corn_forward.1} parent=1 // pred_region
      _
    $region91: #{corn_forward.1} parent=1 // pred_fallthru
      _
    %3448 = vsyncpa [#allocation7], 1
    %3449 = vsyncpa [#allocation9], 1
  %3450 = vsyncmov [#allocation5]
  %s3451 = vpop.sfrf %3450
  %p3452 = scmp.eq.s32.totalorder %s3451, 0
  %p3453 = pneg %p3452
  %3455 = shalt.err (%p3453)
  %s3456 = scalar_lea.sflag [#allocation5], 1
  %3457 = vsyncmov %s3456
  %s3458 = vpop.sfrf %3457
  %p3459 = scmp.eq.s32.totalorder %s3458, 0
  %p3460 = pneg %p3459
  %3462 = shalt.err (%p3460)
  %s3463 = scalar_lea.sflag [#allocation5], 2
  %3464 = vsyncmov %s3463
  %s3465 = vpop.sfrf %3464
  %p3466 = scmp.eq.s32.totalorder %s3465, 0
  %p3467 = pneg %p3466
  %3469 = shalt.err (%p3467)

</llo_original>
